<compile_context>
chip_gen: v6e
topology: v6e:2x2x1
jax: 0.10.0
libtpu: 0.0.40
codegen_flags: <defaults>
</compile_context>

<pallas_src>
import functools
import numpy as np
import jax
import jax.numpy as jnp
from jax.experimental import pallas as pl
from jax.experimental.pallas import tpu as pltpu

# ----------------------------- configuration ------------------------------
F_CH = 8                       # args.F
B_BLOCKS = 2                   # args.B
NETWORK_ARCH = [0, 0, 0]       # 3 cells, all at stride level 0
C_INDEX = []                   # no early-exit heads
LOW_LEVEL_LAYER = 0
NUM_CLASSES = 5                # unused (Decoder not defined in reference source)
FM = {0: 1, 1: 2, 2: 4, 3: 8}
EPS = 1e-5
# cell_arch rows: (branch_index, primitive_index)
CELL_ARCH = np.array([[0, 3], [1, 3], [2, 3], [3, 3]], dtype=np.int32)


def _pick_tile(m):
    """Row tile that divides M exactly (no host pad/slice). Prefer exactly two
    blocks so the 'parallel' grid axis can shard across v7x's two TensorCores."""
    half = m // 2
    if m % 2 == 0 and half % 8 == 0 and 64 <= half <= 512:
        return half
    for t in (512, 256, 128, 64, 32, 16, 8):
        if m % t == 0:
            return t
    return m  # single full-extent block (always a legal BlockSpec)


# ------------------- fused matmul + bias (+ReLU) kernel --------------------
def _mm_bias_kernel(x_ref, w_ref, b_ref, o_ref, *, relu_out):
    # x: bf16 (tm, K), w: bf16 (K, Cout) with BN scale pre-folded, b: f32 (1, Cout)
    y = jnp.dot(x_ref[...], w_ref[...], preferred_element_type=jnp.float32)
    y = y + b_ref[...]
    if relu_out:
        y = jnp.maximum(y, 0.0)
    o_ref[...] = y.astype(o_ref.dtype)


def fused_matmul_bias(x2d, w, b, relu_out=False):
    """x2d: (M, K) bf16, w: (K, Cout) bf16 (BN-folded), b: (1, Cout) f32."""
    M, K = x2d.shape
    cout = w.shape[1]
    tm = _pick_tile(M)
    return pl.pallas_call(
        functools.partial(_mm_bias_kernel, relu_out=relu_out),
        out_shape=jax.ShapeDtypeStruct((M, cout), jnp.float32),
        grid=(M // tm,),
        in_specs=[pl.BlockSpec((tm, K), lambda i: (i, 0)),
                  pl.BlockSpec((K, cout), lambda i: (0, 0)),
                  pl.BlockSpec((1, cout), lambda i: (0, 0))],
        out_specs=pl.BlockSpec((tm, cout), lambda i: (i, 0)),
        compiler_params=pltpu.CompilerParams(dimension_semantics=("parallel",)),
    )(x2d, w, b)


# --------------------------- fused Cell kernel ------------------------------
def _cell_kernel(*refs, has_ll):
    """Whole Cell in one kernel:
       ReLU->1x1(pre_preprocess), ReLU->1x1(preprocess), NAS DAG (identity
       branch ops + adds), channel concat (slice stores), ReLU->1x1
       dense_process, and optionally ReLU->1x1 low_level_conv (split-weight
       matmuls over the concat pieces, algebraically exact)."""
    if has_ll:
        (s0_ref, s1_ref, wpp_ref, bpp_ref, wp_ref, bp_ref,
         wd_ref, bd_ref, wll_ref, bll_ref,
         concat_ref, dense_ref, ll_ref) = refs
    else:
        (s0_ref, s1_ref, wpp_ref, bpp_ref, wp_ref, bp_ref,
         wd_ref, bd_ref, concat_ref, dense_ref) = refs

    # ReLUConvBN preprocess / pre_preprocess (1x1; BN scale folded into weights)
    s0 = jnp.maximum(s0_ref[...], 0.0).astype(jnp.bfloat16)
    s1 = jnp.maximum(s1_ref[...], 0.0).astype(jnp.bfloat16)
    s0p = jnp.dot(s0, wpp_ref[...], preferred_element_type=jnp.float32) + bpp_ref[...]
    s1p = jnp.dot(s1, wp_ref[...], preferred_element_type=jnp.float32) + bp_ref[...]

    # NAS DAG. TODO(synk): OPS/PRIMITIVES table is not provided in the reference
    # source; the selected primitive is implemented as identity (skip_connect).
    states = [s0p, s1p]
    branch_set = set(int(v) for v in CELL_ARCH[:, 0])
    offset = 0
    for _ in range(B_BLOCKS):
        sel = [states[j] for j in range(len(states)) if (offset + j) in branch_set]
        s = sel[0]
        for t in sel[1:]:
            s = s + t
        offset += len(states)
        states.append(s)

    last = states[-B_BLOCKS:]
    c = last[0].shape[-1]

    # Channel concat of the last B states, written as slice stores.
    relu_last = []
    for idx, st in enumerate(last):
        concat_ref[:, idx * c:(idx + 1) * c] = st
        relu_last.append(jnp.maximum(st, 0.0).astype(jnp.bfloat16))

    # dense_process / low_level_conv as split-weight matmuls (no HBM concat).
    def split_mm(w_ref, b_ref):
        acc = b_ref[...]
        for idx, st in enumerate(relu_last):
            acc = acc + jnp.dot(st, w_ref[idx * c:(idx + 1) * c, :],
                                preferred_element_type=jnp.float32)
        return acc

    dense_ref[...] = split_mm(wd_ref, bd_ref)
    if has_ll:
        ll_ref[...] = split_mm(wll_ref, bll_ref)


def cell_forward(cp, prev_prev, prev, ll_params=None):
    """Cell.forward with downup_sample == 0, dense_in=False, dense_out=True.
    Optionally fuses the network-level low_level_conv on the concat output."""
    n, h, w, pr_c = prev.shape
    if prev_prev.shape[1] != h:
        prev_prev = bilinear_resize(prev_prev, h, w)
    pp_c = prev_prev.shape[-1]
    M = n * h * w
    c_out = F_CH * FM[0]
    c_cat = c_out * B_BLOCKS
    tm = _pick_tile(M)

    s0_2d = prev_prev.reshape(M, pp_c)
    s1_2d = prev.reshape(M, pr_c)

    has_ll = ll_params is not None
    inputs = [s0_2d, s1_2d,
              cp["pre_preprocess"]["w"], cp["pre_preprocess"]["b"],
              cp["preprocess"]["w"], cp["preprocess"]["b"],
              cp["dense_process"]["w"], cp["dense_process"]["b"]]
    in_specs = [
        pl.BlockSpec((tm, pp_c), lambda i: (i, 0)),
        pl.BlockSpec((tm, pr_c), lambda i: (i, 0)),
        pl.BlockSpec((pp_c, c_out), lambda i: (0, 0)),
        pl.BlockSpec((1, c_out), lambda i: (0, 0)),
        pl.BlockSpec((pr_c, c_out), lambda i: (0, 0)),
        pl.BlockSpec((1, c_out), lambda i: (0, 0)),
        pl.BlockSpec((c_cat, c_out), lambda i: (0, 0)),
        pl.BlockSpec((1, c_out), lambda i: (0, 0)),
    ]
    out_shapes = [jax.ShapeDtypeStruct((M, c_cat), jnp.float32),
                  jax.ShapeDtypeStruct((M, c_out), jnp.float32)]
    out_specs = [pl.BlockSpec((tm, c_cat), lambda i: (i, 0)),
                 pl.BlockSpec((tm, c_out), lambda i: (i, 0))]
    if has_ll:
        ll_c = ll_params["w"].shape[1]
        inputs += [ll_params["w"], ll_params["b"]]
        in_specs += [pl.BlockSpec((c_cat, ll_c), lambda i: (0, 0)),
                     pl.BlockSpec((1, ll_c), lambda i: (0, 0))]
        out_shapes.append(jax.ShapeDtypeStruct((M, ll_c), jnp.float32))
        out_specs.append(pl.BlockSpec((tm, ll_c), lambda i: (i, 0)))

    results = pl.pallas_call(
        functools.partial(_cell_kernel, has_ll=has_ll),
        out_shape=tuple(out_shapes),
        grid=(M // tm,),
        in_specs=in_specs,
        out_specs=tuple(out_specs),
        compiler_params=pltpu.CompilerParams(dimension_semantics=("parallel",)),
    )(*inputs)

    concat = results[0].reshape(n, h, w, c_cat)
    dense = results[1].reshape(n, h, w, c_out)
    low_level = results[2].reshape(n, h, w, results[2].shape[-1]) if has_ll else None
    return prev, concat, dense, low_level


# ------------------------- conv / resize glue ------------------------------
def stem_conv(x_nhwc, p, stride, relu_in=False, relu_out=False):
    """3x3 Conv(bias=False) + folded BN (+optional ReLU before/after).
    im2col is pure data rearrangement done by XLA (fused with the bf16 cast);
    the matmul + bias (+ReLU) is one fused Pallas call."""
    n, h, w, cin = x_nhwc.shape
    K, cout = p["w"].shape
    if relu_in:
        x_nhwc = jnp.maximum(x_nhwc, 0.0)      # relu(0)=0 commutes with zero pad
    xp = jnp.pad(x_nhwc, ((0, 0), (1, 1), (1, 1), (0, 0)))
    h_out = (h + 2 - 3) // stride + 1
    w_out = (w + 2 - 3) // stride + 1
    cols = [xp[:, i:i + stride * h_out:stride, j:j + stride * w_out:stride, :]
            for i in range(3) for j in range(3)]
    patches = jnp.concatenate(cols, axis=-1).reshape(n * h_out * w_out, K)
    patches = patches.astype(jnp.bfloat16)     # halve DMA bytes into the kernel
    y = fused_matmul_bias(patches, p["w"], p["b"], relu_out=relu_out)
    return y.reshape(n, h_out, w_out, cout)


def bilinear_resize(x_nhwc, out_h, out_w):
    """PyTorch F.interpolate(mode='bilinear', align_corners=False), no antialias."""
    n, h, w, c = x_nhwc.shape
    if (h, w) == (out_h, out_w):
        return x_nhwc

    def idx(out_size, in_size):
        o = jnp.arange(out_size, dtype=jnp.float32)
        src = (o + 0.5) * (in_size / out_size) - 0.5
        src = jnp.maximum(src, 0.0)
        i0 = jnp.minimum(jnp.floor(src).astype(jnp.int32), in_size - 1)
        i1 = jnp.minimum(i0 + 1, in_size - 1)
        frac = src - i0.astype(jnp.float32)
        return i0, i1, frac

    h0, h1, fh = idx(out_h, h)
    w0, w1, fw = idx(out_w, w)
    top = (x_nhwc[:, h0, :, :] * (1.0 - fh)[None, :, None, None]
           + x_nhwc[:, h1, :, :] * fh[None, :, None, None])
    out = (top[:, :, w0, :] * (1.0 - fw)[None, None, :, None]
           + top[:, :, w1, :] * fw[None, None, :, None])
    return out


# ------------------------- parameter init ---------------------------------
def _init_conv(key, cout, cin, kh, kw):
    # kaiming_normal_ default: fan_in, gain=sqrt(2)
    std = float(np.sqrt(2.0 / (cin * kh * kw)))
    return jax.random.normal(key, (cout, cin, kh, kw), jnp.float32) * std


def _init_bn(c):
    gamma = jnp.ones((c,), jnp.float32)
    beta = jnp.zeros((c,), jnp.float32)
    rmean = jnp.zeros((c,), jnp.float32)
    rvar = jnp.ones((c,), jnp.float32)
    scale = gamma / jnp.sqrt(rvar + EPS)
    bias = beta - rmean * scale
    return scale, bias


def _make_convbn(key, cin, cout, k):
    """Conv weight laid out as a matmul weight with the BN scale folded in
    (bf16), plus the BN bias (f32, (1, Cout))."""
    w = _init_conv(key, cout, cin, k, k)
    scale, bias = _init_bn(cout)
    if k == 1:
        wm = w.reshape(cout, cin).T                              # (Cin, Cout)
    else:
        wm = jnp.transpose(w, (2, 3, 1, 0)).reshape(k * k * cin, cout)
    wm = (wm * scale[None, :]).astype(jnp.bfloat16)
    return {"w": wm, "b": bias.reshape(1, cout)}


def init_params(key):
    keys = iter(jax.random.split(key, 32))
    p = {}
    p["stem0"] = _make_convbn(next(keys), 3, 64, 3)
    p["stem1"] = _make_convbn(next(keys), 64, 64, 3)
    p["stem2"] = _make_convbn(next(keys), 64, 128, 3)

    fb = F_CH * B_BLOCKS
    # cell 0: prev_prev_C=64, prev_C=128 ; cell 1: 128, FB ; cell 2: FB, FB
    cell_io = [(64, 128), (128, fb), (fb, fb)]
    p["cells"] = []
    for pp_c, pr_c in cell_io:
        c_out = F_CH * FM[0]
        p["cells"].append({
            "preprocess": _make_convbn(next(keys), pr_c, c_out, 1),
            "pre_preprocess": _make_convbn(next(keys), pp_c, c_out, 1),
            "dense_process": _make_convbn(next(keys), c_out * B_BLOCKS, c_out, 1),
        })

    ll_in = F_CH * B_BLOCKS * (2 ** NETWORK_ARCH[LOW_LEVEL_LAYER])
    p["low_level_conv"] = _make_convbn(next(keys), ll_in, 48, 1)
    return p


# ------------------------- model forward ----------------------------------
def add_forward(params, x_nchw):
    """ADD.forward. Input NCHW (PyTorch convention), output list of NCHW tensors."""
    x = jnp.transpose(x_nchw, (0, 2, 3, 1))  # -> NHWC
    size = (x_nchw.shape[2], x_nchw.shape[3])
    aspp_size = (int((float(size[0]) - 1.0) * 2 ** (-(NETWORK_ARCH[-1] + 2)) + 1.0),
                 int((float(size[1]) - 1.0) * 2 ** (-(NETWORK_ARCH[-1] + 2)) + 1.0))

    p = params
    stem = stem_conv(x, p["stem0"], stride=2, relu_out=True)        # Conv+BN+ReLU
    stem0 = stem_conv(stem, p["stem1"], stride=1)                   # Conv+BN
    stem1 = stem_conv(stem0, p["stem2"], stride=2, relu_in=True)    # ReLU+Conv+BN

    two_last = [stem0, stem1]
    dense_feature_map = []
    out = []
    num_net = len(NETWORK_ARCH)
    low_level = None
    cur = None

    for i in range(num_net):
        if i < 3:
            ll_p = p["low_level_conv"] if i == LOW_LEVEL_LAYER else None
            a, b, fmap, ll = cell_forward(p["cells"][i], two_last[0], two_last[1], ll_p)
            two_last = [a, b]
            dense_feature_map.append(fmap)
            if ll is not None:
                low_level = ll          # consumed only by the missing Decoder
            if i == 2:
                cur = two_last[1]
        # (dense_in branches for i >= 3 are not reachable with num_net == 3)

        if i in C_INDEX or i == num_net - 1:
            y = cur if i > 2 else two_last[1]
            if y.shape[1] < aspp_size[0] or y.shape[2] < aspp_size[1]:
                y = bilinear_resize(y, aspp_size[0], aspp_size[1])
            # NETWORK_ARCH[i] == NETWORK_ARCH[-1] for this config -> no conv_aspp
            # TODO(synk): ASPP_train and Decoder definitions are not provided in
            # the reference source; output is the pre-ASPP feature map.
            out.append(y)

    del low_level, dense_feature_map  # would feed the (missing) Decoder / dense_in cells
    return [jnp.transpose(o, (0, 3, 1, 2)) for o in out]  # back to NCHW


# ------------------------------- main --------------------------------------
if __name__ == "__main__":
    key = jax.random.PRNGKey(0)
    k_x, k_p = jax.random.split(key)
    N, H, W = 2, 32, 32
    x = jax.random.normal(k_x, (N, 3, H, W), dtype=jnp.float32)

    params = init_params(k_p)
    fwd = jax.jit(lambda inp: add_forward(params, inp))
    outs = fwd(x)
    outs = jax.block_until_ready(outs)

    expected = (N, F_CH * B_BLOCKS, H // 4, W // 4)
    assert len(outs) == 1 and outs[0].shape == expected, (outs[0].shape, expected)
    assert bool(jnp.all(jnp.isfinite(outs[0])))
    print("KERNEL_OK")
</pallas_src>

<mosaic_0001>
module attributes {stable_mosaic.version = 11 : i64} {
  func.func @_mm_bias_kernel(%arg0: i32, %arg1: memref<256x27xbf16, #tpu.memory_space<vmem>>, %arg2: memref<27x64xbf16, #tpu.memory_space<vmem>>, %arg3: memref<1x64xf32, #tpu.memory_space<vmem>>, %arg4: memref<256x64xf32, #tpu.memory_space<vmem>>) attributes {dimension_semantics = [#tpu.dimension_semantics<parallel>], iteration_bounds = array<i64: 2>, scalar_prefetch = 0 : i64, scratch_operands = 0 : i64, tpu.core_type = #tpu.core_type<tc>, window_params = [{transform_indices = @transform_0, window_bounds = array<i64: 256, 27>}, {pipeline_mode = #tpu.pipeline_mode<synchronous>, transform_indices = @transform_1, window_bounds = array<i64: 27, 64>}, {pipeline_mode = #tpu.pipeline_mode<synchronous>, transform_indices = @transform_2, window_bounds = array<i64: 1, 64>}, {transform_indices = @transform_3, window_bounds = array<i64: 256, 64>}]} {
    %c0 = arith.constant 0 : index
    %c0_0 = arith.constant 0 : index
    %0 = vector.load %arg1[%c0, %c0_0] : memref<256x27xbf16, #tpu.memory_space<vmem>>, vector<256x27xbf16>
    %c0_1 = arith.constant 0 : index
    %c0_2 = arith.constant 0 : index
    %1 = vector.load %arg2[%c0_1, %c0_2] : memref<27x64xbf16, #tpu.memory_space<vmem>>, vector<27x64xbf16>
    %cst = arith.constant dense<0.000000e+00> : vector<256x64xf32>
    %2 = tpu.matmul %0, %1, %cst {dimension_numbers = #tpu.dot_dimension_numbers<[1], [0], [0], [1], [0, 0, 1, 1], [], []>} : vector<256x27xbf16>, vector<27x64xbf16>, vector<256x64xf32> -> vector<256x64xf32>
    %c0_3 = arith.constant 0 : index
    %c0_4 = arith.constant 0 : index
    %3 = vector.load %arg3[%c0_3, %c0_4] : memref<1x64xf32, #tpu.memory_space<vmem>>, vector<1x64xf32>
    %4 = vector.broadcast %3 : vector<1x64xf32> to vector<256x64xf32>
    %5 = arith.addf %2, %4 : vector<256x64xf32>
    %cst_5 = arith.constant 0.000000e+00 : f32
    %6 = vector.broadcast %cst_5 : f32 to vector<256x64xf32>
    %7 = arith.maximumf %5, %6 : vector<256x64xf32>
    %c0_6 = arith.constant 0 : index
    %c0_7 = arith.constant 0 : index
    %8 = vector.load %arg4[%c0_6, %c0_7] : memref<256x64xf32, #tpu.memory_space<vmem>>, vector<256x64xf32>
    tpu.vector_store %arg4[%c0_6, %c0_7], %7 {strides = array<i32>} : memref<256x64xf32, #tpu.memory_space<vmem>>, vector<256x64xf32>,
    return
  }
  func.func @transform_0(%arg0: i32) -> (i32, i32) {
    %c0_i32 = arith.constant 0 : i32
    %c0_i32_0 = arith.constant 0 : i32
    return %arg0, %c0_i32 : i32, i32
  }
  func.func @transform_1(%arg0: i32) -> (i32, i32) {
    %c0_i32 = arith.constant 0 : i32
    %c0_i32_0 = arith.constant 0 : i32
    %c0_i32_1 = arith.constant 0 : i32
    return %c0_i32, %c0_i32_0 : i32, i32
  }
  func.func @transform_2(%arg0: i32) -> (i32, i32) {
    %c0_i32 = arith.constant 0 : i32
    %c0_i32_0 = arith.constant 0 : i32
    %c0_i32_1 = arith.constant 0 : i32
    return %c0_i32, %c0_i32_0 : i32, i32
  }
  func.func @transform_3(%arg0: i32) -> (i32, i32) {
    %c0_i32 = arith.constant 0 : i32
    %c0_i32_0 = arith.constant 0 : i32
    return %arg0, %c0_i32 : i32, i32
  }
}

module attributes {stable_mosaic.version = 11 : i64} {
  func.func @_mm_bias_kernel(%arg0: i32, %arg1: memref<256x576xbf16, #tpu.memory_space<vmem>>, %arg2: memref<576x64xbf16, #tpu.memory_space<vmem>>, %arg3: memref<1x64xf32, #tpu.memory_space<vmem>>, %arg4: memref<256x64xf32, #tpu.memory_space<vmem>>) attributes {dimension_semantics = [#tpu.dimension_semantics<parallel>], iteration_bounds = array<i64: 2>, scalar_prefetch = 0 : i64, scratch_operands = 0 : i64, tpu.core_type = #tpu.core_type<tc>, window_params = [{transform_indices = @transform_0, window_bounds = array<i64: 256, 576>}, {pipeline_mode = #tpu.pipeline_mode<synchronous>, transform_indices = @transform_1, window_bounds = array<i64: 576, 64>}, {pipeline_mode = #tpu.pipeline_mode<synchronous>, transform_indices = @transform_2, window_bounds = array<i64: 1, 64>}, {transform_indices = @transform_3, window_bounds = array<i64: 256, 64>}]} {
    %c0 = arith.constant 0 : index
    %c0_0 = arith.constant 0 : index
    %0 = vector.load %arg1[%c0, %c0_0] : memref<256x576xbf16, #tpu.memory_space<vmem>>, vector<256x576xbf16>
    %c0_1 = arith.constant 0 : index
    %c0_2 = arith.constant 0 : index
    %1 = vector.load %arg2[%c0_1, %c0_2] : memref<576x64xbf16, #tpu.memory_space<vmem>>, vector<576x64xbf16>
    %cst = arith.constant dense<0.000000e+00> : vector<256x64xf32>
    %2 = tpu.matmul %0, %1, %cst {dimension_numbers = #tpu.dot_dimension_numbers<[1], [0], [0], [1], [0, 0, 1, 1], [], []>} : vector<256x576xbf16>, vector<576x64xbf16>, vector<256x64xf32> -> vector<256x64xf32>
    %c0_3 = arith.constant 0 : index
    %c0_4 = arith.constant 0 : index
    %3 = vector.load %arg3[%c0_3, %c0_4] : memref<1x64xf32, #tpu.memory_space<vmem>>, vector<1x64xf32>
    %4 = vector.broadcast %3 : vector<1x64xf32> to vector<256x64xf32>
    %5 = arith.addf %2, %4 : vector<256x64xf32>
    %c0_5 = arith.constant 0 : index
    %c0_6 = arith.constant 0 : index
    %6 = vector.load %arg4[%c0_5, %c0_6] : memref<256x64xf32, #tpu.memory_space<vmem>>, vector<256x64xf32>
    tpu.vector_store %arg4[%c0_5, %c0_6], %5 {strides = array<i32>} : memref<256x64xf32, #tpu.memory_space<vmem>>, vector<256x64xf32>,
    return
  }
  func.func @transform_0(%arg0: i32) -> (i32, i32) {
    %c0_i32 = arith.constant 0 : i32
    %c0_i32_0 = arith.constant 0 : i32
    return %arg0, %c0_i32 : i32, i32
  }
  func.func @transform_1(%arg0: i32) -> (i32, i32) {
    %c0_i32 = arith.constant 0 : i32
    %c0_i32_0 = arith.constant 0 : i32
    %c0_i32_1 = arith.constant 0 : i32
    return %c0_i32, %c0_i32_0 : i32, i32
  }
  func.func @transform_2(%arg0: i32) -> (i32, i32) {
    %c0_i32 = arith.constant 0 : i32
    %c0_i32_0 = arith.constant 0 : i32
    %c0_i32_1 = arith.constant 0 : i32
    return %c0_i32, %c0_i32_0 : i32, i32
  }
  func.func @transform_3(%arg0: i32) -> (i32, i32) {
    %c0_i32 = arith.constant 0 : i32
    %c0_i32_0 = arith.constant 0 : i32
    return %arg0, %c0_i32 : i32, i32
  }
}

module attributes {stable_mosaic.version = 11 : i64} {
  func.func @_mm_bias_kernel(%arg0: i32, %arg1: memref<64x576xbf16, #tpu.memory_space<vmem>>, %arg2: memref<576x128xbf16, #tpu.memory_space<vmem>>, %arg3: memref<1x128xf32, #tpu.memory_space<vmem>>, %arg4: memref<64x128xf32, #tpu.memory_space<vmem>>) attributes {dimension_semantics = [#tpu.dimension_semantics<parallel>], iteration_bounds = array<i64: 2>, scalar_prefetch = 0 : i64, scratch_operands = 0 : i64, tpu.core_type = #tpu.core_type<tc>, window_params = [{transform_indices = @transform_0, window_bounds = array<i64: 64, 576>}, {pipeline_mode = #tpu.pipeline_mode<synchronous>, transform_indices = @transform_1, window_bounds = array<i64: 576, 128>}, {pipeline_mode = #tpu.pipeline_mode<synchronous>, transform_indices = @transform_2, window_bounds = array<i64: 1, 128>}, {transform_indices = @transform_3, window_bounds = array<i64: 64, 128>}]} {
    %c0 = arith.constant 0 : index
    %c0_0 = arith.constant 0 : index
    %0 = vector.load %arg1[%c0, %c0_0] : memref<64x576xbf16, #tpu.memory_space<vmem>>, vector<64x576xbf16>
    %c0_1 = arith.constant 0 : index
    %c0_2 = arith.constant 0 : index
    %1 = vector.load %arg2[%c0_1, %c0_2] : memref<576x128xbf16, #tpu.memory_space<vmem>>, vector<576x128xbf16>
    %cst = arith.constant dense<0.000000e+00> : vector<64x128xf32>
    %2 = tpu.matmul %0, %1, %cst {dimension_numbers = #tpu.dot_dimension_numbers<[1], [0], [0], [1], [0, 0, 1, 1], [], []>} : vector<64x576xbf16>, vector<576x128xbf16>, vector<64x128xf32> -> vector<64x128xf32>
    %c0_3 = arith.constant 0 : index
    %c0_4 = arith.constant 0 : index
    %3 = vector.load %arg3[%c0_3, %c0_4] : memref<1x128xf32, #tpu.memory_space<vmem>>, vector<1x128xf32>
    %4 = vector.broadcast %3 : vector<1x128xf32> to vector<64x128xf32>
    %5 = arith.addf %2, %4 : vector<64x128xf32>
    %c0_5 = arith.constant 0 : index
    %c0_6 = arith.constant 0 : index
    %6 = vector.load %arg4[%c0_5, %c0_6] : memref<64x128xf32, #tpu.memory_space<vmem>>, vector<64x128xf32>
    tpu.vector_store %arg4[%c0_5, %c0_6], %5 {strides = array<i32>} : memref<64x128xf32, #tpu.memory_space<vmem>>, vector<64x128xf32>,
    return
  }
  func.func @transform_0(%arg0: i32) -> (i32, i32) {
    %c0_i32 = arith.constant 0 : i32
    %c0_i32_0 = arith.constant 0 : i32
    return %arg0, %c0_i32 : i32, i32
  }
  func.func @transform_1(%arg0: i32) -> (i32, i32) {
    %c0_i32 = arith.constant 0 : i32
    %c0_i32_0 = arith.constant 0 : i32
    %c0_i32_1 = arith.constant 0 : i32
    return %c0_i32, %c0_i32_0 : i32, i32
  }
  func.func @transform_2(%arg0: i32) -> (i32, i32) {
    %c0_i32 = arith.constant 0 : i32
    %c0_i32_0 = arith.constant 0 : i32
    %c0_i32_1 = arith.constant 0 : i32
    return %c0_i32, %c0_i32_0 : i32, i32
  }
  func.func @transform_3(%arg0: i32) -> (i32, i32) {
    %c0_i32 = arith.constant 0 : i32
    %c0_i32_0 = arith.constant 0 : i32
    return %arg0, %c0_i32 : i32, i32
  }
}

module attributes {stable_mosaic.version = 11 : i64} {
  func.func @_cell_kernel(%arg0: i32, %arg1: memref<64x16xf32, #tpu.memory_space<vmem>>, %arg2: memref<64x16xf32, #tpu.memory_space<vmem>>, %arg3: memref<16x8xbf16, #tpu.memory_space<vmem>>, %arg4: memref<1x8xf32, #tpu.memory_space<vmem>>, %arg5: memref<16x8xbf16, #tpu.memory_space<vmem>>, %arg6: memref<1x8xf32, #tpu.memory_space<vmem>>, %arg7: memref<16x8xbf16, #tpu.memory_space<vmem>>, %arg8: memref<1x8xf32, #tpu.memory_space<vmem>>, %arg9: memref<64x16xf32, #tpu.memory_space<vmem>>, %arg10: memref<64x8xf32, #tpu.memory_space<vmem>>) attributes {dimension_semantics = [#tpu.dimension_semantics<parallel>], iteration_bounds = array<i64: 2>, scalar_prefetch = 0 : i64, scratch_operands = 0 : i64, tpu.core_type = #tpu.core_type<tc>, window_params = [{transform_indices = @transform_0, window_bounds = array<i64: 64, 16>}, {transform_indices = @transform_1, window_bounds = array<i64: 64, 16>}, {pipeline_mode = #tpu.pipeline_mode<synchronous>, transform_indices = @transform_2, window_bounds = array<i64: 16, 8>}, {pipeline_mode = #tpu.pipeline_mode<synchronous>, transform_indices = @transform_3, window_bounds = array<i64: 1, 8>}, {pipeline_mode = #tpu.pipeline_mode<synchronous>, transform_indices = @transform_4, window_bounds = array<i64: 16, 8>}, {pipeline_mode = #tpu.pipeline_mode<synchronous>, transform_indices = @transform_5, window_bounds = array<i64: 1, 8>}, {pipeline_mode = #tpu.pipeline_mode<synchronous>, transform_indices = @transform_6, window_bounds = array<i64: 16, 8>}, {pipeline_mode = #tpu.pipeline_mode<synchronous>, transform_indices = @transform_7, window_bounds = array<i64: 1, 8>}, {transform_indices = @transform_8, window_bounds = array<i64: 64, 16>}, {transform_indices = @transform_9, window_bounds = array<i64: 64, 8>}]} {
    %c0 = arith.constant 0 : index
    %c0_0 = arith.constant 0 : index
    %0 = vector.load %arg1[%c0, %c0_0] : memref<64x16xf32, #tpu.memory_space<vmem>>, vector<64x16xf32>
    %cst = arith.constant 0.000000e+00 : f32
    %1 = vector.broadcast %cst : f32 to vector<64x16xf32>
    %2 = arith.maximumf %0, %1 : vector<64x16xf32>
    %3 = arith.truncf %2 : vector<64x16xf32> to vector<64x16xbf16>
    %c0_1 = arith.constant 0 : index
    %c0_2 = arith.constant 0 : index
    %4 = vector.load %arg2[%c0_1, %c0_2] : memref<64x16xf32, #tpu.memory_space<vmem>>, vector<64x16xf32>
    %cst_3 = arith.constant 0.000000e+00 : f32
    %5 = vector.broadcast %cst_3 : f32 to vector<64x16xf32>
    %6 = arith.maximumf %4, %5 : vector<64x16xf32>
    %7 = arith.truncf %6 : vector<64x16xf32> to vector<64x16xbf16>
    %c0_4 = arith.constant 0 : index
    %c0_5 = arith.constant 0 : index
    %8 = vector.load %arg3[%c0_4, %c0_5] : memref<16x8xbf16, #tpu.memory_space<vmem>>, vector<16x8xbf16>
    %cst_6 = arith.constant dense<0.000000e+00> : vector<64x8xf32>
    %9 = tpu.matmul %3, %8, %cst_6 {dimension_numbers = #tpu.dot_dimension_numbers<[1], [0], [0], [1], [0, 0, 1, 1], [], []>} : vector<64x16xbf16>, vector<16x8xbf16>, vector<64x8xf32> -> vector<64x8xf32>
    %c0_7 = arith.constant 0 : index
    %c0_8 = arith.constant 0 : index
    %10 = vector.load %arg4[%c0_7, %c0_8] : memref<1x8xf32, #tpu.memory_space<vmem>>, vector<1x8xf32>
    %11 = vector.broadcast %10 : vector<1x8xf32> to vector<64x8xf32>
    %12 = arith.addf %9, %11 : vector<64x8xf32>
    %c0_9 = arith.constant 0 : index
    %c0_10 = arith.constant 0 : index
    %13 = vector.load %arg5[%c0_9, %c0_10] : memref<16x8xbf16, #tpu.memory_space<vmem>>, vector<16x8xbf16>
    %cst_11 = arith.constant dense<0.000000e+00> : vector<64x8xf32>
    %14 = tpu.matmul %7, %13, %cst_11 {dimension_numbers = #tpu.dot_dimension_numbers<[1], [0], [0], [1], [0, 0, 1, 1], [], []>} : vector<64x16xbf16>, vector<16x8xbf16>, vector<64x8xf32> -> vector<64x8xf32>
    %c0_12 = arith.constant 0 : index
    %c0_13 = arith.constant 0 : index
    %15 = vector.load %arg6[%c0_12, %c0_13] : memref<1x8xf32, #tpu.memory_space<vmem>>, vector<1x8xf32>
    %16 = vector.broadcast %15 : vector<1x8xf32> to vector<64x8xf32>
    %17 = arith.addf %14, %16 : vector<64x8xf32>
    %18 = arith.addf %12, %17 : vector<64x8xf32>
    %19 = arith.addf %12, %17 : vector<64x8xf32>
    %c0_14 = arith.constant 0 : index
    %c0_15 = arith.constant 0 : index
    %20 = vector.load %arg9[%c0_14, %c0_15] : memref<64x16xf32, #tpu.memory_space<vmem>>, vector<64x8xf32>
    tpu.vector_store %arg9[%c0_14, %c0_15], %18 {strides = array<i32>} : memref<64x16xf32, #tpu.memory_space<vmem>>, vector<64x8xf32>,
    %cst_16 = arith.constant 0.000000e+00 : f32
    %21 = vector.broadcast %cst_16 : f32 to vector<64x8xf32>
    %22 = arith.maximumf %18, %21 : vector<64x8xf32>
    %23 = arith.truncf %22 : vector<64x8xf32> to vector<64x8xbf16>
    %c0_17 = arith.constant 0 : index
    %c8 = arith.constant 8 : index
    %24 = vector.load %arg9[%c0_17, %c8] : memref<64x16xf32, #tpu.memory_space<vmem>>, vector<64x8xf32>
    tpu.vector_store %arg9[%c0_17, %c8], %19 {strides = array<i32>} : memref<64x16xf32, #tpu.memory_space<vmem>>, vector<64x8xf32>,
    %cst_18 = arith.constant 0.000000e+00 : f32
    %25 = vector.broadcast %cst_18 : f32 to vector<64x8xf32>
    %26 = arith.maximumf %19, %25 : vector<64x8xf32>
    %27 = arith.truncf %26 : vector<64x8xf32> to vector<64x8xbf16>
    %c0_19 = arith.constant 0 : index
    %c0_20 = arith.constant 0 : index
    %28 = vector.load %arg8[%c0_19, %c0_20] : memref<1x8xf32, #tpu.memory_space<vmem>>, vector<1x8xf32>
    %c0_21 = arith.constant 0 : index
    %c0_22 = arith.constant 0 : index
    %29 = vector.load %arg7[%c0_21, %c0_22] : memref<16x8xbf16, #tpu.memory_space<vmem>>, vector<8x8xbf16>
    %cst_23 = arith.constant dense<0.000000e+00> : vector<64x8xf32>
    %30 = tpu.matmul %23, %29, %cst_23 {dimension_numbers = #tpu.dot_dimension_numbers<[1], [0], [0], [1], [0, 0, 1, 1], [], []>} : vector<64x8xbf16>, vector<8x8xbf16>, vector<64x8xf32> -> vector<64x8xf32>
    %31 = vector.broadcast %28 : vector<1x8xf32> to vector<64x8xf32>
    %32 = arith.addf %31, %30 : vector<64x8xf32>
    %c8_24 = arith.constant 8 : index
    %c0_25 = arith.constant 0 : index
    %33 = vector.load %arg7[%c8_24, %c0_25] : memref<16x8xbf16, #tpu.memory_space<vmem>>, vector<8x8xbf16>
    %cst_26 = arith.constant dense<0.000000e+00> : vector<64x8xf32>
    %34 = tpu.matmul %27, %33, %cst_26 {dimension_numbers = #tpu.dot_dimension_numbers<[1], [0], [0], [1], [0, 0, 1, 1], [], []>} : vector<64x8xbf16>, vector<8x8xbf16>, vector<64x8xf32> -> vector<64x8xf32>
    %35 = arith.addf %32, %34 : vector<64x8xf32>
    %c0_27 = arith.constant 0 : index
    %c0_28 = arith.constant 0 : index
    %36 = vector.load %arg10[%c0_27, %c0_28] : memref<64x8xf32, #tpu.memory_space<vmem>>, vector<64x8xf32>
    tpu.vector_store %arg10[%c0_27, %c0_28], %35 {strides = array<i32>} : memref<64x8xf32, #tpu.memory_space<vmem>>, vector<64x8xf32>,
    return
  }
  func.func @transform_0(%arg0: i32) -> (i32, i32) {
    %c0_i32 = arith.constant 0 : i32
    %c0_i32_0 = arith.constant 0 : i32
    return %arg0, %c0_i32 : i32, i32
  }
  func.func @transform_1(%arg0: i32) -> (i32, i32) {
    %c0_i32 = arith.constant 0 : i32
    %c0_i32_0 = arith.constant 0 : i32
    return %arg0, %c0_i32 : i32, i32
  }
  func.func @transform_2(%arg0: i32) -> (i32, i32) {
    %c0_i32 = arith.constant 0 : i32
    %c0_i32_0 = arith.constant 0 : i32
    %c0_i32_1 = arith.constant 0 : i32
    return %c0_i32, %c0_i32_0 : i32, i32
  }
  func.func @transform_3(%arg0: i32) -> (i32, i32) {
    %c0_i32 = arith.constant 0 : i32
    %c0_i32_0 = arith.constant 0 : i32
    %c0_i32_1 = arith.constant 0 : i32
    return %c0_i32, %c0_i32_0 : i32, i32
  }
  func.func @transform_4(%arg0: i32) -> (i32, i32) {
    %c0_i32 = arith.constant 0 : i32
    %c0_i32_0 = arith.constant 0 : i32
    %c0_i32_1 = arith.constant 0 : i32
    return %c0_i32, %c0_i32_0 : i32, i32
  }
  func.func @transform_5(%arg0: i32) -> (i32, i32) {
    %c0_i32 = arith.constant 0 : i32
    %c0_i32_0 = arith.constant 0 : i32
    %c0_i32_1 = arith.constant 0 : i32
    return %c0_i32, %c0_i32_0 : i32, i32
  }
  func.func @transform_6(%arg0: i32) -> (i32, i32) {
    %c0_i32 = arith.constant 0 : i32
    %c0_i32_0 = arith.constant 0 : i32
    %c0_i32_1 = arith.constant 0 : i32
    return %c0_i32, %c0_i32_0 : i32, i32
  }
  func.func @transform_7(%arg0: i32) -> (i32, i32) {
    %c0_i32 = arith.constant 0 : i32
    %c0_i32_0 = arith.constant 0 : i32
    %c0_i32_1 = arith.constant 0 : i32
    return %c0_i32, %c0_i32_0 : i32, i32
  }
  func.func @transform_8(%arg0: i32) -> (i32, i32) {
    %c0_i32 = arith.constant 0 : i32
    %c0_i32_0 = arith.constant 0 : i32
    return %arg0, %c0_i32 : i32, i32
  }
  func.func @transform_9(%arg0: i32) -> (i32, i32) {
    %c0_i32 = arith.constant 0 : i32
    %c0_i32_0 = arith.constant 0 : i32
    return %arg0, %c0_i32 : i32, i32
  }
}

module attributes {stable_mosaic.version = 11 : i64} {
  func.func @_cell_kernel(%arg0: i32, %arg1: memref<64x64xf32, #tpu.memory_space<vmem>>, %arg2: memref<64x128xf32, #tpu.memory_space<vmem>>, %arg3: memref<64x8xbf16, #tpu.memory_space<vmem>>, %arg4: memref<1x8xf32, #tpu.memory_space<vmem>>, %arg5: memref<128x8xbf16, #tpu.memory_space<vmem>>, %arg6: memref<1x8xf32, #tpu.memory_space<vmem>>, %arg7: memref<16x8xbf16, #tpu.memory_space<vmem>>, %arg8: memref<1x8xf32, #tpu.memory_space<vmem>>, %arg9: memref<16x48xbf16, #tpu.memory_space<vmem>>, %arg10: memref<1x48xf32, #tpu.memory_space<vmem>>, %arg11: memref<64x16xf32, #tpu.memory_space<vmem>>, %arg12: memref<64x8xf32, #tpu.memory_space<vmem>>, %arg13: memref<64x48xf32, #tpu.memory_space<vmem>>) attributes {dimension_semantics = [#tpu.dimension_semantics<parallel>], iteration_bounds = array<i64: 2>, scalar_prefetch = 0 : i64, scratch_operands = 0 : i64, tpu.core_type = #tpu.core_type<tc>, window_params = [{transform_indices = @transform_0, window_bounds = array<i64: 64, 64>}, {transform_indices = @transform_1, window_bounds = array<i64: 64, 128>}, {pipeline_mode = #tpu.pipeline_mode<synchronous>, transform_indices = @transform_2, window_bounds = array<i64: 64, 8>}, {pipeline_mode = #tpu.pipeline_mode<synchronous>, transform_indices = @transform_3, window_bounds = array<i64: 1, 8>}, {pipeline_mode = #tpu.pipeline_mode<synchronous>, transform_indices = @transform_4, window_bounds = array<i64: 128, 8>}, {pipeline_mode = #tpu.pipeline_mode<synchronous>, transform_indices = @transform_5, window_bounds = array<i64: 1, 8>}, {pipeline_mode = #tpu.pipeline_mode<synchronous>, transform_indices = @transform_6, window_bounds = array<i64: 16, 8>}, {pipeline_mode = #tpu.pipeline_mode<synchronous>, transform_indices = @transform_7, window_bounds = array<i64: 1, 8>}, {pipeline_mode = #tpu.pipeline_mode<synchronous>, transform_indices = @transform_8, window_bounds = array<i64: 16, 48>}, {pipeline_mode = #tpu.pipeline_mode<synchronous>, transform_indices = @transform_9, window_bounds = array<i64: 1, 48>}, {transform_indices = @transform_10, window_bounds = array<i64: 64, 16>}, {transform_indices = @transform_11, window_bounds = array<i64: 64, 8>}, {transform_indices = @transform_12, window_bounds = array<i64: 64, 48>}]} {
    %c0 = arith.constant 0 : index
    %c0_0 = arith.constant 0 : index
    %0 = vector.load %arg1[%c0, %c0_0] : memref<64x64xf32, #tpu.memory_space<vmem>>, vector<64x64xf32>
    %cst = arith.constant 0.000000e+00 : f32
    %1 = vector.broadcast %cst : f32 to vector<64x64xf32>
    %2 = arith.maximumf %0, %1 : vector<64x64xf32>
    %3 = arith.truncf %2 : vector<64x64xf32> to vector<64x64xbf16>
    %c0_1 = arith.constant 0 : index
    %c0_2 = arith.constant 0 : index
    %4 = vector.load %arg2[%c0_1, %c0_2] : memref<64x128xf32, #tpu.memory_space<vmem>>, vector<64x128xf32>
    %cst_3 = arith.constant 0.000000e+00 : f32
    %5 = vector.broadcast %cst_3 : f32 to vector<64x128xf32>
    %6 = arith.maximumf %4, %5 : vector<64x128xf32>
    %7 = arith.truncf %6 : vector<64x128xf32> to vector<64x128xbf16>
    %c0_4 = arith.constant 0 : index
    %c0_5 = arith.constant 0 : index
    %8 = vector.load %arg3[%c0_4, %c0_5] : memref<64x8xbf16, #tpu.memory_space<vmem>>, vector<64x8xbf16>
    %cst_6 = arith.constant dense<0.000000e+00> : vector<64x8xf32>
    %9 = tpu.matmul %3, %8, %cst_6 {dimension_numbers = #tpu.dot_dimension_numbers<[1], [0], [0], [1], [0, 0, 1, 1], [], []>} : vector<64x64xbf16>, vector<64x8xbf16>, vector<64x8xf32> -> vector<64x8xf32>
    %c0_7 = arith.constant 0 : index
    %c0_8 = arith.constant 0 : index
    %10 = vector.load %arg4[%c0_7, %c0_8] : memref<1x8xf32, #tpu.memory_space<vmem>>, vector<1x8xf32>
    %11 = vector.broadcast %10 : vector<1x8xf32> to vector<64x8xf32>
    %12 = arith.addf %9, %11 : vector<64x8xf32>
    %c0_9 = arith.constant 0 : index
    %c0_10 = arith.constant 0 : index
    %13 = vector.load %arg5[%c0_9, %c0_10] : memref<128x8xbf16, #tpu.memory_space<vmem>>, vector<128x8xbf16>
    %cst_11 = arith.constant dense<0.000000e+00> : vector<64x8xf32>
    %14 = tpu.matmul %7, %13, %cst_11 {dimension_numbers = #tpu.dot_dimension_numbers<[1], [0], [0], [1], [0, 0, 1, 1], [], []>} : vector<64x128xbf16>, vector<128x8xbf16>, vector<64x8xf32> -> vector<64x8xf32>
    %c0_12 = arith.constant 0 : index
    %c0_13 = arith.constant 0 : index
    %15 = vector.load %arg6[%c0_12, %c0_13] : memref<1x8xf32, #tpu.memory_space<vmem>>, vector<1x8xf32>
    %16 = vector.broadcast %15 : vector<1x8xf32> to vector<64x8xf32>
    %17 = arith.addf %14, %16 : vector<64x8xf32>
    %18 = arith.addf %12, %17 : vector<64x8xf32>
    %19 = arith.addf %12, %17 : vector<64x8xf32>
    %c0_14 = arith.constant 0 : index
    %c0_15 = arith.constant 0 : index
    %20 = vector.load %arg11[%c0_14, %c0_15] : memref<64x16xf32, #tpu.memory_space<vmem>>, vector<64x8xf32>
    tpu.vector_store %arg11[%c0_14, %c0_15], %18 {strides = array<i32>} : memref<64x16xf32, #tpu.memory_space<vmem>>, vector<64x8xf32>,
    %cst_16 = arith.constant 0.000000e+00 : f32
    %21 = vector.broadcast %cst_16 : f32 to vector<64x8xf32>
    %22 = arith.maximumf %18, %21 : vector<64x8xf32>
    %23 = arith.truncf %22 : vector<64x8xf32> to vector<64x8xbf16>
    %c0_17 = arith.constant 0 : index
    %c8 = arith.constant 8 : index
    %24 = vector.load %arg11[%c0_17, %c8] : memref<64x16xf32, #tpu.memory_space<vmem>>, vector<64x8xf32>
    tpu.vector_store %arg11[%c0_17, %c8], %19 {strides = array<i32>} : memref<64x16xf32, #tpu.memory_space<vmem>>, vector<64x8xf32>,
    %cst_18 = arith.constant 0.000000e+00 : f32
    %25 = vector.broadcast %cst_18 : f32 to vector<64x8xf32>
    %26 = arith.maximumf %19, %25 : vector<64x8xf32>
    %27 = arith.truncf %26 : vector<64x8xf32> to vector<64x8xbf16>
    %c0_19 = arith.constant 0 : index
    %c0_20 = arith.constant 0 : index
    %28 = vector.load %arg8[%c0_19, %c0_20] : memref<1x8xf32, #tpu.memory_space<vmem>>, vector<1x8xf32>
    %c0_21 = arith.constant 0 : index
    %c0_22 = arith.constant 0 : index
    %29 = vector.load %arg7[%c0_21, %c0_22] : memref<16x8xbf16, #tpu.memory_space<vmem>>, vector<8x8xbf16>
    %cst_23 = arith.constant dense<0.000000e+00> : vector<64x8xf32>
    %30 = tpu.matmul %23, %29, %cst_23 {dimension_numbers = #tpu.dot_dimension_numbers<[1], [0], [0], [1], [0, 0, 1, 1], [], []>} : vector<64x8xbf16>, vector<8x8xbf16>, vector<64x8xf32> -> vector<64x8xf32>
    %31 = vector.broadcast %28 : vector<1x8xf32> to vector<64x8xf32>
    %32 = arith.addf %31, %30 : vector<64x8xf32>
    %c8_24 = arith.constant 8 : index
    %c0_25 = arith.constant 0 : index
    %33 = vector.load %arg7[%c8_24, %c0_25] : memref<16x8xbf16, #tpu.memory_space<vmem>>, vector<8x8xbf16>
    %cst_26 = arith.constant dense<0.000000e+00> : vector<64x8xf32>
    %34 = tpu.matmul %27, %33, %cst_26 {dimension_numbers = #tpu.dot_dimension_numbers<[1], [0], [0], [1], [0, 0, 1, 1], [], []>} : vector<64x8xbf16>, vector<8x8xbf16>, vector<64x8xf32> -> vector<64x8xf32>
    %35 = arith.addf %32, %34 : vector<64x8xf32>
    %c0_27 = arith.constant 0 : index
    %c0_28 = arith.constant 0 : index
    %36 = vector.load %arg12[%c0_27, %c0_28] : memref<64x8xf32, #tpu.memory_space<vmem>>, vector<64x8xf32>
    tpu.vector_store %arg12[%c0_27, %c0_28], %35 {strides = array<i32>} : memref<64x8xf32, #tpu.memory_space<vmem>>, vector<64x8xf32>,
    %c0_29 = arith.constant 0 : index
    %c0_30 = arith.constant 0 : index
    %37 = vector.load %arg10[%c0_29, %c0_30] : memref<1x48xf32, #tpu.memory_space<vmem>>, vector<1x48xf32>
    %c0_31 = arith.constant 0 : index
    %c0_32 = arith.constant 0 : index
    %38 = vector.load %arg9[%c0_31, %c0_32] : memref<16x48xbf16, #tpu.memory_space<vmem>>, vector<8x48xbf16>
    %cst_33 = arith.constant dense<0.000000e+00> : vector<64x48xf32>
    %39 = tpu.matmul %23, %38, %cst_33 {dimension_numbers = #tpu.dot_dimension_numbers<[1], [0], [0], [1], [0, 0, 1, 1], [], []>} : vector<64x8xbf16>, vector<8x48xbf16>, vector<64x48xf32> -> vector<64x48xf32>
    %40 = vector.broadcast %37 : vector<1x48xf32> to vector<64x48xf32>
    %41 = arith.addf %40, %39 : vector<64x48xf32>
    %c8_34 = arith.constant 8 : index
    %c0_35 = arith.constant 0 : index
    %42 = vector.load %arg9[%c8_34, %c0_35] : memref<16x48xbf16, #tpu.memory_space<vmem>>, vector<8x48xbf16>
    %cst_36 = arith.constant dense<0.000000e+00> : vector<64x48xf32>
    %43 = tpu.matmul %27, %42, %cst_36 {dimension_numbers = #tpu.dot_dimension_numbers<[1], [0], [0], [1], [0, 0, 1, 1], [], []>} : vector<64x8xbf16>, vector<8x48xbf16>, vector<64x48xf32> -> vector<64x48xf32>
    %44 = arith.addf %41, %43 : vector<64x48xf32>
    %c0_37 = arith.constant 0 : index
    %c0_38 = arith.constant 0 : index
    %45 = vector.load %arg13[%c0_37, %c0_38] : memref<64x48xf32, #tpu.memory_space<vmem>>, vector<64x48xf32>
    tpu.vector_store %arg13[%c0_37, %c0_38], %44 {strides = array<i32>} : memref<64x48xf32, #tpu.memory_space<vmem>>, vector<64x48xf32>,
    return
  }
  func.func @transform_0(%arg0: i32) -> (i32, i32) {
    %c0_i32 = arith.constant 0 : i32
    %c0_i32_0 = arith.constant 0 : i32
    return %arg0, %c0_i32 : i32, i32
  }
  func.func @transform_1(%arg0: i32) -> (i32, i32) {
    %c0_i32 = arith.constant 0 : i32
    %c0_i32_0 = arith.constant 0 : i32
    return %arg0, %c0_i32 : i32, i32
  }
  func.func @transform_2(%arg0: i32) -> (i32, i32) {
    %c0_i32 = arith.constant 0 : i32
    %c0_i32_0 = arith.constant 0 : i32
    %c0_i32_1 = arith.constant 0 : i32
    return %c0_i32, %c0_i32_0 : i32, i32
  }
  func.func @transform_3(%arg0: i32) -> (i32, i32) {
    %c0_i32 = arith.constant 0 : i32
    %c0_i32_0 = arith.constant 0 : i32
    %c0_i32_1 = arith.constant 0 : i32
    return %c0_i32, %c0_i32_0 : i32, i32
  }
  func.func @transform_4(%arg0: i32) -> (i32, i32) {
    %c0_i32 = arith.constant 0 : i32
    %c0_i32_0 = arith.constant 0 : i32
    %c0_i32_1 = arith.constant 0 : i32
    return %c0_i32, %c0_i32_0 : i32, i32
  }
  func.func @transform_5(%arg0: i32) -> (i32, i32) {
    %c0_i32 = arith.constant 0 : i32
    %c0_i32_0 = arith.constant 0 : i32
    %c0_i32_1 = arith.constant 0 : i32
    return %c0_i32, %c0_i32_0 : i32, i32
  }
  func.func @transform_6(%arg0: i32) -> (i32, i32) {
    %c0_i32 = arith.constant 0 : i32
    %c0_i32_0 = arith.constant 0 : i32
    %c0_i32_1 = arith.constant 0 : i32
    return %c0_i32, %c0_i32_0 : i32, i32
  }
  func.func @transform_7(%arg0: i32) -> (i32, i32) {
    %c0_i32 = arith.constant 0 : i32
    %c0_i32_0 = arith.constant 0 : i32
    %c0_i32_1 = arith.constant 0 : i32
    return %c0_i32, %c0_i32_0 : i32, i32
  }
  func.func @transform_8(%arg0: i32) -> (i32, i32) {
    %c0_i32 = arith.constant 0 : i32
    %c0_i32_0 = arith.constant 0 : i32
    %c0_i32_1 = arith.constant 0 : i32
    return %c0_i32, %c0_i32_0 : i32, i32
  }
  func.func @transform_9(%arg0: i32) -> (i32, i32) {
    %c0_i32 = arith.constant 0 : i32
    %c0_i32_0 = arith.constant 0 : i32
    %c0_i32_1 = arith.constant 0 : i32
    return %c0_i32, %c0_i32_0 : i32, i32
  }
  func.func @transform_10(%arg0: i32) -> (i32, i32) {
    %c0_i32 = arith.constant 0 : i32
    %c0_i32_0 = arith.constant 0 : i32
    return %arg0, %c0_i32 : i32, i32
  }
  func.func @transform_11(%arg0: i32) -> (i32, i32) {
    %c0_i32 = arith.constant 0 : i32
    %c0_i32_0 = arith.constant 0 : i32
    return %arg0, %c0_i32 : i32, i32
  }
  func.func @transform_12(%arg0: i32) -> (i32, i32) {
    %c0_i32 = arith.constant 0 : i32
    %c0_i32_0 = arith.constant 0 : i32
    return %arg0, %c0_i32 : i32, i32
  }
}

module attributes {stable_mosaic.version = 11 : i64} {
  func.func @_cell_kernel(%arg0: i32, %arg1: memref<64x128xf32, #tpu.memory_space<vmem>>, %arg2: memref<64x16xf32, #tpu.memory_space<vmem>>, %arg3: memref<128x8xbf16, #tpu.memory_space<vmem>>, %arg4: memref<1x8xf32, #tpu.memory_space<vmem>>, %arg5: memref<16x8xbf16, #tpu.memory_space<vmem>>, %arg6: memref<1x8xf32, #tpu.memory_space<vmem>>, %arg7: memref<16x8xbf16, #tpu.memory_space<vmem>>, %arg8: memref<1x8xf32, #tpu.memory_space<vmem>>, %arg9: memref<64x16xf32, #tpu.memory_space<vmem>>, %arg10: memref<64x8xf32, #tpu.memory_space<vmem>>) attributes {dimension_semantics = [#tpu.dimension_semantics<parallel>], iteration_bounds = array<i64: 2>, scalar_prefetch = 0 : i64, scratch_operands = 0 : i64, tpu.core_type = #tpu.core_type<tc>, window_params = [{transform_indices = @transform_0, window_bounds = array<i64: 64, 128>}, {transform_indices = @transform_1, window_bounds = array<i64: 64, 16>}, {pipeline_mode = #tpu.pipeline_mode<synchronous>, transform_indices = @transform_2, window_bounds = array<i64: 128, 8>}, {pipeline_mode = #tpu.pipeline_mode<synchronous>, transform_indices = @transform_3, window_bounds = array<i64: 1, 8>}, {pipeline_mode = #tpu.pipeline_mode<synchronous>, transform_indices = @transform_4, window_bounds = array<i64: 16, 8>}, {pipeline_mode = #tpu.pipeline_mode<synchronous>, transform_indices = @transform_5, window_bounds = array<i64: 1, 8>}, {pipeline_mode = #tpu.pipeline_mode<synchronous>, transform_indices = @transform_6, window_bounds = array<i64: 16, 8>}, {pipeline_mode = #tpu.pipeline_mode<synchronous>, transform_indices = @transform_7, window_bounds = array<i64: 1, 8>}, {transform_indices = @transform_8, window_bounds = array<i64: 64, 16>}, {transform_indices = @transform_9, window_bounds = array<i64: 64, 8>}]} {
    %c0 = arith.constant 0 : index
    %c0_0 = arith.constant 0 : index
    %0 = vector.load %arg1[%c0, %c0_0] : memref<64x128xf32, #tpu.memory_space<vmem>>, vector<64x128xf32>
    %cst = arith.constant 0.000000e+00 : f32
    %1 = vector.broadcast %cst : f32 to vector<64x128xf32>
    %2 = arith.maximumf %0, %1 : vector<64x128xf32>
    %3 = arith.truncf %2 : vector<64x128xf32> to vector<64x128xbf16>
    %c0_1 = arith.constant 0 : index
    %c0_2 = arith.constant 0 : index
    %4 = vector.load %arg2[%c0_1, %c0_2] : memref<64x16xf32, #tpu.memory_space<vmem>>, vector<64x16xf32>
    %cst_3 = arith.constant 0.000000e+00 : f32
    %5 = vector.broadcast %cst_3 : f32 to vector<64x16xf32>
    %6 = arith.maximumf %4, %5 : vector<64x16xf32>
    %7 = arith.truncf %6 : vector<64x16xf32> to vector<64x16xbf16>
    %c0_4 = arith.constant 0 : index
    %c0_5 = arith.constant 0 : index
    %8 = vector.load %arg3[%c0_4, %c0_5] : memref<128x8xbf16, #tpu.memory_space<vmem>>, vector<128x8xbf16>
    %cst_6 = arith.constant dense<0.000000e+00> : vector<64x8xf32>
    %9 = tpu.matmul %3, %8, %cst_6 {dimension_numbers = #tpu.dot_dimension_numbers<[1], [0], [0], [1], [0, 0, 1, 1], [], []>} : vector<64x128xbf16>, vector<128x8xbf16>, vector<64x8xf32> -> vector<64x8xf32>
    %c0_7 = arith.constant 0 : index
    %c0_8 = arith.constant 0 : index
    %10 = vector.load %arg4[%c0_7, %c0_8] : memref<1x8xf32, #tpu.memory_space<vmem>>, vector<1x8xf32>
    %11 = vector.broadcast %10 : vector<1x8xf32> to vector<64x8xf32>
    %12 = arith.addf %9, %11 : vector<64x8xf32>
    %c0_9 = arith.constant 0 : index
    %c0_10 = arith.constant 0 : index
    %13 = vector.load %arg5[%c0_9, %c0_10] : memref<16x8xbf16, #tpu.memory_space<vmem>>, vector<16x8xbf16>
    %cst_11 = arith.constant dense<0.000000e+00> : vector<64x8xf32>
    %14 = tpu.matmul %7, %13, %cst_11 {dimension_numbers = #tpu.dot_dimension_numbers<[1], [0], [0], [1], [0, 0, 1, 1], [], []>} : vector<64x16xbf16>, vector<16x8xbf16>, vector<64x8xf32> -> vector<64x8xf32>
    %c0_12 = arith.constant 0 : index
    %c0_13 = arith.constant 0 : index
    %15 = vector.load %arg6[%c0_12, %c0_13] : memref<1x8xf32, #tpu.memory_space<vmem>>, vector<1x8xf32>
    %16 = vector.broadcast %15 : vector<1x8xf32> to vector<64x8xf32>
    %17 = arith.addf %14, %16 : vector<64x8xf32>
    %18 = arith.addf %12, %17 : vector<64x8xf32>
    %19 = arith.addf %12, %17 : vector<64x8xf32>
    %c0_14 = arith.constant 0 : index
    %c0_15 = arith.constant 0 : index
    %20 = vector.load %arg9[%c0_14, %c0_15] : memref<64x16xf32, #tpu.memory_space<vmem>>, vector<64x8xf32>
    tpu.vector_store %arg9[%c0_14, %c0_15], %18 {strides = array<i32>} : memref<64x16xf32, #tpu.memory_space<vmem>>, vector<64x8xf32>,
    %cst_16 = arith.constant 0.000000e+00 : f32
    %21 = vector.broadcast %cst_16 : f32 to vector<64x8xf32>
    %22 = arith.maximumf %18, %21 : vector<64x8xf32>
    %23 = arith.truncf %22 : vector<64x8xf32> to vector<64x8xbf16>
    %c0_17 = arith.constant 0 : index
    %c8 = arith.constant 8 : index
    %24 = vector.load %arg9[%c0_17, %c8] : memref<64x16xf32, #tpu.memory_space<vmem>>, vector<64x8xf32>
    tpu.vector_store %arg9[%c0_17, %c8], %19 {strides = array<i32>} : memref<64x16xf32, #tpu.memory_space<vmem>>, vector<64x8xf32>,
    %cst_18 = arith.constant 0.000000e+00 : f32
    %25 = vector.broadcast %cst_18 : f32 to vector<64x8xf32>
    %26 = arith.maximumf %19, %25 : vector<64x8xf32>
    %27 = arith.truncf %26 : vector<64x8xf32> to vector<64x8xbf16>
    %c0_19 = arith.constant 0 : index
    %c0_20 = arith.constant 0 : index
    %28 = vector.load %arg8[%c0_19, %c0_20] : memref<1x8xf32, #tpu.memory_space<vmem>>, vector<1x8xf32>
    %c0_21 = arith.constant 0 : index
    %c0_22 = arith.constant 0 : index
    %29 = vector.load %arg7[%c0_21, %c0_22] : memref<16x8xbf16, #tpu.memory_space<vmem>>, vector<8x8xbf16>
    %cst_23 = arith.constant dense<0.000000e+00> : vector<64x8xf32>
    %30 = tpu.matmul %23, %29, %cst_23 {dimension_numbers = #tpu.dot_dimension_numbers<[1], [0], [0], [1], [0, 0, 1, 1], [], []>} : vector<64x8xbf16>, vector<8x8xbf16>, vector<64x8xf32> -> vector<64x8xf32>
    %31 = vector.broadcast %28 : vector<1x8xf32> to vector<64x8xf32>
    %32 = arith.addf %31, %30 : vector<64x8xf32>
    %c8_24 = arith.constant 8 : index
    %c0_25 = arith.constant 0 : index
    %33 = vector.load %arg7[%c8_24, %c0_25] : memref<16x8xbf16, #tpu.memory_space<vmem>>, vector<8x8xbf16>
    %cst_26 = arith.constant dense<0.000000e+00> : vector<64x8xf32>
    %34 = tpu.matmul %27, %33, %cst_26 {dimension_numbers = #tpu.dot_dimension_numbers<[1], [0], [0], [1], [0, 0, 1, 1], [], []>} : vector<64x8xbf16>, vector<8x8xbf16>, vector<64x8xf32> -> vector<64x8xf32>
    %35 = arith.addf %32, %34 : vector<64x8xf32>
    %c0_27 = arith.constant 0 : index
    %c0_28 = arith.constant 0 : index
    %36 = vector.load %arg10[%c0_27, %c0_28] : memref<64x8xf32, #tpu.memory_space<vmem>>, vector<64x8xf32>
    tpu.vector_store %arg10[%c0_27, %c0_28], %35 {strides = array<i32>} : memref<64x8xf32, #tpu.memory_space<vmem>>, vector<64x8xf32>,
    return
  }
  func.func @transform_0(%arg0: i32) -> (i32, i32) {
    %c0_i32 = arith.constant 0 : i32
    %c0_i32_0 = arith.constant 0 : i32
    return %arg0, %c0_i32 : i32, i32
  }
  func.func @transform_1(%arg0: i32) -> (i32, i32) {
    %c0_i32 = arith.constant 0 : i32
    %c0_i32_0 = arith.constant 0 : i32
    return %arg0, %c0_i32 : i32, i32
  }
  func.func @transform_2(%arg0: i32) -> (i32, i32) {
    %c0_i32 = arith.constant 0 : i32
    %c0_i32_0 = arith.constant 0 : i32
    %c0_i32_1 = arith.constant 0 : i32
    return %c0_i32, %c0_i32_0 : i32, i32
  }
  func.func @transform_3(%arg0: i32) -> (i32, i32) {
    %c0_i32 = arith.constant 0 : i32
    %c0_i32_0 = arith.constant 0 : i32
    %c0_i32_1 = arith.constant 0 : i32
    return %c0_i32, %c0_i32_0 : i32, i32
  }
  func.func @transform_4(%arg0: i32) -> (i32, i32) {
    %c0_i32 = arith.constant 0 : i32
    %c0_i32_0 = arith.constant 0 : i32
    %c0_i32_1 = arith.constant 0 : i32
    return %c0_i32, %c0_i32_0 : i32, i32
  }
  func.func @transform_5(%arg0: i32) -> (i32, i32) {
    %c0_i32 = arith.constant 0 : i32
    %c0_i32_0 = arith.constant 0 : i32
    %c0_i32_1 = arith.constant 0 : i32
    return %c0_i32, %c0_i32_0 : i32, i32
  }
  func.func @transform_6(%arg0: i32) -> (i32, i32) {
    %c0_i32 = arith.constant 0 : i32
    %c0_i32_0 = arith.constant 0 : i32
    %c0_i32_1 = arith.constant 0 : i32
    return %c0_i32, %c0_i32_0 : i32, i32
  }
  func.func @transform_7(%arg0: i32) -> (i32, i32) {
    %c0_i32 = arith.constant 0 : i32
    %c0_i32_0 = arith.constant 0 : i32
    %c0_i32_1 = arith.constant 0 : i32
    return %c0_i32, %c0_i32_0 : i32, i32
  }
  func.func @transform_8(%arg0: i32) -> (i32, i32) {
    %c0_i32 = arith.constant 0 : i32
    %c0_i32_0 = arith.constant 0 : i32
    return %arg0, %c0_i32 : i32, i32
  }
  func.func @transform_9(%arg0: i32) -> (i32, i32) {
    %c0_i32 = arith.constant 0 : i32
    %c0_i32_0 = arith.constant 0 : i32
    return %arg0, %c0_i32 : i32, i32
  }
}

</mosaic_0001>

<llo_original>
// kernel: _lambda_.6
$region0: #{_lambda_.6}
  #allocation0 [shape = 'u32[]', space=smem, size = 0x4, offset = 0x4, fixed_abs, tag = 'smem constant byte address 0x4 - core index']
  #allocation1 [shape = 'u32[144,128]{1,0:T(1,128)}', space=vmem, size = 0x12000, scoped, tag = 'internal scratch']
  %s0 = inlined_call_operand.vmem [shape: bf16[512,27], index: 0, kind: input, shape index: {}]
  %s1 = inlined_call_operand.vmem [shape: bf16[27,64], index: 1, kind: input, shape index: {}]
  %s2 = inlined_call_operand.vmem [shape: f32[1,64], index: 2, kind: input, shape index: {}]
  %s3 = inlined_call_operand.vmem [shape: f32[512,64], index: 3, kind: output, shape index: {}]
  %s4 = sld [smem:[#allocation0]]
  $region45: #{_lambda_.6} parent=0
    _
  %s6 = ssub.s32 1, %s4
  %s7 = scalar_select 0, %s6, %s4
  loop: start=0, step=1, limit=4
  $region2: #{_lambda_.6} parent=0 // loop_pre_header
    _
  $region3: #{_lambda_.6} parent=0 // loop_header
    %s9 = sphi 0, %s13
    %p10 = scmp.ge.s32.totalorder %s9, 4
    %s19 = sphi 0, %s21
    %s22 = sphi 0, %s19
    %s23 = sphi 0, %s22
    %s39 = sphi 0, %s23
    %s43 = sphi 0, %s43
    %s45 = sphi 0, %s43
    %s46 = sphi 0, %s45
    %s60 = sphi 0, %s46
    %s64 = sphi 0, %s64
    %s66 = sphi 0, %s64
    %s67 = sphi 0, %s66
    %s81 = sphi 0, %s67
    %s87 = sphi 0, %s89
    %s90 = sphi 0, %s87
    %s91 = sphi 0, %s90
    %s107 = sphi 0, %s91
  $region4: #{_lambda_.6} parent=0 // loop_header_branch
    %12 = sbr.rel (%p10) target = $region8
  $region5: #{_lambda_.6} parent=0 // loop_body
    %s14 = ssub.s32 %s9, 1
    %s15 = ssub.s32 %s9, 2
    %s16 = sadd.s32 %s9, 1
    %s17 = ssub.s32 %s9, %s16
    %p18 = scmp.eq.s32.totalorder %s17, 0
    %s20 = sadd.s32 %s19, 1
    %s21 = scalar_select %p18, %s19, %s20
    %p24 = pneg %p18
    %p25 = scmp.eq.s32.totalorder %s9, 1
    %p26 = por %p24, %p25
    %p27 = scmp.ne.s32.totalorder %s19, %s22
    %p28 = scmp.eq.s32.totalorder %s9, 0
    %p29 = por %p27, %p28
    %p30 = scmp.ne.s32.totalorder %s19, %s22
    %p31 = scmp.eq.s32.totalorder %s14, 1
    %p32 = por %p30, %p31
    %p33 = scmp.ne.s32.totalorder %s22, %s23
    %p34 = scmp.eq.s32.totalorder %s14, 0
    %p35 = por %p33, %p34
    %p36 = scmp.ne.s32.totalorder %s22, %s23
    %p37 = scmp.eq.s32.totalorder %s15, 1
    %p38 = por %p36, %p37
    %p40 = scmp.ne.s32.totalorder %s23, %s39
    %p41 = scmp.eq.s32.totalorder %s15, 0
    %p42 = por %p40, %p41
    %s44 = sadd.s32 %s43, 1
    %p47 = scmp.eq.s32.totalorder %s9, 1
    %p48 = scmp.ne.s32.totalorder %s43, %s45
    %p49 = scmp.eq.s32.totalorder %s9, 0
    %p50 = por %p48, %p49
    %p51 = scmp.ne.s32.totalorder %s43, %s45
    %p52 = scmp.eq.s32.totalorder %s14, 1
    %p53 = por %p51, %p52
    %p54 = scmp.ne.s32.totalorder %s45, %s46
    %p55 = scmp.eq.s32.totalorder %s14, 0
    %p56 = por %p54, %p55
    %p57 = scmp.ne.s32.totalorder %s45, %s46
    %p58 = scmp.eq.s32.totalorder %s15, 1
    %p59 = por %p57, %p58
    %p61 = scmp.ne.s32.totalorder %s46, %s60
    %p62 = scmp.eq.s32.totalorder %s15, 0
    %p63 = por %p61, %p62
    %s65 = sadd.s32 %s64, 1
    %p68 = scmp.eq.s32.totalorder %s9, 1
    %p69 = scmp.ne.s32.totalorder %s64, %s66
    %p70 = scmp.eq.s32.totalorder %s9, 0
    %p71 = por %p69, %p70
    %p72 = scmp.ne.s32.totalorder %s64, %s66
    %p73 = scmp.eq.s32.totalorder %s14, 1
    %p74 = por %p72, %p73
    %p75 = scmp.ne.s32.totalorder %s66, %s67
    %p76 = scmp.eq.s32.totalorder %s14, 0
    %p77 = por %p75, %p76
    %p78 = scmp.ne.s32.totalorder %s66, %s67
    %p79 = scmp.eq.s32.totalorder %s15, 1
    %p80 = por %p78, %p79
    %p82 = scmp.ne.s32.totalorder %s67, %s81
    %p83 = scmp.eq.s32.totalorder %s15, 0
    %p84 = por %p82, %p83
    %s85 = ssub.s32 %s9, %s16
    %p86 = scmp.eq.s32.totalorder %s85, 0
    %s88 = sadd.s32 %s87, 1
    %s89 = scalar_select %p86, %s87, %s88
    %p92 = pneg %p86
    %p93 = scmp.eq.s32.totalorder %s9, 1
    %p94 = por %p92, %p93
    %p95 = scmp.ne.s32.totalorder %s87, %s90
    %p96 = scmp.eq.s32.totalorder %s9, 0
    %p97 = por %p95, %p96
    %p98 = scmp.ne.s32.totalorder %s87, %s90
    %p99 = scmp.eq.s32.totalorder %s14, 1
    %p100 = por %p98, %p99
    %p101 = scmp.ne.s32.totalorder %s90, %s91
    %p102 = scmp.eq.s32.totalorder %s14, 0
    %p103 = por %p101, %p102
    %p104 = scmp.ne.s32.totalorder %s90, %s91
    %p105 = scmp.eq.s32.totalorder %s15, 1
    %p106 = por %p104, %p105
    %p108 = scmp.ne.s32.totalorder %s91, %s107
    %p109 = scmp.eq.s32.totalorder %s15, 0
    %p110 = por %p108, %p109
    %p111 = scmp.le.s32.totalorder 1, %s9
    %p112 = scmp.lt.s32.totalorder %s9, 3
    %p113 = pnand %p111, %p112
    %p114 = pneg %p113
    // Predicated region
    $region9: #{_lambda_.6} parent=5 // pred_check
      _
    $region10: #{_lambda_.6} parent=5 // pred_check_branch
      %116 = sbr.rel (%p113) target = $region12
    $region11: #{_lambda_.6} parent=5 // pred_region
      %s117 = ssub.s32 %s9, 1
      // Predicated region
      $region13: #{_lambda_.6} parent=11 // pred_check
        %p118 = pneg %p56
      $region14: #{_lambda_.6} parent=11 // pred_check_branch
        %120 = sbr.rel (%p118) target = $region16
      $region15: #{_lambda_.6} parent=11 // pred_region
        _
      $region16: #{_lambda_.6} parent=11 // pred_fallthru
        _
      // Predicated region
      $region17: #{_lambda_.6} parent=11 // pred_check
        %p121 = pneg %p77
      $region18: #{_lambda_.6} parent=11 // pred_check_branch
        %123 = sbr.rel (%p121) target = $region20
      $region19: #{_lambda_.6} parent=11 // pred_region
        _
      $region20: #{_lambda_.6} parent=11 // pred_fallthru
        _
    $region12: #{_lambda_.6} parent=5 // pred_fallthru
      _
    %p124 = scmp.lt.s32.totalorder %s9, 2
    // Predicated region
    $region21: #{_lambda_.6} parent=5 // pred_check
      %p125 = pneg %p124
    $region22: #{_lambda_.6} parent=5 // pred_check_branch
      %127 = sbr.rel (%p125) target = $region24
    $region23: #{_lambda_.6} parent=5 // pred_region
      // Predicated region
      $region25: #{_lambda_.6} parent=23 // pred_check
        %p128 = pneg %p29
      $region26: #{_lambda_.6} parent=23 // pred_check_branch
        %130 = sbr.rel (%p128) target = $region28
      $region27: #{_lambda_.6} parent=23 // pred_region
        %s131 = smul.u32 32, %s9
        %p132 = scmp.lt.s32.totalorder %s131, 63
        %s133 = scalar_select %p132, %s131, 63
        %s134 = smul.addr %s133, 4
        %s135 = scalar_lea.vmem %s0, %s134
        %s136 = smul.u32 32, %s9
      $region28: #{_lambda_.6} parent=23 // pred_fallthru
        _
    $region24: #{_lambda_.6} parent=5 // pred_fallthru
      _
    %p137 = scmp.le.s32.totalorder 1, %s9
    %p138 = scmp.lt.s32.totalorder %s9, 3
    %p139 = pnand %p137, %p138
    %p140 = pneg %p139
    // Predicated region
    $region29: #{_lambda_.6} parent=5 // pred_check
      _
    $region30: #{_lambda_.6} parent=5 // pred_check_branch
      %142 = sbr.rel (%p139) target = $region32
    $region31: #{_lambda_.6} parent=5 // pred_region
      %s143 = ssub.s32 %s9, 1
      %s144 = smul.u32 32, %s14
      %p145 = scmp.lt.s32.totalorder %s144, 63
      %s146 = scalar_select %p145, %s144, 63
      %s147 = smul.addr %s146, 4
      %s148 = scalar_lea.vmem %s0, %s147
      %p149 = pneg %p35
      %p150 = pneg %p32
      %p151 = pneg %p56
      %p152 = pneg %p53
      %p153 = pneg %p77
      %p154 = pneg %p74
      %p155 = pneg %p103
      %p156 = pneg %p100
      %s157 = smul.u32 32, %s14
      %p158 = scmp.lt.s32.totalorder %s157, 63
      %s159 = scalar_select %p158, %s157, 63
      %s160 = smul.addr %s159, 8
      %s161 = scalar_lea.vmem %s3, %s160
      %s162 = smul.u32 32, %s14
      %p163 = scmp.lt.s32.totalorder %s162, 63
      %s164 = scalar_select %p163, %s162, 63
      %s165 = smul.addr %s164, 4
      %s166 = scalar_lea.vmem %s0, %s165
      %s167 = smul.u32 32, %s14
      %s168 = smul.u32 32, %s14
      %p169 = scmp.lt.s32.totalorder %s168, 63
      %s170 = scalar_select %p169, %s168, 63
      %s171 = smul.addr %s170, 8
      %s172 = scalar_lea.vmem %s3, %s171
      %s173 = smul.u32 32, %s14
      %v175 = vld [vmem:[%s166] sm:$0xf]
      %v176 = vld [vmem:[%s166 + $0x4] sm:$0xf]
      %v177 = vld [vmem:[%s166 + $0x8] sm:$0xf]
      %v178 = vld [vmem:[%s166 + $0xc] sm:$0xf]
      %v179 = vld [vmem:[%s166 + $0x10] sm:$0xf]
      %v180 = vld [vmem:[%s166 + $0x14] sm:$0xf]
      %v181 = vld [vmem:[%s166 + $0x18] sm:$0xf]
      %v182 = vld [vmem:[%s166 + $0x1c] sm:$0xf]
      %v183 = vld [vmem:[%s166 + $0x20] sm:$0xf]
      %v184 = vld [vmem:[%s166 + $0x24] sm:$0xf]
      %v185 = vld [vmem:[%s166 + $0x28] sm:$0xf]
      %v186 = vld [vmem:[%s166 + $0x2c] sm:$0xf]
      %v187 = vld [vmem:[%s166 + $0x30] sm:$0xf]
      %v188 = vld [vmem:[%s166 + $0x34] sm:$0xf]
      %v189 = vld [vmem:[%s166 + $0x38] sm:$0xf]
      %v190 = vld [vmem:[%s166 + $0x3c] sm:$0xf]
      %v191 = vld [vmem:[%s166 + $0x40] sm:$0xf]
      %v192 = vld [vmem:[%s166 + $0x44] sm:$0xf]
      %v193 = vld [vmem:[%s166 + $0x48] sm:$0xf]
      %v194 = vld [vmem:[%s166 + $0x4c] sm:$0xf]
      %v195 = vld [vmem:[%s166 + $0x50] sm:$0xf]
      %v196 = vld [vmem:[%s166 + $0x54] sm:$0xf]
      %v197 = vld [vmem:[%s166 + $0x58] sm:$0xf]
      %v198 = vld [vmem:[%s166 + $0x5c] sm:$0xf]
      %v199 = vld [vmem:[%s166 + $0x60] sm:$0xf]
      %v200 = vld [vmem:[%s166 + $0x64] sm:$0xf]
      %v201 = vld [vmem:[%s166 + $0x68] sm:$0xf]
      %v202 = vld [vmem:[%s166 + $0x6c] sm:$0xf]
      %v203 = vld [vmem:[%s166 + $0x70] sm:$0xf]
      %v204 = vld [vmem:[%s166 + $0x74] sm:$0xf]
      %v205 = vld [vmem:[%s166 + $0x78] sm:$0xf]
      %v206 = vld [vmem:[%s166 + $0x7c] sm:$0xf]
      %v207 = vld [vmem:[%s1] sm:$0xf]
      %v208 = vld [vmem:[%s1 + $0x4] sm:$0xf]
      %v209 = vld [vmem:[%s1 + $0x8] sm:$0xf]
      %v210 = vld [vmem:[%s1 + $0xc] sm:$0x3]
      %v211 = vld [vmem:[%s2] sm:$0x1]
      %v213 = vlaneseq
      %v214 = vshrl.u32 %v213, 7
      %v215 = vsub.s32 0, %v214
      %v216 = vrot.slane %v211, %v215
      %v250 = vunpack.c.l.b16 %v175
      %v251 = vunpack.c.l.b16 %v176
      %v252 = vunpack.c.l.b16 %v177
      %v253 = vunpack.c.l.b16 %v178
      %v254 = vunpack.c.l.b16 %v179
      %v255 = vunpack.c.l.b16 %v180
      %v256 = vunpack.c.l.b16 %v181
      %v257 = vunpack.c.l.b16 %v182
      %v258 = vunpack.c.l.b16 %v183
      %v259 = vunpack.c.l.b16 %v184
      %v260 = vunpack.c.l.b16 %v185
      %v261 = vunpack.c.l.b16 %v186
      %v262 = vunpack.c.l.b16 %v187
      %v263 = vunpack.c.l.b16 %v188
      %v264 = vunpack.c.l.b16 %v189
      %v265 = vunpack.c.l.b16 %v190
      %v266 = vunpack.c.l.b16 %v191
      %v267 = vunpack.c.l.b16 %v192
      %v268 = vunpack.c.l.b16 %v193
      %v269 = vunpack.c.l.b16 %v194
      %v270 = vunpack.c.l.b16 %v195
      %v271 = vunpack.c.l.b16 %v196
      %v272 = vunpack.c.l.b16 %v197
      %v273 = vunpack.c.l.b16 %v198
      %v274 = vunpack.c.l.b16 %v199
      %v275 = vunpack.c.l.b16 %v200
      %v276 = vunpack.c.l.b16 %v201
      %v277 = vunpack.c.l.b16 %v202
      %v278 = vunpack.c.l.b16 %v203
      %v279 = vunpack.c.l.b16 %v204
      %v280 = vunpack.c.l.b16 %v205
      %v281 = vunpack.c.l.b16 %v206
      %v282 = vpack.c.b16 %v251, %v250
      %v283 = vpack.c.b16 %v253, %v252
      %v284 = vpack.c.b16 %v255, %v254
      %v285 = vpack.c.b16 %v257, %v256
      %v286 = vpack.c.b16 %v259, %v258
      %v287 = vpack.c.b16 %v261, %v260
      %v288 = vpack.c.b16 %v263, %v262
      %v289 = vpack.c.b16 %v265, %v264
      %v290 = vpack.c.b16 %v267, %v266
      %v291 = vpack.c.b16 %v269, %v268
      %v292 = vpack.c.b16 %v271, %v270
      %v293 = vpack.c.b16 %v273, %v272
      %v294 = vpack.c.b16 %v275, %v274
      %v295 = vpack.c.b16 %v277, %v276
      %v296 = vpack.c.b16 %v279, %v278
      %v297 = vpack.c.b16 %v281, %v280
      %v302 = vunpack.c.l.b16 %v207
      %v303 = vunpack.c.l.b16 %v208
      %v304 = vunpack.c.l.b16 %v209
      %v305 = vunpack.c.l.b16 %v210
      %v306 = vpack.c.b16 %v303, %v302
      %v307 = vpack.c.b16 %v305, %v304
      %vm309 = vcmask 220160
      %v311 = vsel %vm309, %v282, 0
      %v314 = vsel %vm309, %v283, 0
      %v317 = vsel %vm309, %v284, 0
      %v320 = vsel %vm309, %v285, 0
      %v323 = vsel %vm309, %v286, 0
      %v326 = vsel %vm309, %v287, 0
      %v329 = vsel %vm309, %v288, 0
      %v332 = vsel %vm309, %v289, 0
      %v335 = vsel %vm309, %v290, 0
      %v338 = vsel %vm309, %v291, 0
      %v341 = vsel %vm309, %v292, 0
      %v344 = vsel %vm309, %v293, 0
      %v347 = vsel %vm309, %v294, 0
      %v350 = vsel %vm309, %v295, 0
      %v353 = vsel %vm309, %v296, 0
      %v356 = vsel %vm309, %v297, 0
      %vm358 = vcmask 1044480
      %vm359 = vcmask 1045504
      %v360 = vsel %vm358, 4294967295, 65535
      %v361 = vsel %vm359, %v360, 0
      %v363 = vand.u32 %v307, %v361
      %365 = vmatprep.subr.bf16.mxu0 0
      %366 = vmatpush1.bf16.msra.mxu0 0
      %367 = vmatprep.subr.bf16.mxu0 0
      %368 = vmatpush1.bf16.msra.mxu0 0
      %369 = vmatprep.subr.bf16.mxu0 0
      %370 = vmatpush1.bf16.msra.mxu0 0
      %371 = vmatprep.subr.bf16.mxu0 0
      %372 = vmatpush1.bf16.msra.mxu0 0
      %373 = vmatprep.subr.bf16.mxu0 0
      %374 = vmatpush1.bf16.msra.mxu0 0
      %375 = vmatprep.subr.bf16.mxu0 0
      %376 = vmatpush1.bf16.msra.mxu0 0
      %377 = vmatprep.subr.bf16.mxu0 0
      %378 = vmatpush1.bf16.msra.mxu0 %v363
      %379 = vmatprep.subr.bf16.mxu0 0
      %380 = vmatpush1.bf16.msra.mxu0 %v306
      %381 = vmatprep.subr.bf16.mxu0 0
      %382 = vmatpush2.bf16.msra.mxu0 0
      %383 = vmatprep.subr.bf16.mxu0 0
      %384 = vmatpush2.bf16.msra.mxu0 0
      %385 = vmatprep.subr.bf16.mxu0 0
      %386 = vmatpush2.bf16.msra.mxu0 0
      %387 = vmatprep.subr.bf16.mxu0 0
      %388 = vmatpush2.bf16.msra.mxu0 0
      %389 = vmatprep.subr.bf16.mxu0 0
      %390 = vmatpush2.bf16.msra.mxu0 0
      %391 = vmatprep.subr.bf16.mxu0 0
      %392 = vmatpush2.bf16.msra.mxu0 0
      %393 = vmatprep.subr.bf16.mxu0 0
      %394 = vmatpush2.bf16.msra.mxu0 0
      %395 = vmatprep.subr.bf16.mxu0 0
      %396 = vmatpush2.bf16.msra.mxu0 0
      %397 = vmatprep.mubr.bf16.mxu0 0
      %398 = vmatmul.mubr.bf16.gmra.mxu0 %v311
      %v399 = vpop.f32.mrf.mxu0
      %v400 = vadd.f32 %v216, %v399
      %v401 = vpop.f32.mrf.mxu0
      %v402 = vpop.f32.mrf.mxu0
      %v403 = vadd.f32 %v216, %v402
      %v404 = vpop.f32.mrf.mxu0
      %405 = vmatprep.mubr.bf16.mxu0 0
      %406 = vmatmul.mubr.bf16.gmra.mxu0 %v314
      %v407 = vpop.f32.mrf.mxu0
      %v408 = vadd.f32 %v216, %v407
      %v409 = vpop.f32.mrf.mxu0
      %v410 = vpop.f32.mrf.mxu0
      %v411 = vadd.f32 %v216, %v410
      %v412 = vpop.f32.mrf.mxu0
      %413 = vmatprep.mubr.bf16.mxu0 0
      %414 = vmatmul.mubr.bf16.gmra.mxu0 %v317
      %v415 = vpop.f32.mrf.mxu0
      %v416 = vadd.f32 %v216, %v415
      %v417 = vpop.f32.mrf.mxu0
      %v418 = vpop.f32.mrf.mxu0
      %v419 = vadd.f32 %v216, %v418
      %v420 = vpop.f32.mrf.mxu0
      %421 = vmatprep.mubr.bf16.mxu0 0
      %422 = vmatmul.mubr.bf16.gmra.mxu0 %v320
      %v423 = vpop.f32.mrf.mxu0
      %v424 = vadd.f32 %v216, %v423
      %v425 = vpop.f32.mrf.mxu0
      %v426 = vpop.f32.mrf.mxu0
      %v427 = vadd.f32 %v216, %v426
      %v428 = vpop.f32.mrf.mxu0
      %429 = vmatprep.mubr.bf16.mxu0 0
      %430 = vmatmul.mubr.bf16.gmra.mxu0 %v323
      %v431 = vpop.f32.mrf.mxu0
      %v432 = vadd.f32 %v216, %v431
      %v433 = vpop.f32.mrf.mxu0
      %v434 = vpop.f32.mrf.mxu0
      %v435 = vadd.f32 %v216, %v434
      %v436 = vpop.f32.mrf.mxu0
      %437 = vmatprep.mubr.bf16.mxu0 0
      %438 = vmatmul.mubr.bf16.gmra.mxu0 %v326
      %v439 = vpop.f32.mrf.mxu0
      %v440 = vadd.f32 %v216, %v439
      %v441 = vpop.f32.mrf.mxu0
      %v442 = vpop.f32.mrf.mxu0
      %v443 = vadd.f32 %v216, %v442
      %v444 = vpop.f32.mrf.mxu0
      %445 = vmatprep.mubr.bf16.mxu0 0
      %446 = vmatmul.mubr.bf16.gmra.mxu0 %v329
      %v447 = vpop.f32.mrf.mxu0
      %v448 = vadd.f32 %v216, %v447
      %v449 = vpop.f32.mrf.mxu0
      %v450 = vpop.f32.mrf.mxu0
      %v451 = vadd.f32 %v216, %v450
      %v452 = vpop.f32.mrf.mxu0
      %453 = vmatprep.mubr.bf16.mxu0 0
      %454 = vmatmul.mubr.bf16.gmra.mxu0 %v332
      %v455 = vpop.f32.mrf.mxu0
      %v456 = vadd.f32 %v216, %v455
      %v457 = vpop.f32.mrf.mxu0
      %v458 = vpop.f32.mrf.mxu0
      %v459 = vadd.f32 %v216, %v458
      %v460 = vpop.f32.mrf.mxu0
      %461 = vmatprep.mubr.bf16.mxu0 0
      %462 = vmatmul.mubr.bf16.gmra.mxu0 %v335
      %v463 = vpop.f32.mrf.mxu0
      %v464 = vadd.f32 %v216, %v463
      %v465 = vpop.f32.mrf.mxu0
      %v466 = vpop.f32.mrf.mxu0
      %v467 = vadd.f32 %v216, %v466
      %v468 = vpop.f32.mrf.mxu0
      %469 = vmatprep.mubr.bf16.mxu0 0
      %470 = vmatmul.mubr.bf16.gmra.mxu0 %v338
      %v471 = vpop.f32.mrf.mxu0
      %v472 = vadd.f32 %v216, %v471
      %v473 = vpop.f32.mrf.mxu0
      %v474 = vpop.f32.mrf.mxu0
      %v475 = vadd.f32 %v216, %v474
      %v476 = vpop.f32.mrf.mxu0
      %477 = vmatprep.mubr.bf16.mxu0 0
      %478 = vmatmul.mubr.bf16.gmra.mxu0 %v341
      %v479 = vpop.f32.mrf.mxu0
      %v480 = vadd.f32 %v216, %v479
      %v481 = vpop.f32.mrf.mxu0
      %v482 = vpop.f32.mrf.mxu0
      %v483 = vadd.f32 %v216, %v482
      %v484 = vpop.f32.mrf.mxu0
      %485 = vmatprep.mubr.bf16.mxu0 0
      %486 = vmatmul.mubr.bf16.gmra.mxu0 %v344
      %v487 = vpop.f32.mrf.mxu0
      %v488 = vadd.f32 %v216, %v487
      %v489 = vpop.f32.mrf.mxu0
      %v490 = vpop.f32.mrf.mxu0
      %v491 = vadd.f32 %v216, %v490
      %v492 = vpop.f32.mrf.mxu0
      %493 = vmatprep.mubr.bf16.mxu0 0
      %494 = vmatmul.mubr.bf16.gmra.mxu0 %v347
      %v495 = vpop.f32.mrf.mxu0
      %v496 = vadd.f32 %v216, %v495
      %v497 = vpop.f32.mrf.mxu0
      %v498 = vpop.f32.mrf.mxu0
      %v499 = vadd.f32 %v216, %v498
      %v500 = vpop.f32.mrf.mxu0
      %501 = vmatprep.mubr.bf16.mxu0 0
      %502 = vmatmul.mubr.bf16.gmra.mxu0 %v350
      %v503 = vpop.f32.mrf.mxu0
      %v504 = vadd.f32 %v216, %v503
      %v505 = vpop.f32.mrf.mxu0
      %v506 = vpop.f32.mrf.mxu0
      %v507 = vadd.f32 %v216, %v506
      %v508 = vpop.f32.mrf.mxu0
      %509 = vmatprep.mubr.bf16.mxu0 0
      %510 = vmatmul.mubr.bf16.gmra.mxu0 %v353
      %v511 = vpop.f32.mrf.mxu0
      %v512 = vadd.f32 %v216, %v511
      %v513 = vpop.f32.mrf.mxu0
      %v514 = vpop.f32.mrf.mxu0
      %v515 = vadd.f32 %v216, %v514
      %v516 = vpop.f32.mrf.mxu0
      %517 = vmatprep.mubr.bf16.mxu0 0
      %518 = vmatmul.mubr.bf16.gmra.mxu0 %v356
      %v519 = vpop.f32.mrf.mxu0
      %v520 = vadd.f32 %v216, %v519
      %v521 = vpop.f32.mrf.mxu0
      %v522 = vpop.f32.mrf.mxu0
      %v523 = vadd.f32 %v216, %v522
      %v524 = vpop.f32.mrf.mxu0
      %525 = vdwg.mxu0
      %v526 = vmax.f32 %v400, 0.0
      %v527 = vmax.f32 %v403, 0.0
      %v528 = vmax.f32 %v408, 0.0
      %v529 = vmax.f32 %v411, 0.0
      %v530 = vmax.f32 %v416, 0.0
      %v531 = vmax.f32 %v419, 0.0
      %v532 = vmax.f32 %v424, 0.0
      %v533 = vmax.f32 %v427, 0.0
      %v534 = vmax.f32 %v432, 0.0
      %v535 = vmax.f32 %v435, 0.0
      %v536 = vmax.f32 %v440, 0.0
      %v537 = vmax.f32 %v443, 0.0
      %v538 = vmax.f32 %v448, 0.0
      %v539 = vmax.f32 %v451, 0.0
      %v540 = vmax.f32 %v456, 0.0
      %v541 = vmax.f32 %v459, 0.0
      %v542 = vmax.f32 %v464, 0.0
      %v543 = vmax.f32 %v467, 0.0
      %v544 = vmax.f32 %v472, 0.0
      %v545 = vmax.f32 %v475, 0.0
      %v546 = vmax.f32 %v480, 0.0
      %v547 = vmax.f32 %v483, 0.0
      %v548 = vmax.f32 %v488, 0.0
      %v549 = vmax.f32 %v491, 0.0
      %v550 = vmax.f32 %v496, 0.0
      %v551 = vmax.f32 %v499, 0.0
      %v552 = vmax.f32 %v504, 0.0
      %v553 = vmax.f32 %v507, 0.0
      %v554 = vmax.f32 %v512, 0.0
      %v555 = vmax.f32 %v515, 0.0
      %v556 = vmax.f32 %v520, 0.0
      %v557 = vmax.f32 %v523, 0.0
      %vm558 = vcmask 523264
      %559 = vst.msk [vmem:[%s172] sm:$0xff] %vm558, %v526
      %560 = vst.msk [vmem:[%s172 + $0x8] sm:$0xff] %vm558, %v527
      %561 = vst.msk [vmem:[%s172 + $0x10] sm:$0xff] %vm558, %v528
      %562 = vst.msk [vmem:[%s172 + $0x18] sm:$0xff] %vm558, %v529
      %563 = vst.msk [vmem:[%s172 + $0x20] sm:$0xff] %vm558, %v530
      %564 = vst.msk [vmem:[%s172 + $0x28] sm:$0xff] %vm558, %v531
      %565 = vst.msk [vmem:[%s172 + $0x30] sm:$0xff] %vm558, %v532
      %566 = vst.msk [vmem:[%s172 + $0x38] sm:$0xff] %vm558, %v533
      %567 = vst.msk [vmem:[%s172 + $0x40] sm:$0xff] %vm558, %v534
      %568 = vst.msk [vmem:[%s172 + $0x48] sm:$0xff] %vm558, %v535
      %569 = vst.msk [vmem:[%s172 + $0x50] sm:$0xff] %vm558, %v536
      %570 = vst.msk [vmem:[%s172 + $0x58] sm:$0xff] %vm558, %v537
      %571 = vst.msk [vmem:[%s172 + $0x60] sm:$0xff] %vm558, %v538
      %572 = vst.msk [vmem:[%s172 + $0x68] sm:$0xff] %vm558, %v539
      %573 = vst.msk [vmem:[%s172 + $0x70] sm:$0xff] %vm558, %v540
      %574 = vst.msk [vmem:[%s172 + $0x78] sm:$0xff] %vm558, %v541
      %575 = vst.msk [vmem:[%s172 + $0x80] sm:$0xff] %vm558, %v542
      %576 = vst.msk [vmem:[%s172 + $0x88] sm:$0xff] %vm558, %v543
      %577 = vst.msk [vmem:[%s172 + $0x90] sm:$0xff] %vm558, %v544
      %578 = vst.msk [vmem:[%s172 + $0x98] sm:$0xff] %vm558, %v545
      %579 = vst.msk [vmem:[%s172 + $0xa0] sm:$0xff] %vm558, %v546
      %580 = vst.msk [vmem:[%s172 + $0xa8] sm:$0xff] %vm558, %v547
      %581 = vst.msk [vmem:[%s172 + $0xb0] sm:$0xff] %vm558, %v548
      %582 = vst.msk [vmem:[%s172 + $0xb8] sm:$0xff] %vm558, %v549
      %583 = vst.msk [vmem:[%s172 + $0xc0] sm:$0xff] %vm558, %v550
      %584 = vst.msk [vmem:[%s172 + $0xc8] sm:$0xff] %vm558, %v551
      %585 = vst.msk [vmem:[%s172 + $0xd0] sm:$0xff] %vm558, %v552
      %586 = vst.msk [vmem:[%s172 + $0xd8] sm:$0xff] %vm558, %v553
      %587 = vst.msk [vmem:[%s172 + $0xe0] sm:$0xff] %vm558, %v554
      %588 = vst.msk [vmem:[%s172 + $0xe8] sm:$0xff] %vm558, %v555
      %589 = vst.msk [vmem:[%s172 + $0xf0] sm:$0xff] %vm558, %v556
      %590 = vst.msk [vmem:[%s172 + $0xf8] sm:$0xff] %vm558, %v557
      %s591 = smul.u32 32, %s14
      %p592 = scmp.lt.s32.totalorder %s591, 63
      %s593 = scalar_select %p592, %s591, 63
      %s594 = smul.addr %s593, 8
      %s595 = scalar_lea.vmem %s3, %s594
      // Predicated region
      $region33: #{_lambda_.6} parent=31 // pred_check
        %p596 = pneg %p100
      $region34: #{_lambda_.6} parent=31 // pred_check_branch
        %598 = sbr.rel (%p596) target = $region36
      $region35: #{_lambda_.6} parent=31 // pred_region
        %s599 = smul.u32 32, %s14
      $region36: #{_lambda_.6} parent=31 // pred_fallthru
        _
    $region32: #{_lambda_.6} parent=5 // pred_fallthru
      _
    %p600 = scmp.le.s32.totalorder 2, %s9
    // Predicated region
    $region37: #{_lambda_.6} parent=5 // pred_check
      %p601 = pneg %p600
    $region38: #{_lambda_.6} parent=5 // pred_check_branch
      %603 = sbr.rel (%p601) target = $region40
    $region39: #{_lambda_.6} parent=5 // pred_region
      %s604 = ssub.s32 %s9, 2
      // Predicated region
      $region41: #{_lambda_.6} parent=39 // pred_check
        %p605 = pneg %p106
      $region42: #{_lambda_.6} parent=39 // pred_check_branch
        %607 = sbr.rel (%p605) target = $region44
      $region43: #{_lambda_.6} parent=39 // pred_region
        %s608 = smul.u32 32, %s15
        %p609 = scmp.lt.s32.totalorder %s608, 63
        %s610 = scalar_select %p609, %s608, 63
        %s611 = smul.addr %s610, 8
        %s612 = scalar_lea.vmem %s3, %s611
      $region44: #{_lambda_.6} parent=39 // pred_fallthru
        _
    $region40: #{_lambda_.6} parent=5 // pred_fallthru
      _
  $region6: #{_lambda_.6} parent=0 // loop_footer
    %s13 = sadd.s32 1, %s9
  $region7: #{_lambda_.6} parent=0 // loop_footer_branch
    %8 = sbr.rel target = $region3
  $region8: #{_lambda_.6} parent=0 // loop_exit
    _

// kernel: _lambda_.7
$region0: #{_lambda_.7}
  #allocation0 [shape = 'u32[]', space=smem, size = 0x4, offset = 0x4, fixed_abs, tag = 'smem constant byte address 0x4 - core index']
  #allocation1 [shape = 'u32[144,128]{1,0:T(1,128)}', space=vmem, size = 0x12000, scoped, tag = 'internal scratch']
  %s0 = inlined_call_operand.vmem [shape: bf16[512,576], index: 0, kind: input, shape index: {}]
  %s1 = inlined_call_operand.vmem [shape: bf16[576,64], index: 1, kind: input, shape index: {}]
  %s2 = inlined_call_operand.vmem [shape: f32[1,64], index: 2, kind: input, shape index: {}]
  %s3 = inlined_call_operand.vmem [shape: f32[512,64], index: 3, kind: output, shape index: {}]
  %s4 = sld [smem:[#allocation0]]
  $region45: #{_lambda_.7} parent=0
    _
  %s6 = ssub.s32 1, %s4
  %s7 = scalar_select 0, %s6, %s4
  loop: start=0, step=1, limit=4
  $region2: #{_lambda_.7} parent=0 // loop_pre_header
    _
  $region3: #{_lambda_.7} parent=0 // loop_header
    %s9 = sphi 0, %s13
    %p10 = scmp.ge.s32.totalorder %s9, 4
    %s19 = sphi 0, %s21
    %s22 = sphi 0, %s19
    %s23 = sphi 0, %s22
    %s39 = sphi 0, %s23
    %s43 = sphi 0, %s43
    %s45 = sphi 0, %s43
    %s46 = sphi 0, %s45
    %s60 = sphi 0, %s46
    %s64 = sphi 0, %s64
    %s66 = sphi 0, %s64
    %s67 = sphi 0, %s66
    %s81 = sphi 0, %s67
    %s87 = sphi 0, %s89
    %s90 = sphi 0, %s87
    %s91 = sphi 0, %s90
    %s107 = sphi 0, %s91
  $region4: #{_lambda_.7} parent=0 // loop_header_branch
    %12 = sbr.rel (%p10) target = $region8
  $region5: #{_lambda_.7} parent=0 // loop_body
    %s14 = ssub.s32 %s9, 1
    %s15 = ssub.s32 %s9, 2
    %s16 = sadd.s32 %s9, 1
    %s17 = ssub.s32 %s9, %s16
    %p18 = scmp.eq.s32.totalorder %s17, 0
    %s20 = sadd.s32 %s19, 1
    %s21 = scalar_select %p18, %s19, %s20
    %p24 = pneg %p18
    %p25 = scmp.eq.s32.totalorder %s9, 1
    %p26 = por %p24, %p25
    %p27 = scmp.ne.s32.totalorder %s19, %s22
    %p28 = scmp.eq.s32.totalorder %s9, 0
    %p29 = por %p27, %p28
    %p30 = scmp.ne.s32.totalorder %s19, %s22
    %p31 = scmp.eq.s32.totalorder %s14, 1
    %p32 = por %p30, %p31
    %p33 = scmp.ne.s32.totalorder %s22, %s23
    %p34 = scmp.eq.s32.totalorder %s14, 0
    %p35 = por %p33, %p34
    %p36 = scmp.ne.s32.totalorder %s22, %s23
    %p37 = scmp.eq.s32.totalorder %s15, 1
    %p38 = por %p36, %p37
    %p40 = scmp.ne.s32.totalorder %s23, %s39
    %p41 = scmp.eq.s32.totalorder %s15, 0
    %p42 = por %p40, %p41
    %s44 = sadd.s32 %s43, 1
    %p47 = scmp.eq.s32.totalorder %s9, 1
    %p48 = scmp.ne.s32.totalorder %s43, %s45
    %p49 = scmp.eq.s32.totalorder %s9, 0
    %p50 = por %p48, %p49
    %p51 = scmp.ne.s32.totalorder %s43, %s45
    %p52 = scmp.eq.s32.totalorder %s14, 1
    %p53 = por %p51, %p52
    %p54 = scmp.ne.s32.totalorder %s45, %s46
    %p55 = scmp.eq.s32.totalorder %s14, 0
    %p56 = por %p54, %p55
    %p57 = scmp.ne.s32.totalorder %s45, %s46
    %p58 = scmp.eq.s32.totalorder %s15, 1
    %p59 = por %p57, %p58
    %p61 = scmp.ne.s32.totalorder %s46, %s60
    %p62 = scmp.eq.s32.totalorder %s15, 0
    %p63 = por %p61, %p62
    %s65 = sadd.s32 %s64, 1
    %p68 = scmp.eq.s32.totalorder %s9, 1
    %p69 = scmp.ne.s32.totalorder %s64, %s66
    %p70 = scmp.eq.s32.totalorder %s9, 0
    %p71 = por %p69, %p70
    %p72 = scmp.ne.s32.totalorder %s64, %s66
    %p73 = scmp.eq.s32.totalorder %s14, 1
    %p74 = por %p72, %p73
    %p75 = scmp.ne.s32.totalorder %s66, %s67
    %p76 = scmp.eq.s32.totalorder %s14, 0
    %p77 = por %p75, %p76
    %p78 = scmp.ne.s32.totalorder %s66, %s67
    %p79 = scmp.eq.s32.totalorder %s15, 1
    %p80 = por %p78, %p79
    %p82 = scmp.ne.s32.totalorder %s67, %s81
    %p83 = scmp.eq.s32.totalorder %s15, 0
    %p84 = por %p82, %p83
    %s85 = ssub.s32 %s9, %s16
    %p86 = scmp.eq.s32.totalorder %s85, 0
    %s88 = sadd.s32 %s87, 1
    %s89 = scalar_select %p86, %s87, %s88
    %p92 = pneg %p86
    %p93 = scmp.eq.s32.totalorder %s9, 1
    %p94 = por %p92, %p93
    %p95 = scmp.ne.s32.totalorder %s87, %s90
    %p96 = scmp.eq.s32.totalorder %s9, 0
    %p97 = por %p95, %p96
    %p98 = scmp.ne.s32.totalorder %s87, %s90
    %p99 = scmp.eq.s32.totalorder %s14, 1
    %p100 = por %p98, %p99
    %p101 = scmp.ne.s32.totalorder %s90, %s91
    %p102 = scmp.eq.s32.totalorder %s14, 0
    %p103 = por %p101, %p102
    %p104 = scmp.ne.s32.totalorder %s90, %s91
    %p105 = scmp.eq.s32.totalorder %s15, 1
    %p106 = por %p104, %p105
    %p108 = scmp.ne.s32.totalorder %s91, %s107
    %p109 = scmp.eq.s32.totalorder %s15, 0
    %p110 = por %p108, %p109
    %p111 = scmp.le.s32.totalorder 1, %s9
    %p112 = scmp.lt.s32.totalorder %s9, 3
    %p113 = pnand %p111, %p112
    %p114 = pneg %p113
    // Predicated region
    $region9: #{_lambda_.7} parent=5 // pred_check
      _
    $region10: #{_lambda_.7} parent=5 // pred_check_branch
      %116 = sbr.rel (%p113) target = $region12
    $region11: #{_lambda_.7} parent=5 // pred_region
      %s117 = ssub.s32 %s9, 1
      // Predicated region
      $region13: #{_lambda_.7} parent=11 // pred_check
        %p118 = pneg %p56
      $region14: #{_lambda_.7} parent=11 // pred_check_branch
        %120 = sbr.rel (%p118) target = $region16
      $region15: #{_lambda_.7} parent=11 // pred_region
        _
      $region16: #{_lambda_.7} parent=11 // pred_fallthru
        _
      // Predicated region
      $region17: #{_lambda_.7} parent=11 // pred_check
        %p121 = pneg %p77
      $region18: #{_lambda_.7} parent=11 // pred_check_branch
        %123 = sbr.rel (%p121) target = $region20
      $region19: #{_lambda_.7} parent=11 // pred_region
        _
      $region20: #{_lambda_.7} parent=11 // pred_fallthru
        _
    $region12: #{_lambda_.7} parent=5 // pred_fallthru
      _
    %p124 = scmp.lt.s32.totalorder %s9, 2
    // Predicated region
    $region21: #{_lambda_.7} parent=5 // pred_check
      %p125 = pneg %p124
    $region22: #{_lambda_.7} parent=5 // pred_check_branch
      %127 = sbr.rel (%p125) target = $region24
    $region23: #{_lambda_.7} parent=5 // pred_region
      // Predicated region
      $region25: #{_lambda_.7} parent=23 // pred_check
        %p128 = pneg %p29
      $region26: #{_lambda_.7} parent=23 // pred_check_branch
        %130 = sbr.rel (%p128) target = $region28
      $region27: #{_lambda_.7} parent=23 // pred_region
        %s131 = smul.u32 32, %s9
        %p132 = scmp.lt.s32.totalorder %s131, 63
        %s133 = scalar_select %p132, %s131, 63
        %s134 = smul.addr %s133, 5
        %s135 = smul.addr %s134, 4
        %s136 = scalar_lea.vmem %s0, %s135
        %s137 = smul.u32 32, %s9
      $region28: #{_lambda_.7} parent=23 // pred_fallthru
        _
    $region24: #{_lambda_.7} parent=5 // pred_fallthru
      _
    %p138 = scmp.le.s32.totalorder 1, %s9
    %p139 = scmp.lt.s32.totalorder %s9, 3
    %p140 = pnand %p138, %p139
    %p141 = pneg %p140
    // Predicated region
    $region29: #{_lambda_.7} parent=5 // pred_check
      _
    $region30: #{_lambda_.7} parent=5 // pred_check_branch
      %143 = sbr.rel (%p140) target = $region32
    $region31: #{_lambda_.7} parent=5 // pred_region
      %s144 = ssub.s32 %s9, 1
      %s145 = smul.u32 32, %s14
      %p146 = scmp.lt.s32.totalorder %s145, 63
      %s147 = scalar_select %p146, %s145, 63
      %s148 = smul.addr %s147, 5
      %s149 = smul.addr %s148, 4
      %s150 = scalar_lea.vmem %s0, %s149
      %p151 = pneg %p35
      %p152 = pneg %p32
      %p153 = pneg %p56
      %p154 = pneg %p53
      %p155 = pneg %p77
      %p156 = pneg %p74
      %p157 = pneg %p103
      %p158 = pneg %p100
      %s159 = smul.u32 32, %s14
      %p160 = scmp.lt.s32.totalorder %s159, 63
      %s161 = scalar_select %p160, %s159, 63
      %s162 = smul.addr %s161, 8
      %s163 = scalar_lea.vmem %s3, %s162
      %s164 = smul.u32 32, %s14
      %p165 = scmp.lt.s32.totalorder %s164, 63
      %s166 = scalar_select %p165, %s164, 63
      %s167 = smul.addr %s166, 5
      %s168 = smul.addr %s167, 4
      %s169 = scalar_lea.vmem %s0, %s168
      %s170 = smul.u32 32, %s14
      %s171 = smul.u32 32, %s14
      %p172 = scmp.lt.s32.totalorder %s171, 63
      %s173 = scalar_select %p172, %s171, 63
      %s174 = smul.addr %s173, 8
      %s175 = scalar_lea.vmem %s3, %s174
      %s176 = smul.u32 32, %s14
      %v178 = vld [vmem:[%s169] sm:$0xff]
      %v179 = vld [vmem:[%s169 + $0x8] sm:$0xff]
      %v180 = vld [vmem:[%s169 + $0x10] sm:$0xf]
      %v181 = vld [vmem:[%s169 + $0x14] sm:$0xff]
      %v182 = vld [vmem:[%s169 + $0x1c] sm:$0xff]
      %v183 = vld [vmem:[%s169 + $0x24] sm:$0xf]
      %v184 = vld [vmem:[%s169 + $0x28] sm:$0xff]
      %v185 = vld [vmem:[%s169 + $0x30] sm:$0xff]
      %v186 = vld [vmem:[%s169 + $0x38] sm:$0xf]
      %v187 = vld [vmem:[%s169 + $0x3c] sm:$0xff]
      %v188 = vld [vmem:[%s169 + $0x44] sm:$0xff]
      %v189 = vld [vmem:[%s169 + $0x4c] sm:$0xf]
      %v190 = vld [vmem:[%s169 + $0x50] sm:$0xff]
      %v191 = vld [vmem:[%s169 + $0x58] sm:$0xff]
      %v192 = vld [vmem:[%s169 + $0x60] sm:$0xf]
      %v193 = vld [vmem:[%s169 + $0x64] sm:$0xff]
      %v194 = vld [vmem:[%s169 + $0x6c] sm:$0xff]
      %v195 = vld [vmem:[%s169 + $0x74] sm:$0xf]
      %v196 = vld [vmem:[%s169 + $0x78] sm:$0xff]
      %v197 = vld [vmem:[%s169 + $0x80] sm:$0xff]
      %v198 = vld [vmem:[%s169 + $0x88] sm:$0xf]
      %v199 = vld [vmem:[%s169 + $0x8c] sm:$0xff]
      %v200 = vld [vmem:[%s169 + $0x94] sm:$0xff]
      %v201 = vld [vmem:[%s169 + $0x9c] sm:$0xf]
      %v202 = vld [vmem:[%s169 + $0xa0] sm:$0xff]
      %v203 = vld [vmem:[%s169 + $0xa8] sm:$0xff]
      %v204 = vld [vmem:[%s169 + $0xb0] sm:$0xf]
      %v205 = vld [vmem:[%s169 + $0xb4] sm:$0xff]
      %v206 = vld [vmem:[%s169 + $0xbc] sm:$0xff]
      %v207 = vld [vmem:[%s169 + $0xc4] sm:$0xf]
      %v208 = vld [vmem:[%s169 + $0xc8] sm:$0xff]
      %v209 = vld [vmem:[%s169 + $0xd0] sm:$0xff]
      %v210 = vld [vmem:[%s169 + $0xd8] sm:$0xf]
      %v211 = vld [vmem:[%s169 + $0xdc] sm:$0xff]
      %v212 = vld [vmem:[%s169 + $0xe4] sm:$0xff]
      %v213 = vld [vmem:[%s169 + $0xec] sm:$0xf]
      %v214 = vld [vmem:[%s169 + $0xf0] sm:$0xff]
      %v215 = vld [vmem:[%s169 + $0xf8] sm:$0xff]
      %v216 = vld [vmem:[%s169 + $0x100] sm:$0xf]
      %v217 = vld [vmem:[%s169 + $0x104] sm:$0xff]
      %v218 = vld [vmem:[%s169 + $0x10c] sm:$0xff]
      %v219 = vld [vmem:[%s169 + $0x114] sm:$0xf]
      %v220 = vld [vmem:[%s169 + $0x118] sm:$0xff]
      %v221 = vld [vmem:[%s169 + $0x120] sm:$0xff]
      %v222 = vld [vmem:[%s169 + $0x128] sm:$0xf]
      %v223 = vld [vmem:[%s169 + $0x12c] sm:$0xff]
      %v224 = vld [vmem:[%s169 + $0x134] sm:$0xff]
      %v225 = vld [vmem:[%s169 + $0x13c] sm:$0xf]
      %v226 = vld [vmem:[%s169 + $0x140] sm:$0xff]
      %v227 = vld [vmem:[%s169 + $0x148] sm:$0xff]
      %v228 = vld [vmem:[%s169 + $0x150] sm:$0xf]
      %v229 = vld [vmem:[%s169 + $0x154] sm:$0xff]
      %v230 = vld [vmem:[%s169 + $0x15c] sm:$0xff]
      %v231 = vld [vmem:[%s169 + $0x164] sm:$0xf]
      %v232 = vld [vmem:[%s169 + $0x168] sm:$0xff]
      %v233 = vld [vmem:[%s169 + $0x170] sm:$0xff]
      %v234 = vld [vmem:[%s169 + $0x178] sm:$0xf]
      %v235 = vld [vmem:[%s169 + $0x17c] sm:$0xff]
      %v236 = vld [vmem:[%s169 + $0x184] sm:$0xff]
      %v237 = vld [vmem:[%s169 + $0x18c] sm:$0xf]
      %v238 = vld [vmem:[%s169 + $0x190] sm:$0xff]
      %v239 = vld [vmem:[%s169 + $0x198] sm:$0xff]
      %v240 = vld [vmem:[%s169 + $0x1a0] sm:$0xf]
      %v241 = vld [vmem:[%s169 + $0x1a4] sm:$0xff]
      %v242 = vld [vmem:[%s169 + $0x1ac] sm:$0xff]
      %v243 = vld [vmem:[%s169 + $0x1b4] sm:$0xf]
      %v244 = vld [vmem:[%s169 + $0x1b8] sm:$0xff]
      %v245 = vld [vmem:[%s169 + $0x1c0] sm:$0xff]
      %v246 = vld [vmem:[%s169 + $0x1c8] sm:$0xf]
      %v247 = vld [vmem:[%s169 + $0x1cc] sm:$0xff]
      %v248 = vld [vmem:[%s169 + $0x1d4] sm:$0xff]
      %v249 = vld [vmem:[%s169 + $0x1dc] sm:$0xf]
      %v250 = vld [vmem:[%s169 + $0x1e0] sm:$0xff]
      %v251 = vld [vmem:[%s169 + $0x1e8] sm:$0xff]
      %v252 = vld [vmem:[%s169 + $0x1f0] sm:$0xf]
      %v253 = vld [vmem:[%s169 + $0x1f4] sm:$0xff]
      %v254 = vld [vmem:[%s169 + $0x1fc] sm:$0xff]
      %v255 = vld [vmem:[%s169 + $0x204] sm:$0xf]
      %v256 = vld [vmem:[%s169 + $0x208] sm:$0xff]
      %v257 = vld [vmem:[%s169 + $0x210] sm:$0xff]
      %v258 = vld [vmem:[%s169 + $0x218] sm:$0xf]
      %v259 = vld [vmem:[%s169 + $0x21c] sm:$0xff]
      %v260 = vld [vmem:[%s169 + $0x224] sm:$0xff]
      %v261 = vld [vmem:[%s169 + $0x22c] sm:$0xf]
      %v262 = vld [vmem:[%s169 + $0x230] sm:$0xff]
      %v263 = vld [vmem:[%s169 + $0x238] sm:$0xff]
      %v264 = vld [vmem:[%s169 + $0x240] sm:$0xf]
      %v265 = vld [vmem:[%s169 + $0x244] sm:$0xff]
      %v266 = vld [vmem:[%s169 + $0x24c] sm:$0xff]
      %v267 = vld [vmem:[%s169 + $0x254] sm:$0xf]
      %v268 = vld [vmem:[%s169 + $0x258] sm:$0xff]
      %v269 = vld [vmem:[%s169 + $0x260] sm:$0xff]
      %v270 = vld [vmem:[%s169 + $0x268] sm:$0xf]
      %v271 = vld [vmem:[%s169 + $0x26c] sm:$0xff]
      %v272 = vld [vmem:[%s169 + $0x274] sm:$0xff]
      %v273 = vld [vmem:[%s169 + $0x27c] sm:$0xf]
      %v274 = vld [vmem:[%s1] sm:$0xf]
      %v275 = vld [vmem:[%s1 + $0x4] sm:$0xf]
      %v276 = vld [vmem:[%s1 + $0x8] sm:$0xf]
      %v277 = vld [vmem:[%s1 + $0xc] sm:$0xf]
      %v278 = vld [vmem:[%s1 + $0x10] sm:$0xf]
      %v279 = vld [vmem:[%s1 + $0x14] sm:$0xf]
      %v280 = vld [vmem:[%s1 + $0x18] sm:$0xf]
      %v281 = vld [vmem:[%s1 + $0x1c] sm:$0xf]
      %v282 = vld [vmem:[%s1 + $0x20] sm:$0xf]
      %v283 = vld [vmem:[%s1 + $0x24] sm:$0xf]
      %v284 = vld [vmem:[%s1 + $0x28] sm:$0xf]
      %v285 = vld [vmem:[%s1 + $0x2c] sm:$0xf]
      %v286 = vld [vmem:[%s1 + $0x30] sm:$0xf]
      %v287 = vld [vmem:[%s1 + $0x34] sm:$0xf]
      %v288 = vld [vmem:[%s1 + $0x38] sm:$0xf]
      %v289 = vld [vmem:[%s1 + $0x3c] sm:$0xf]
      %v290 = vld [vmem:[%s1 + $0x40] sm:$0xf]
      %v291 = vld [vmem:[%s1 + $0x44] sm:$0xf]
      %v292 = vld [vmem:[%s1 + $0x48] sm:$0xf]
      %v293 = vld [vmem:[%s1 + $0x4c] sm:$0xf]
      %v294 = vld [vmem:[%s1 + $0x50] sm:$0xf]
      %v295 = vld [vmem:[%s1 + $0x54] sm:$0xf]
      %v296 = vld [vmem:[%s1 + $0x58] sm:$0xf]
      %v297 = vld [vmem:[%s1 + $0x5c] sm:$0xf]
      %v298 = vld [vmem:[%s1 + $0x60] sm:$0xf]
      %v299 = vld [vmem:[%s1 + $0x64] sm:$0xf]
      %v300 = vld [vmem:[%s1 + $0x68] sm:$0xf]
      %v301 = vld [vmem:[%s1 + $0x6c] sm:$0xf]
      %v302 = vld [vmem:[%s1 + $0x70] sm:$0xf]
      %v303 = vld [vmem:[%s1 + $0x74] sm:$0xf]
      %v304 = vld [vmem:[%s1 + $0x78] sm:$0xf]
      %v305 = vld [vmem:[%s1 + $0x7c] sm:$0xf]
      %v306 = vld [vmem:[%s1 + $0x80] sm:$0xf]
      %v307 = vld [vmem:[%s1 + $0x84] sm:$0xf]
      %v308 = vld [vmem:[%s1 + $0x88] sm:$0xf]
      %v309 = vld [vmem:[%s1 + $0x8c] sm:$0xf]
      %v310 = vld [vmem:[%s1 + $0x90] sm:$0xf]
      %v311 = vld [vmem:[%s1 + $0x94] sm:$0xf]
      %v312 = vld [vmem:[%s1 + $0x98] sm:$0xf]
      %v313 = vld [vmem:[%s1 + $0x9c] sm:$0xf]
      %v314 = vld [vmem:[%s1 + $0xa0] sm:$0xf]
      %v315 = vld [vmem:[%s1 + $0xa4] sm:$0xf]
      %v316 = vld [vmem:[%s1 + $0xa8] sm:$0xf]
      %v317 = vld [vmem:[%s1 + $0xac] sm:$0xf]
      %v318 = vld [vmem:[%s1 + $0xb0] sm:$0xf]
      %v319 = vld [vmem:[%s1 + $0xb4] sm:$0xf]
      %v320 = vld [vmem:[%s1 + $0xb8] sm:$0xf]
      %v321 = vld [vmem:[%s1 + $0xbc] sm:$0xf]
      %v322 = vld [vmem:[%s1 + $0xc0] sm:$0xf]
      %v323 = vld [vmem:[%s1 + $0xc4] sm:$0xf]
      %v324 = vld [vmem:[%s1 + $0xc8] sm:$0xf]
      %v325 = vld [vmem:[%s1 + $0xcc] sm:$0xf]
      %v326 = vld [vmem:[%s1 + $0xd0] sm:$0xf]
      %v327 = vld [vmem:[%s1 + $0xd4] sm:$0xf]
      %v328 = vld [vmem:[%s1 + $0xd8] sm:$0xf]
      %v329 = vld [vmem:[%s1 + $0xdc] sm:$0xf]
      %v330 = vld [vmem:[%s1 + $0xe0] sm:$0xf]
      %v331 = vld [vmem:[%s1 + $0xe4] sm:$0xf]
      %v332 = vld [vmem:[%s1 + $0xe8] sm:$0xf]
      %v333 = vld [vmem:[%s1 + $0xec] sm:$0xf]
      %v334 = vld [vmem:[%s1 + $0xf0] sm:$0xf]
      %v335 = vld [vmem:[%s1 + $0xf4] sm:$0xf]
      %v336 = vld [vmem:[%s1 + $0xf8] sm:$0xf]
      %v337 = vld [vmem:[%s1 + $0xfc] sm:$0xf]
      %v338 = vld [vmem:[%s1 + $0x100] sm:$0xf]
      %v339 = vld [vmem:[%s1 + $0x104] sm:$0xf]
      %v340 = vld [vmem:[%s1 + $0x108] sm:$0xf]
      %v341 = vld [vmem:[%s1 + $0x10c] sm:$0xf]
      %v342 = vld [vmem:[%s1 + $0x110] sm:$0xf]
      %v343 = vld [vmem:[%s1 + $0x114] sm:$0xf]
      %v344 = vld [vmem:[%s1 + $0x118] sm:$0xf]
      %v345 = vld [vmem:[%s1 + $0x11c] sm:$0xf]
      %v346 = vld [vmem:[%s2] sm:$0x1]
      %v348 = vlaneseq
      %v349 = vshrl.u32 %v348, 7
      %v350 = vsub.s32 0, %v349
      %v351 = vrot.slane %v346, %v350
      %v449 = vunpack.c.l.b16 %v178
      %v450 = vunpack.c.h.b16 %v178
      %v451 = vunpack.c.l.b16 %v179
      %v452 = vunpack.c.h.b16 %v179
      %v453 = vunpack.c.l.b16 %v180
      %v454 = vunpack.c.l.b16 %v181
      %v455 = vunpack.c.h.b16 %v181
      %v456 = vunpack.c.l.b16 %v182
      %v457 = vunpack.c.h.b16 %v182
      %v458 = vunpack.c.l.b16 %v183
      %v459 = vunpack.c.l.b16 %v184
      %v460 = vunpack.c.h.b16 %v184
      %v461 = vunpack.c.l.b16 %v185
      %v462 = vunpack.c.h.b16 %v185
      %v463 = vunpack.c.l.b16 %v186
      %v464 = vunpack.c.l.b16 %v187
      %v465 = vunpack.c.h.b16 %v187
      %v466 = vunpack.c.l.b16 %v188
      %v467 = vunpack.c.h.b16 %v188
      %v468 = vunpack.c.l.b16 %v189
      %v469 = vunpack.c.l.b16 %v190
      %v470 = vunpack.c.h.b16 %v190
      %v471 = vunpack.c.l.b16 %v191
      %v472 = vunpack.c.h.b16 %v191
      %v473 = vunpack.c.l.b16 %v192
      %v474 = vunpack.c.l.b16 %v193
      %v475 = vunpack.c.h.b16 %v193
      %v476 = vunpack.c.l.b16 %v194
      %v477 = vunpack.c.h.b16 %v194
      %v478 = vunpack.c.l.b16 %v195
      %v479 = vunpack.c.l.b16 %v196
      %v480 = vunpack.c.h.b16 %v196
      %v481 = vunpack.c.l.b16 %v197
      %v482 = vunpack.c.h.b16 %v197
      %v483 = vunpack.c.l.b16 %v198
      %v484 = vunpack.c.l.b16 %v199
      %v485 = vunpack.c.h.b16 %v199
      %v486 = vunpack.c.l.b16 %v200
      %v487 = vunpack.c.h.b16 %v200
      %v488 = vunpack.c.l.b16 %v201
      %v489 = vunpack.c.l.b16 %v202
      %v490 = vunpack.c.h.b16 %v202
      %v491 = vunpack.c.l.b16 %v203
      %v492 = vunpack.c.h.b16 %v203
      %v493 = vunpack.c.l.b16 %v204
      %v494 = vunpack.c.l.b16 %v205
      %v495 = vunpack.c.h.b16 %v205
      %v496 = vunpack.c.l.b16 %v206
      %v497 = vunpack.c.h.b16 %v206
      %v498 = vunpack.c.l.b16 %v207
      %v499 = vunpack.c.l.b16 %v208
      %v500 = vunpack.c.h.b16 %v208
      %v501 = vunpack.c.l.b16 %v209
      %v502 = vunpack.c.h.b16 %v209
      %v503 = vunpack.c.l.b16 %v210
      %v504 = vunpack.c.l.b16 %v211
      %v505 = vunpack.c.h.b16 %v211
      %v506 = vunpack.c.l.b16 %v212
      %v507 = vunpack.c.h.b16 %v212
      %v508 = vunpack.c.l.b16 %v213
      %v509 = vunpack.c.l.b16 %v214
      %v510 = vunpack.c.h.b16 %v214
      %v511 = vunpack.c.l.b16 %v215
      %v512 = vunpack.c.h.b16 %v215
      %v513 = vunpack.c.l.b16 %v216
      %v514 = vunpack.c.l.b16 %v217
      %v515 = vunpack.c.h.b16 %v217
      %v516 = vunpack.c.l.b16 %v218
      %v517 = vunpack.c.h.b16 %v218
      %v518 = vunpack.c.l.b16 %v219
      %v519 = vunpack.c.l.b16 %v220
      %v520 = vunpack.c.h.b16 %v220
      %v521 = vunpack.c.l.b16 %v221
      %v522 = vunpack.c.h.b16 %v221
      %v523 = vunpack.c.l.b16 %v222
      %v524 = vunpack.c.l.b16 %v223
      %v525 = vunpack.c.h.b16 %v223
      %v526 = vunpack.c.l.b16 %v224
      %v527 = vunpack.c.h.b16 %v224
      %v528 = vunpack.c.l.b16 %v225
      %v529 = vunpack.c.l.b16 %v226
      %v530 = vunpack.c.h.b16 %v226
      %v531 = vunpack.c.l.b16 %v227
      %v532 = vunpack.c.h.b16 %v227
      %v533 = vunpack.c.l.b16 %v228
      %v534 = vunpack.c.l.b16 %v229
      %v535 = vunpack.c.h.b16 %v229
      %v536 = vunpack.c.l.b16 %v230
      %v537 = vunpack.c.h.b16 %v230
      %v538 = vunpack.c.l.b16 %v231
      %v539 = vunpack.c.l.b16 %v232
      %v540 = vunpack.c.h.b16 %v232
      %v541 = vunpack.c.l.b16 %v233
      %v542 = vunpack.c.h.b16 %v233
      %v543 = vunpack.c.l.b16 %v234
      %v544 = vunpack.c.l.b16 %v235
      %v545 = vunpack.c.h.b16 %v235
      %v546 = vunpack.c.l.b16 %v236
      %v547 = vunpack.c.h.b16 %v236
      %v548 = vunpack.c.l.b16 %v237
      %v549 = vunpack.c.l.b16 %v238
      %v550 = vunpack.c.h.b16 %v238
      %v551 = vunpack.c.l.b16 %v239
      %v552 = vunpack.c.h.b16 %v239
      %v553 = vunpack.c.l.b16 %v240
      %v554 = vunpack.c.l.b16 %v241
      %v555 = vunpack.c.h.b16 %v241
      %v556 = vunpack.c.l.b16 %v242
      %v557 = vunpack.c.h.b16 %v242
      %v558 = vunpack.c.l.b16 %v243
      %v559 = vunpack.c.l.b16 %v244
      %v560 = vunpack.c.h.b16 %v244
      %v561 = vunpack.c.l.b16 %v245
      %v562 = vunpack.c.h.b16 %v245
      %v563 = vunpack.c.l.b16 %v246
      %v564 = vunpack.c.l.b16 %v247
      %v565 = vunpack.c.h.b16 %v247
      %v566 = vunpack.c.l.b16 %v248
      %v567 = vunpack.c.h.b16 %v248
      %v568 = vunpack.c.l.b16 %v249
      %v569 = vunpack.c.l.b16 %v250
      %v570 = vunpack.c.h.b16 %v250
      %v571 = vunpack.c.l.b16 %v251
      %v572 = vunpack.c.h.b16 %v251
      %v573 = vunpack.c.l.b16 %v252
      %v574 = vunpack.c.l.b16 %v253
      %v575 = vunpack.c.h.b16 %v253
      %v576 = vunpack.c.l.b16 %v254
      %v577 = vunpack.c.h.b16 %v254
      %v578 = vunpack.c.l.b16 %v255
      %v579 = vunpack.c.l.b16 %v256
      %v580 = vunpack.c.h.b16 %v256
      %v581 = vunpack.c.l.b16 %v257
      %v582 = vunpack.c.h.b16 %v257
      %v583 = vunpack.c.l.b16 %v258
      %v584 = vunpack.c.l.b16 %v259
      %v585 = vunpack.c.h.b16 %v259
      %v586 = vunpack.c.l.b16 %v260
      %v587 = vunpack.c.h.b16 %v260
      %v588 = vunpack.c.l.b16 %v261
      %v589 = vunpack.c.l.b16 %v262
      %v590 = vunpack.c.h.b16 %v262
      %v591 = vunpack.c.l.b16 %v263
      %v592 = vunpack.c.h.b16 %v263
      %v593 = vunpack.c.l.b16 %v264
      %v594 = vunpack.c.l.b16 %v265
      %v595 = vunpack.c.h.b16 %v265
      %v596 = vunpack.c.l.b16 %v266
      %v597 = vunpack.c.h.b16 %v266
      %v598 = vunpack.c.l.b16 %v267
      %v599 = vunpack.c.l.b16 %v268
      %v600 = vunpack.c.h.b16 %v268
      %v601 = vunpack.c.l.b16 %v269
      %v602 = vunpack.c.h.b16 %v269
      %v603 = vunpack.c.l.b16 %v270
      %v604 = vunpack.c.l.b16 %v271
      %v605 = vunpack.c.h.b16 %v271
      %v606 = vunpack.c.l.b16 %v272
      %v607 = vunpack.c.h.b16 %v272
      %v608 = vunpack.c.l.b16 %v273
      %v609 = vpack.c.b16 %v454, %v449
      %v610 = vpack.c.b16 %v455, %v450
      %v611 = vpack.c.b16 %v456, %v451
      %v612 = vpack.c.b16 %v457, %v452
      %v613 = vpack.c.b16 %v458, %v453
      %v614 = vpack.c.b16 %v464, %v459
      %v615 = vpack.c.b16 %v465, %v460
      %v616 = vpack.c.b16 %v466, %v461
      %v617 = vpack.c.b16 %v467, %v462
      %v618 = vpack.c.b16 %v468, %v463
      %v619 = vpack.c.b16 %v474, %v469
      %v620 = vpack.c.b16 %v475, %v470
      %v621 = vpack.c.b16 %v476, %v471
      %v622 = vpack.c.b16 %v477, %v472
      %v623 = vpack.c.b16 %v478, %v473
      %v624 = vpack.c.b16 %v484, %v479
      %v625 = vpack.c.b16 %v485, %v480
      %v626 = vpack.c.b16 %v486, %v481
      %v627 = vpack.c.b16 %v487, %v482
      %v628 = vpack.c.b16 %v488, %v483
      %v629 = vpack.c.b16 %v494, %v489
      %v630 = vpack.c.b16 %v495, %v490
      %v631 = vpack.c.b16 %v496, %v491
      %v632 = vpack.c.b16 %v497, %v492
      %v633 = vpack.c.b16 %v498, %v493
      %v634 = vpack.c.b16 %v504, %v499
      %v635 = vpack.c.b16 %v505, %v500
      %v636 = vpack.c.b16 %v506, %v501
      %v637 = vpack.c.b16 %v507, %v502
      %v638 = vpack.c.b16 %v508, %v503
      %v639 = vpack.c.b16 %v514, %v509
      %v640 = vpack.c.b16 %v515, %v510
      %v641 = vpack.c.b16 %v516, %v511
      %v642 = vpack.c.b16 %v517, %v512
      %v643 = vpack.c.b16 %v518, %v513
      %v644 = vpack.c.b16 %v524, %v519
      %v645 = vpack.c.b16 %v525, %v520
      %v646 = vpack.c.b16 %v526, %v521
      %v647 = vpack.c.b16 %v527, %v522
      %v648 = vpack.c.b16 %v528, %v523
      %v649 = vpack.c.b16 %v534, %v529
      %v650 = vpack.c.b16 %v535, %v530
      %v651 = vpack.c.b16 %v536, %v531
      %v652 = vpack.c.b16 %v537, %v532
      %v653 = vpack.c.b16 %v538, %v533
      %v654 = vpack.c.b16 %v544, %v539
      %v655 = vpack.c.b16 %v545, %v540
      %v656 = vpack.c.b16 %v546, %v541
      %v657 = vpack.c.b16 %v547, %v542
      %v658 = vpack.c.b16 %v548, %v543
      %v659 = vpack.c.b16 %v554, %v549
      %v660 = vpack.c.b16 %v555, %v550
      %v661 = vpack.c.b16 %v556, %v551
      %v662 = vpack.c.b16 %v557, %v552
      %v663 = vpack.c.b16 %v558, %v553
      %v664 = vpack.c.b16 %v564, %v559
      %v665 = vpack.c.b16 %v565, %v560
      %v666 = vpack.c.b16 %v566, %v561
      %v667 = vpack.c.b16 %v567, %v562
      %v668 = vpack.c.b16 %v568, %v563
      %v669 = vpack.c.b16 %v574, %v569
      %v670 = vpack.c.b16 %v575, %v570
      %v671 = vpack.c.b16 %v576, %v571
      %v672 = vpack.c.b16 %v577, %v572
      %v673 = vpack.c.b16 %v578, %v573
      %v674 = vpack.c.b16 %v584, %v579
      %v675 = vpack.c.b16 %v585, %v580
      %v676 = vpack.c.b16 %v586, %v581
      %v677 = vpack.c.b16 %v587, %v582
      %v678 = vpack.c.b16 %v588, %v583
      %v679 = vpack.c.b16 %v594, %v589
      %v680 = vpack.c.b16 %v595, %v590
      %v681 = vpack.c.b16 %v596, %v591
      %v682 = vpack.c.b16 %v597, %v592
      %v683 = vpack.c.b16 %v598, %v593
      %v684 = vpack.c.b16 %v604, %v599
      %v685 = vpack.c.b16 %v605, %v600
      %v686 = vpack.c.b16 %v606, %v601
      %v687 = vpack.c.b16 %v607, %v602
      %v688 = vpack.c.b16 %v608, %v603
      %v825 = vunpack.c.l.b16 %v274
      %v826 = vunpack.c.l.b16 %v275
      %v827 = vunpack.c.l.b16 %v276
      %v828 = vunpack.c.l.b16 %v277
      %v829 = vunpack.c.l.b16 %v278
      %v830 = vunpack.c.l.b16 %v279
      %v831 = vunpack.c.l.b16 %v280
      %v832 = vunpack.c.l.b16 %v281
      %v833 = vunpack.c.l.b16 %v282
      %v834 = vunpack.c.l.b16 %v283
      %v835 = vunpack.c.l.b16 %v284
      %v836 = vunpack.c.l.b16 %v285
      %v837 = vunpack.c.l.b16 %v286
      %v838 = vunpack.c.l.b16 %v287
      %v839 = vunpack.c.l.b16 %v288
      %v840 = vunpack.c.l.b16 %v289
      %v841 = vunpack.c.l.b16 %v290
      %v842 = vunpack.c.l.b16 %v291
      %v843 = vunpack.c.l.b16 %v292
      %v844 = vunpack.c.l.b16 %v293
      %v845 = vunpack.c.l.b16 %v294
      %v846 = vunpack.c.l.b16 %v295
      %v847 = vunpack.c.l.b16 %v296
      %v848 = vunpack.c.l.b16 %v297
      %v849 = vunpack.c.l.b16 %v298
      %v850 = vunpack.c.l.b16 %v299
      %v851 = vunpack.c.l.b16 %v300
      %v852 = vunpack.c.l.b16 %v301
      %v853 = vunpack.c.l.b16 %v302
      %v854 = vunpack.c.l.b16 %v303
      %v855 = vunpack.c.l.b16 %v304
      %v856 = vunpack.c.l.b16 %v305
      %v857 = vunpack.c.l.b16 %v306
      %v858 = vunpack.c.l.b16 %v307
      %v859 = vunpack.c.l.b16 %v308
      %v860 = vunpack.c.l.b16 %v309
      %v861 = vunpack.c.l.b16 %v310
      %v862 = vunpack.c.l.b16 %v311
      %v863 = vunpack.c.l.b16 %v312
      %v864 = vunpack.c.l.b16 %v313
      %v865 = vunpack.c.l.b16 %v314
      %v866 = vunpack.c.l.b16 %v315
      %v867 = vunpack.c.l.b16 %v316
      %v868 = vunpack.c.l.b16 %v317
      %v869 = vunpack.c.l.b16 %v318
      %v870 = vunpack.c.l.b16 %v319
      %v871 = vunpack.c.l.b16 %v320
      %v872 = vunpack.c.l.b16 %v321
      %v873 = vunpack.c.l.b16 %v322
      %v874 = vunpack.c.l.b16 %v323
      %v875 = vunpack.c.l.b16 %v324
      %v876 = vunpack.c.l.b16 %v325
      %v877 = vunpack.c.l.b16 %v326
      %v878 = vunpack.c.l.b16 %v327
      %v879 = vunpack.c.l.b16 %v328
      %v880 = vunpack.c.l.b16 %v329
      %v881 = vunpack.c.l.b16 %v330
      %v882 = vunpack.c.l.b16 %v331
      %v883 = vunpack.c.l.b16 %v332
      %v884 = vunpack.c.l.b16 %v333
      %v885 = vunpack.c.l.b16 %v334
      %v886 = vunpack.c.l.b16 %v335
      %v887 = vunpack.c.l.b16 %v336
      %v888 = vunpack.c.l.b16 %v337
      %v889 = vunpack.c.l.b16 %v338
      %v890 = vunpack.c.l.b16 %v339
      %v891 = vunpack.c.l.b16 %v340
      %v892 = vunpack.c.l.b16 %v341
      %v893 = vunpack.c.l.b16 %v342
      %v894 = vunpack.c.l.b16 %v343
      %v895 = vunpack.c.l.b16 %v344
      %v896 = vunpack.c.l.b16 %v345
      %v897 = vpack.c.b16 %v826, %v825
      %v898 = vpack.c.b16 %v828, %v827
      %v899 = vpack.c.b16 %v830, %v829
      %v900 = vpack.c.b16 %v832, %v831
      %v901 = vpack.c.b16 %v834, %v833
      %v902 = vpack.c.b16 %v836, %v835
      %v903 = vpack.c.b16 %v838, %v837
      %v904 = vpack.c.b16 %v840, %v839
      %v905 = vpack.c.b16 %v842, %v841
      %v906 = vpack.c.b16 %v844, %v843
      %v907 = vpack.c.b16 %v846, %v845
      %v908 = vpack.c.b16 %v848, %v847
      %v909 = vpack.c.b16 %v850, %v849
      %v910 = vpack.c.b16 %v852, %v851
      %v911 = vpack.c.b16 %v854, %v853
      %v912 = vpack.c.b16 %v856, %v855
      %v913 = vpack.c.b16 %v858, %v857
      %v914 = vpack.c.b16 %v860, %v859
      %v915 = vpack.c.b16 %v862, %v861
      %v916 = vpack.c.b16 %v864, %v863
      %v917 = vpack.c.b16 %v866, %v865
      %v918 = vpack.c.b16 %v868, %v867
      %v919 = vpack.c.b16 %v870, %v869
      %v920 = vpack.c.b16 %v872, %v871
      %v921 = vpack.c.b16 %v874, %v873
      %v922 = vpack.c.b16 %v876, %v875
      %v923 = vpack.c.b16 %v878, %v877
      %v924 = vpack.c.b16 %v880, %v879
      %v925 = vpack.c.b16 %v882, %v881
      %v926 = vpack.c.b16 %v884, %v883
      %v927 = vpack.c.b16 %v886, %v885
      %v928 = vpack.c.b16 %v888, %v887
      %v929 = vpack.c.b16 %v890, %v889
      %v930 = vpack.c.b16 %v892, %v891
      %v931 = vpack.c.b16 %v894, %v893
      %v932 = vpack.c.b16 %v896, %v895
      %vm969 = vcmask 523264
      %v971 = vsel %vm969, %v613, 0
      %v974 = vsel %vm969, %v618, 0
      %v977 = vsel %vm969, %v623, 0
      %v980 = vsel %vm969, %v628, 0
      %v983 = vsel %vm969, %v633, 0
      %v986 = vsel %vm969, %v638, 0
      %v989 = vsel %vm969, %v643, 0
      %v992 = vsel %vm969, %v648, 0
      %v995 = vsel %vm969, %v653, 0
      %v998 = vsel %vm969, %v658, 0
      %v1001 = vsel %vm969, %v663, 0
      %v1004 = vsel %vm969, %v668, 0
      %v1007 = vsel %vm969, %v673, 0
      %v1010 = vsel %vm969, %v678, 0
      %v1013 = vsel %vm969, %v683, 0
      %v1016 = vsel %vm969, %v688, 0
      %1018 = vmatprep.subr.bf16.mxu0 0
      %1019 = vmatpush1.bf16.msra.mxu0 %v904
      %1020 = vmatprep.subr.bf16.mxu0 0
      %1021 = vmatpush1.bf16.msra.mxu0 %v903
      %1022 = vmatprep.subr.bf16.mxu0 0
      %1023 = vmatpush1.bf16.msra.mxu0 %v902
      %1024 = vmatprep.subr.bf16.mxu0 0
      %1025 = vmatpush1.bf16.msra.mxu0 %v901
      %1026 = vmatprep.subr.bf16.mxu0 0
      %1027 = vmatpush1.bf16.msra.mxu0 %v900
      %1028 = vmatprep.subr.bf16.mxu0 0
      %1029 = vmatpush1.bf16.msra.mxu0 %v899
      %1030 = vmatprep.subr.bf16.mxu0 0
      %1031 = vmatpush1.bf16.msra.mxu0 %v898
      %1032 = vmatprep.subr.bf16.mxu0 0
      %1033 = vmatpush1.bf16.msra.mxu0 %v897
      %1034 = vmatprep.subr.bf16.mxu0 0
      %1035 = vmatpush2.bf16.msra.mxu0 %v912
      %1036 = vmatprep.subr.bf16.mxu0 0
      %1037 = vmatpush2.bf16.msra.mxu0 %v911
      %1038 = vmatprep.subr.bf16.mxu0 0
      %1039 = vmatpush2.bf16.msra.mxu0 %v910
      %1040 = vmatprep.subr.bf16.mxu0 0
      %1041 = vmatpush2.bf16.msra.mxu0 %v909
      %1042 = vmatprep.subr.bf16.mxu0 0
      %1043 = vmatpush2.bf16.msra.mxu0 %v908
      %1044 = vmatprep.subr.bf16.mxu0 0
      %1045 = vmatpush2.bf16.msra.mxu0 %v907
      %1046 = vmatprep.subr.bf16.mxu0 0
      %1047 = vmatpush2.bf16.msra.mxu0 %v906
      %1048 = vmatprep.subr.bf16.mxu0 0
      %1049 = vmatpush2.bf16.msra.mxu0 %v905
      %1050 = vmatprep.mubr.bf16.mxu0 %v610
      %1051 = vmatmul.mubr.bf16.gmra.mxu0 %v609
      %v1052 = vpop.f32.mrf.mxu0
      %v1053 = vadd.f32 %v351, %v1052
      %v1054 = vpop.f32.mrf.mxu0
      %v1055 = vpop.f32.mrf.mxu0
      %v1056 = vadd.f32 %v351, %v1055
      %v1057 = vpop.f32.mrf.mxu0
      %1058 = vmatprep.mubr.bf16.mxu0 %v615
      %1059 = vmatmul.mubr.bf16.gmra.mxu0 %v614
      %v1060 = vpop.f32.mrf.mxu0
      %v1061 = vadd.f32 %v351, %v1060
      %v1062 = vpop.f32.mrf.mxu0
      %v1063 = vpop.f32.mrf.mxu0
      %v1064 = vadd.f32 %v351, %v1063
      %v1065 = vpop.f32.mrf.mxu0
      %1066 = vmatprep.mubr.bf16.mxu0 %v620
      %1067 = vmatmul.mubr.bf16.gmra.mxu0 %v619
      %v1068 = vpop.f32.mrf.mxu0
      %v1069 = vadd.f32 %v351, %v1068
      %v1070 = vpop.f32.mrf.mxu0
      %v1071 = vpop.f32.mrf.mxu0
      %v1072 = vadd.f32 %v351, %v1071
      %v1073 = vpop.f32.mrf.mxu0
      %1074 = vmatprep.mubr.bf16.mxu0 %v625
      %1075 = vmatmul.mubr.bf16.gmra.mxu0 %v624
      %v1076 = vpop.f32.mrf.mxu0
      %v1077 = vadd.f32 %v351, %v1076
      %v1078 = vpop.f32.mrf.mxu0
      %v1079 = vpop.f32.mrf.mxu0
      %v1080 = vadd.f32 %v351, %v1079
      %v1081 = vpop.f32.mrf.mxu0
      %1082 = vmatprep.mubr.bf16.mxu0 %v630
      %1083 = vmatmul.mubr.bf16.gmra.mxu0 %v629
      %v1084 = vpop.f32.mrf.mxu0
      %v1085 = vadd.f32 %v351, %v1084
      %v1086 = vpop.f32.mrf.mxu0
      %v1087 = vpop.f32.mrf.mxu0
      %v1088 = vadd.f32 %v351, %v1087
      %v1089 = vpop.f32.mrf.mxu0
      %1090 = vmatprep.mubr.bf16.mxu0 %v635
      %1091 = vmatmul.mubr.bf16.gmra.mxu0 %v634
      %v1092 = vpop.f32.mrf.mxu0
      %v1093 = vadd.f32 %v351, %v1092
      %v1094 = vpop.f32.mrf.mxu0
      %v1095 = vpop.f32.mrf.mxu0
      %v1096 = vadd.f32 %v351, %v1095
      %v1097 = vpop.f32.mrf.mxu0
      %1098 = vmatprep.mubr.bf16.mxu0 %v640
      %1099 = vmatmul.mubr.bf16.gmra.mxu0 %v639
      %v1100 = vpop.f32.mrf.mxu0
      %v1101 = vadd.f32 %v351, %v1100
      %v1102 = vpop.f32.mrf.mxu0
      %v1103 = vpop.f32.mrf.mxu0
      %v1104 = vadd.f32 %v351, %v1103
      %v1105 = vpop.f32.mrf.mxu0
      %1106 = vmatprep.mubr.bf16.mxu0 %v645
      %1107 = vmatmul.mubr.bf16.gmra.mxu0 %v644
      %v1108 = vpop.f32.mrf.mxu0
      %v1109 = vadd.f32 %v351, %v1108
      %v1110 = vpop.f32.mrf.mxu0
      %v1111 = vpop.f32.mrf.mxu0
      %v1112 = vadd.f32 %v351, %v1111
      %v1113 = vpop.f32.mrf.mxu0
      %1114 = vmatprep.mubr.bf16.mxu0 %v650
      %1115 = vmatmul.mubr.bf16.gmra.mxu0 %v649
      %v1116 = vpop.f32.mrf.mxu0
      %v1117 = vadd.f32 %v351, %v1116
      %v1118 = vpop.f32.mrf.mxu0
      %v1119 = vpop.f32.mrf.mxu0
      %v1120 = vadd.f32 %v351, %v1119
      %v1121 = vpop.f32.mrf.mxu0
      %1122 = vmatprep.mubr.bf16.mxu0 %v655
      %1123 = vmatmul.mubr.bf16.gmra.mxu0 %v654
      %v1124 = vpop.f32.mrf.mxu0
      %v1125 = vadd.f32 %v351, %v1124
      %v1126 = vpop.f32.mrf.mxu0
      %v1127 = vpop.f32.mrf.mxu0
      %v1128 = vadd.f32 %v351, %v1127
      %v1129 = vpop.f32.mrf.mxu0
      %1130 = vmatprep.mubr.bf16.mxu0 %v660
      %1131 = vmatmul.mubr.bf16.gmra.mxu0 %v659
      %v1132 = vpop.f32.mrf.mxu0
      %v1133 = vadd.f32 %v351, %v1132
      %v1134 = vpop.f32.mrf.mxu0
      %v1135 = vpop.f32.mrf.mxu0
      %v1136 = vadd.f32 %v351, %v1135
      %v1137 = vpop.f32.mrf.mxu0
      %1138 = vmatprep.mubr.bf16.mxu0 %v665
      %1139 = vmatmul.mubr.bf16.gmra.mxu0 %v664
      %v1140 = vpop.f32.mrf.mxu0
      %v1141 = vadd.f32 %v351, %v1140
      %v1142 = vpop.f32.mrf.mxu0
      %v1143 = vpop.f32.mrf.mxu0
      %v1144 = vadd.f32 %v351, %v1143
      %v1145 = vpop.f32.mrf.mxu0
      %1146 = vmatprep.mubr.bf16.mxu0 %v670
      %1147 = vmatmul.mubr.bf16.gmra.mxu0 %v669
      %v1148 = vpop.f32.mrf.mxu0
      %v1149 = vadd.f32 %v351, %v1148
      %v1150 = vpop.f32.mrf.mxu0
      %v1151 = vpop.f32.mrf.mxu0
      %v1152 = vadd.f32 %v351, %v1151
      %v1153 = vpop.f32.mrf.mxu0
      %1154 = vmatprep.mubr.bf16.mxu0 %v675
      %1155 = vmatmul.mubr.bf16.gmra.mxu0 %v674
      %v1156 = vpop.f32.mrf.mxu0
      %v1157 = vadd.f32 %v351, %v1156
      %v1158 = vpop.f32.mrf.mxu0
      %v1159 = vpop.f32.mrf.mxu0
      %v1160 = vadd.f32 %v351, %v1159
      %v1161 = vpop.f32.mrf.mxu0
      %1162 = vmatprep.mubr.bf16.mxu0 %v680
      %1163 = vmatmul.mubr.bf16.gmra.mxu0 %v679
      %v1164 = vpop.f32.mrf.mxu0
      %v1165 = vadd.f32 %v351, %v1164
      %v1166 = vpop.f32.mrf.mxu0
      %v1167 = vpop.f32.mrf.mxu0
      %v1168 = vadd.f32 %v351, %v1167
      %v1169 = vpop.f32.mrf.mxu0
      %1170 = vmatprep.mubr.bf16.mxu0 %v685
      %1171 = vmatmul.mubr.bf16.gmra.mxu0 %v684
      %v1172 = vpop.f32.mrf.mxu0
      %v1173 = vadd.f32 %v351, %v1172
      %v1174 = vpop.f32.mrf.mxu0
      %v1175 = vpop.f32.mrf.mxu0
      %v1176 = vadd.f32 %v351, %v1175
      %v1177 = vpop.f32.mrf.mxu0
      %1178 = vdwg.mxu0
      %1179 = vmatprep.subr.bf16.mxu0 0
      %1180 = vmatpush1.bf16.msra.mxu0 %v920
      %1181 = vmatprep.subr.bf16.mxu0 0
      %1182 = vmatpush1.bf16.msra.mxu0 %v919
      %1183 = vmatprep.subr.bf16.mxu0 0
      %1184 = vmatpush1.bf16.msra.mxu0 %v918
      %1185 = vmatprep.subr.bf16.mxu0 0
      %1186 = vmatpush1.bf16.msra.mxu0 %v917
      %1187 = vmatprep.subr.bf16.mxu0 0
      %1188 = vmatpush1.bf16.msra.mxu0 %v916
      %1189 = vmatprep.subr.bf16.mxu0 0
      %1190 = vmatpush1.bf16.msra.mxu0 %v915
      %1191 = vmatprep.subr.bf16.mxu0 0
      %1192 = vmatpush1.bf16.msra.mxu0 %v914
      %1193 = vmatprep.subr.bf16.mxu0 0
      %1194 = vmatpush1.bf16.msra.mxu0 %v913
      %1195 = vmatprep.subr.bf16.mxu0 0
      %1196 = vmatpush2.bf16.msra.mxu0 %v928
      %1197 = vmatprep.subr.bf16.mxu0 0
      %1198 = vmatpush2.bf16.msra.mxu0 %v927
      %1199 = vmatprep.subr.bf16.mxu0 0
      %1200 = vmatpush2.bf16.msra.mxu0 %v926
      %1201 = vmatprep.subr.bf16.mxu0 0
      %1202 = vmatpush2.bf16.msra.mxu0 %v925
      %1203 = vmatprep.subr.bf16.mxu0 0
      %1204 = vmatpush2.bf16.msra.mxu0 %v924
      %1205 = vmatprep.subr.bf16.mxu0 0
      %1206 = vmatpush2.bf16.msra.mxu0 %v923
      %1207 = vmatprep.subr.bf16.mxu0 0
      %1208 = vmatpush2.bf16.msra.mxu0 %v922
      %1209 = vmatprep.subr.bf16.mxu0 0
      %1210 = vmatpush2.bf16.msra.mxu0 %v921
      %1211 = vmatprep.mubr.bf16.mxu0 %v612
      %1212 = vmatmul.mubr.bf16.gmra.mxu0 %v611
      %v1213 = vpop.f32.mrf.mxu0
      %v1214 = vadd.f32 %v1053, %v1213
      %v1215 = vpop.f32.mrf.mxu0
      %v1216 = vpop.f32.mrf.mxu0
      %v1217 = vadd.f32 %v1056, %v1216
      %v1218 = vpop.f32.mrf.mxu0
      %1219 = vmatprep.mubr.bf16.mxu0 %v617
      %1220 = vmatmul.mubr.bf16.gmra.mxu0 %v616
      %v1221 = vpop.f32.mrf.mxu0
      %v1222 = vadd.f32 %v1061, %v1221
      %v1223 = vpop.f32.mrf.mxu0
      %v1224 = vpop.f32.mrf.mxu0
      %v1225 = vadd.f32 %v1064, %v1224
      %v1226 = vpop.f32.mrf.mxu0
      %1227 = vmatprep.mubr.bf16.mxu0 %v622
      %1228 = vmatmul.mubr.bf16.gmra.mxu0 %v621
      %v1229 = vpop.f32.mrf.mxu0
      %v1230 = vadd.f32 %v1069, %v1229
      %v1231 = vpop.f32.mrf.mxu0
      %v1232 = vpop.f32.mrf.mxu0
      %v1233 = vadd.f32 %v1072, %v1232
      %v1234 = vpop.f32.mrf.mxu0
      %1235 = vmatprep.mubr.bf16.mxu0 %v627
      %1236 = vmatmul.mubr.bf16.gmra.mxu0 %v626
      %v1237 = vpop.f32.mrf.mxu0
      %v1238 = vadd.f32 %v1077, %v1237
      %v1239 = vpop.f32.mrf.mxu0
      %v1240 = vpop.f32.mrf.mxu0
      %v1241 = vadd.f32 %v1080, %v1240
      %v1242 = vpop.f32.mrf.mxu0
      %1243 = vmatprep.mubr.bf16.mxu0 %v632
      %1244 = vmatmul.mubr.bf16.gmra.mxu0 %v631
      %v1245 = vpop.f32.mrf.mxu0
      %v1246 = vadd.f32 %v1085, %v1245
      %v1247 = vpop.f32.mrf.mxu0
      %v1248 = vpop.f32.mrf.mxu0
      %v1249 = vadd.f32 %v1088, %v1248
      %v1250 = vpop.f32.mrf.mxu0
      %1251 = vmatprep.mubr.bf16.mxu0 %v637
      %1252 = vmatmul.mubr.bf16.gmra.mxu0 %v636
      %v1253 = vpop.f32.mrf.mxu0
      %v1254 = vadd.f32 %v1093, %v1253
      %v1255 = vpop.f32.mrf.mxu0
      %v1256 = vpop.f32.mrf.mxu0
      %v1257 = vadd.f32 %v1096, %v1256
      %v1258 = vpop.f32.mrf.mxu0
      %1259 = vmatprep.mubr.bf16.mxu0 %v642
      %1260 = vmatmul.mubr.bf16.gmra.mxu0 %v641
      %v1261 = vpop.f32.mrf.mxu0
      %v1262 = vadd.f32 %v1101, %v1261
      %v1263 = vpop.f32.mrf.mxu0
      %v1264 = vpop.f32.mrf.mxu0
      %v1265 = vadd.f32 %v1104, %v1264
      %v1266 = vpop.f32.mrf.mxu0
      %1267 = vmatprep.mubr.bf16.mxu0 %v647
      %1268 = vmatmul.mubr.bf16.gmra.mxu0 %v646
      %v1269 = vpop.f32.mrf.mxu0
      %v1270 = vadd.f32 %v1109, %v1269
      %v1271 = vpop.f32.mrf.mxu0
      %v1272 = vpop.f32.mrf.mxu0
      %v1273 = vadd.f32 %v1112, %v1272
      %v1274 = vpop.f32.mrf.mxu0
      %1275 = vmatprep.mubr.bf16.mxu0 %v652
      %1276 = vmatmul.mubr.bf16.gmra.mxu0 %v651
      %v1277 = vpop.f32.mrf.mxu0
      %v1278 = vadd.f32 %v1117, %v1277
      %v1279 = vpop.f32.mrf.mxu0
      %v1280 = vpop.f32.mrf.mxu0
      %v1281 = vadd.f32 %v1120, %v1280
      %v1282 = vpop.f32.mrf.mxu0
      %1283 = vmatprep.mubr.bf16.mxu0 %v657
      %1284 = vmatmul.mubr.bf16.gmra.mxu0 %v656
      %v1285 = vpop.f32.mrf.mxu0
      %v1286 = vadd.f32 %v1125, %v1285
      %v1287 = vpop.f32.mrf.mxu0
      %v1288 = vpop.f32.mrf.mxu0
      %v1289 = vadd.f32 %v1128, %v1288
      %v1290 = vpop.f32.mrf.mxu0
      %1291 = vmatprep.mubr.bf16.mxu0 %v662
      %1292 = vmatmul.mubr.bf16.gmra.mxu0 %v661
      %v1293 = vpop.f32.mrf.mxu0
      %v1294 = vadd.f32 %v1133, %v1293
      %v1295 = vpop.f32.mrf.mxu0
      %v1296 = vpop.f32.mrf.mxu0
      %v1297 = vadd.f32 %v1136, %v1296
      %v1298 = vpop.f32.mrf.mxu0
      %1299 = vmatprep.mubr.bf16.mxu0 %v667
      %1300 = vmatmul.mubr.bf16.gmra.mxu0 %v666
      %v1301 = vpop.f32.mrf.mxu0
      %v1302 = vadd.f32 %v1141, %v1301
      %v1303 = vpop.f32.mrf.mxu0
      %v1304 = vpop.f32.mrf.mxu0
      %v1305 = vadd.f32 %v1144, %v1304
      %v1306 = vpop.f32.mrf.mxu0
      %1307 = vmatprep.mubr.bf16.mxu0 %v672
      %1308 = vmatmul.mubr.bf16.gmra.mxu0 %v671
      %v1309 = vpop.f32.mrf.mxu0
      %v1310 = vadd.f32 %v1149, %v1309
      %v1311 = vpop.f32.mrf.mxu0
      %v1312 = vpop.f32.mrf.mxu0
      %v1313 = vadd.f32 %v1152, %v1312
      %v1314 = vpop.f32.mrf.mxu0
      %1315 = vmatprep.mubr.bf16.mxu0 %v677
      %1316 = vmatmul.mubr.bf16.gmra.mxu0 %v676
      %v1317 = vpop.f32.mrf.mxu0
      %v1318 = vadd.f32 %v1157, %v1317
      %v1319 = vpop.f32.mrf.mxu0
      %v1320 = vpop.f32.mrf.mxu0
      %v1321 = vadd.f32 %v1160, %v1320
      %v1322 = vpop.f32.mrf.mxu0
      %1323 = vmatprep.mubr.bf16.mxu0 %v682
      %1324 = vmatmul.mubr.bf16.gmra.mxu0 %v681
      %v1325 = vpop.f32.mrf.mxu0
      %v1326 = vadd.f32 %v1165, %v1325
      %v1327 = vpop.f32.mrf.mxu0
      %v1328 = vpop.f32.mrf.mxu0
      %v1329 = vadd.f32 %v1168, %v1328
      %v1330 = vpop.f32.mrf.mxu0
      %1331 = vmatprep.mubr.bf16.mxu0 %v687
      %1332 = vmatmul.mubr.bf16.gmra.mxu0 %v686
      %v1333 = vpop.f32.mrf.mxu0
      %v1334 = vadd.f32 %v1173, %v1333
      %v1335 = vpop.f32.mrf.mxu0
      %v1336 = vpop.f32.mrf.mxu0
      %v1337 = vadd.f32 %v1176, %v1336
      %v1338 = vpop.f32.mrf.mxu0
      %1339 = vdwg.mxu0
      %1340 = vmatprep.subr.bf16.mxu0 0
      %1341 = vmatpush1.bf16.msra.mxu0 0
      %1342 = vmatprep.subr.bf16.mxu0 0
      %1343 = vmatpush1.bf16.msra.mxu0 0
      %1344 = vmatprep.subr.bf16.mxu0 0
      %1345 = vmatpush1.bf16.msra.mxu0 0
      %1346 = vmatprep.subr.bf16.mxu0 0
      %1347 = vmatpush1.bf16.msra.mxu0 0
      %1348 = vmatprep.subr.bf16.mxu0 0
      %1349 = vmatpush1.bf16.msra.mxu0 %v932
      %1350 = vmatprep.subr.bf16.mxu0 0
      %1351 = vmatpush1.bf16.msra.mxu0 %v931
      %1352 = vmatprep.subr.bf16.mxu0 0
      %1353 = vmatpush1.bf16.msra.mxu0 %v930
      %1354 = vmatprep.subr.bf16.mxu0 0
      %1355 = vmatpush1.bf16.msra.mxu0 %v929
      %1356 = vmatprep.subr.bf16.mxu0 0
      %1357 = vmatpush2.bf16.msra.mxu0 0
      %1358 = vmatprep.subr.bf16.mxu0 0
      %1359 = vmatpush2.bf16.msra.mxu0 0
      %1360 = vmatprep.subr.bf16.mxu0 0
      %1361 = vmatpush2.bf16.msra.mxu0 0
      %1362 = vmatprep.subr.bf16.mxu0 0
      %1363 = vmatpush2.bf16.msra.mxu0 0
      %1364 = vmatprep.subr.bf16.mxu0 0
      %1365 = vmatpush2.bf16.msra.mxu0 0
      %1366 = vmatprep.subr.bf16.mxu0 0
      %1367 = vmatpush2.bf16.msra.mxu0 0
      %1368 = vmatprep.subr.bf16.mxu0 0
      %1369 = vmatpush2.bf16.msra.mxu0 0
      %1370 = vmatprep.subr.bf16.mxu0 0
      %1371 = vmatpush2.bf16.msra.mxu0 0
      %1372 = vmatprep.mubr.bf16.mxu0 0
      %1373 = vmatmul.mubr.bf16.gmra.mxu0 %v971
      %v1374 = vpop.f32.mrf.mxu0
      %v1375 = vadd.f32 %v1214, %v1374
      %v1376 = vpop.f32.mrf.mxu0
      %v1377 = vpop.f32.mrf.mxu0
      %v1378 = vadd.f32 %v1217, %v1377
      %v1379 = vpop.f32.mrf.mxu0
      %1380 = vmatprep.mubr.bf16.mxu0 0
      %1381 = vmatmul.mubr.bf16.gmra.mxu0 %v974
      %v1382 = vpop.f32.mrf.mxu0
      %v1383 = vadd.f32 %v1222, %v1382
      %v1384 = vpop.f32.mrf.mxu0
      %v1385 = vpop.f32.mrf.mxu0
      %v1386 = vadd.f32 %v1225, %v1385
      %v1387 = vpop.f32.mrf.mxu0
      %1388 = vmatprep.mubr.bf16.mxu0 0
      %1389 = vmatmul.mubr.bf16.gmra.mxu0 %v977
      %v1390 = vpop.f32.mrf.mxu0
      %v1391 = vadd.f32 %v1230, %v1390
      %v1392 = vpop.f32.mrf.mxu0
      %v1393 = vpop.f32.mrf.mxu0
      %v1394 = vadd.f32 %v1233, %v1393
      %v1395 = vpop.f32.mrf.mxu0
      %1396 = vmatprep.mubr.bf16.mxu0 0
      %1397 = vmatmul.mubr.bf16.gmra.mxu0 %v980
      %v1398 = vpop.f32.mrf.mxu0
      %v1399 = vadd.f32 %v1238, %v1398
      %v1400 = vpop.f32.mrf.mxu0
      %v1401 = vpop.f32.mrf.mxu0
      %v1402 = vadd.f32 %v1241, %v1401
      %v1403 = vpop.f32.mrf.mxu0
      %1404 = vmatprep.mubr.bf16.mxu0 0
      %1405 = vmatmul.mubr.bf16.gmra.mxu0 %v983
      %v1406 = vpop.f32.mrf.mxu0
      %v1407 = vadd.f32 %v1246, %v1406
      %v1408 = vpop.f32.mrf.mxu0
      %v1409 = vpop.f32.mrf.mxu0
      %v1410 = vadd.f32 %v1249, %v1409
      %v1411 = vpop.f32.mrf.mxu0
      %1412 = vmatprep.mubr.bf16.mxu0 0
      %1413 = vmatmul.mubr.bf16.gmra.mxu0 %v986
      %v1414 = vpop.f32.mrf.mxu0
      %v1415 = vadd.f32 %v1254, %v1414
      %v1416 = vpop.f32.mrf.mxu0
      %v1417 = vpop.f32.mrf.mxu0
      %v1418 = vadd.f32 %v1257, %v1417
      %v1419 = vpop.f32.mrf.mxu0
      %1420 = vmatprep.mubr.bf16.mxu0 0
      %1421 = vmatmul.mubr.bf16.gmra.mxu0 %v989
      %v1422 = vpop.f32.mrf.mxu0
      %v1423 = vadd.f32 %v1262, %v1422
      %v1424 = vpop.f32.mrf.mxu0
      %v1425 = vpop.f32.mrf.mxu0
      %v1426 = vadd.f32 %v1265, %v1425
      %v1427 = vpop.f32.mrf.mxu0
      %1428 = vmatprep.mubr.bf16.mxu0 0
      %1429 = vmatmul.mubr.bf16.gmra.mxu0 %v992
      %v1430 = vpop.f32.mrf.mxu0
      %v1431 = vadd.f32 %v1270, %v1430
      %v1432 = vpop.f32.mrf.mxu0
      %v1433 = vpop.f32.mrf.mxu0
      %v1434 = vadd.f32 %v1273, %v1433
      %v1435 = vpop.f32.mrf.mxu0
      %1436 = vmatprep.mubr.bf16.mxu0 0
      %1437 = vmatmul.mubr.bf16.gmra.mxu0 %v995
      %v1438 = vpop.f32.mrf.mxu0
      %v1439 = vadd.f32 %v1278, %v1438
      %v1440 = vpop.f32.mrf.mxu0
      %v1441 = vpop.f32.mrf.mxu0
      %v1442 = vadd.f32 %v1281, %v1441
      %v1443 = vpop.f32.mrf.mxu0
      %1444 = vmatprep.mubr.bf16.mxu0 0
      %1445 = vmatmul.mubr.bf16.gmra.mxu0 %v998
      %v1446 = vpop.f32.mrf.mxu0
      %v1447 = vadd.f32 %v1286, %v1446
      %v1448 = vpop.f32.mrf.mxu0
      %v1449 = vpop.f32.mrf.mxu0
      %v1450 = vadd.f32 %v1289, %v1449
      %v1451 = vpop.f32.mrf.mxu0
      %1452 = vmatprep.mubr.bf16.mxu0 0
      %1453 = vmatmul.mubr.bf16.gmra.mxu0 %v1001
      %v1454 = vpop.f32.mrf.mxu0
      %v1455 = vadd.f32 %v1294, %v1454
      %v1456 = vpop.f32.mrf.mxu0
      %v1457 = vpop.f32.mrf.mxu0
      %v1458 = vadd.f32 %v1297, %v1457
      %v1459 = vpop.f32.mrf.mxu0
      %1460 = vmatprep.mubr.bf16.mxu0 0
      %1461 = vmatmul.mubr.bf16.gmra.mxu0 %v1004
      %v1462 = vpop.f32.mrf.mxu0
      %v1463 = vadd.f32 %v1302, %v1462
      %v1464 = vpop.f32.mrf.mxu0
      %v1465 = vpop.f32.mrf.mxu0
      %v1466 = vadd.f32 %v1305, %v1465
      %v1467 = vpop.f32.mrf.mxu0
      %1468 = vmatprep.mubr.bf16.mxu0 0
      %1469 = vmatmul.mubr.bf16.gmra.mxu0 %v1007
      %v1470 = vpop.f32.mrf.mxu0
      %v1471 = vadd.f32 %v1310, %v1470
      %v1472 = vpop.f32.mrf.mxu0
      %v1473 = vpop.f32.mrf.mxu0
      %v1474 = vadd.f32 %v1313, %v1473
      %v1475 = vpop.f32.mrf.mxu0
      %1476 = vmatprep.mubr.bf16.mxu0 0
      %1477 = vmatmul.mubr.bf16.gmra.mxu0 %v1010
      %v1478 = vpop.f32.mrf.mxu0
      %v1479 = vadd.f32 %v1318, %v1478
      %v1480 = vpop.f32.mrf.mxu0
      %v1481 = vpop.f32.mrf.mxu0
      %v1482 = vadd.f32 %v1321, %v1481
      %v1483 = vpop.f32.mrf.mxu0
      %1484 = vmatprep.mubr.bf16.mxu0 0
      %1485 = vmatmul.mubr.bf16.gmra.mxu0 %v1013
      %v1486 = vpop.f32.mrf.mxu0
      %v1487 = vadd.f32 %v1326, %v1486
      %v1488 = vpop.f32.mrf.mxu0
      %v1489 = vpop.f32.mrf.mxu0
      %v1490 = vadd.f32 %v1329, %v1489
      %v1491 = vpop.f32.mrf.mxu0
      %1492 = vmatprep.mubr.bf16.mxu0 0
      %1493 = vmatmul.mubr.bf16.gmra.mxu0 %v1016
      %v1494 = vpop.f32.mrf.mxu0
      %v1495 = vadd.f32 %v1334, %v1494
      %v1496 = vpop.f32.mrf.mxu0
      %v1497 = vpop.f32.mrf.mxu0
      %v1498 = vadd.f32 %v1337, %v1497
      %v1499 = vpop.f32.mrf.mxu0
      %1500 = vdwg.mxu0
      %1501 = vst.msk [vmem:[%s175] sm:$0xff] %vm969, %v1375
      %1502 = vst.msk [vmem:[%s175 + $0x8] sm:$0xff] %vm969, %v1378
      %1503 = vst.msk [vmem:[%s175 + $0x10] sm:$0xff] %vm969, %v1383
      %1504 = vst.msk [vmem:[%s175 + $0x18] sm:$0xff] %vm969, %v1386
      %1505 = vst.msk [vmem:[%s175 + $0x20] sm:$0xff] %vm969, %v1391
      %1506 = vst.msk [vmem:[%s175 + $0x28] sm:$0xff] %vm969, %v1394
      %1507 = vst.msk [vmem:[%s175 + $0x30] sm:$0xff] %vm969, %v1399
      %1508 = vst.msk [vmem:[%s175 + $0x38] sm:$0xff] %vm969, %v1402
      %1509 = vst.msk [vmem:[%s175 + $0x40] sm:$0xff] %vm969, %v1407
      %1510 = vst.msk [vmem:[%s175 + $0x48] sm:$0xff] %vm969, %v1410
      %1511 = vst.msk [vmem:[%s175 + $0x50] sm:$0xff] %vm969, %v1415
      %1512 = vst.msk [vmem:[%s175 + $0x58] sm:$0xff] %vm969, %v1418
      %1513 = vst.msk [vmem:[%s175 + $0x60] sm:$0xff] %vm969, %v1423
      %1514 = vst.msk [vmem:[%s175 + $0x68] sm:$0xff] %vm969, %v1426
      %1515 = vst.msk [vmem:[%s175 + $0x70] sm:$0xff] %vm969, %v1431
      %1516 = vst.msk [vmem:[%s175 + $0x78] sm:$0xff] %vm969, %v1434
      %1517 = vst.msk [vmem:[%s175 + $0x80] sm:$0xff] %vm969, %v1439
      %1518 = vst.msk [vmem:[%s175 + $0x88] sm:$0xff] %vm969, %v1442
      %1519 = vst.msk [vmem:[%s175 + $0x90] sm:$0xff] %vm969, %v1447
      %1520 = vst.msk [vmem:[%s175 + $0x98] sm:$0xff] %vm969, %v1450
      %1521 = vst.msk [vmem:[%s175 + $0xa0] sm:$0xff] %vm969, %v1455
      %1522 = vst.msk [vmem:[%s175 + $0xa8] sm:$0xff] %vm969, %v1458
      %1523 = vst.msk [vmem:[%s175 + $0xb0] sm:$0xff] %vm969, %v1463
      %1524 = vst.msk [vmem:[%s175 + $0xb8] sm:$0xff] %vm969, %v1466
      %1525 = vst.msk [vmem:[%s175 + $0xc0] sm:$0xff] %vm969, %v1471
      %1526 = vst.msk [vmem:[%s175 + $0xc8] sm:$0xff] %vm969, %v1474
      %1527 = vst.msk [vmem:[%s175 + $0xd0] sm:$0xff] %vm969, %v1479
      %1528 = vst.msk [vmem:[%s175 + $0xd8] sm:$0xff] %vm969, %v1482
      %1529 = vst.msk [vmem:[%s175 + $0xe0] sm:$0xff] %vm969, %v1487
      %1530 = vst.msk [vmem:[%s175 + $0xe8] sm:$0xff] %vm969, %v1490
      %1531 = vst.msk [vmem:[%s175 + $0xf0] sm:$0xff] %vm969, %v1495
      %1532 = vst.msk [vmem:[%s175 + $0xf8] sm:$0xff] %vm969, %v1498
      %s1533 = smul.u32 32, %s14
      %p1534 = scmp.lt.s32.totalorder %s1533, 63
      %s1535 = scalar_select %p1534, %s1533, 63
      %s1536 = smul.addr %s1535, 8
      %s1537 = scalar_lea.vmem %s3, %s1536
      // Predicated region
      $region33: #{_lambda_.7} parent=31 // pred_check
        %p1538 = pneg %p100
      $region34: #{_lambda_.7} parent=31 // pred_check_branch
        %1540 = sbr.rel (%p1538) target = $region36
      $region35: #{_lambda_.7} parent=31 // pred_region
        %s1541 = smul.u32 32, %s14
      $region36: #{_lambda_.7} parent=31 // pred_fallthru
        _
    $region32: #{_lambda_.7} parent=5 // pred_fallthru
      _
    %p1542 = scmp.le.s32.totalorder 2, %s9
    // Predicated region
    $region37: #{_lambda_.7} parent=5 // pred_check
      %p1543 = pneg %p1542
    $region38: #{_lambda_.7} parent=5 // pred_check_branch
      %1545 = sbr.rel (%p1543) target = $region40
    $region39: #{_lambda_.7} parent=5 // pred_region
      %s1546 = ssub.s32 %s9, 2
      // Predicated region
      $region41: #{_lambda_.7} parent=39 // pred_check
        %p1547 = pneg %p106
      $region42: #{_lambda_.7} parent=39 // pred_check_branch
        %1549 = sbr.rel (%p1547) target = $region44
      $region43: #{_lambda_.7} parent=39 // pred_region
        %s1550 = smul.u32 32, %s15
        %p1551 = scmp.lt.s32.totalorder %s1550, 63
        %s1552 = scalar_select %p1551, %s1550, 63
        %s1553 = smul.addr %s1552, 8
        %s1554 = scalar_lea.vmem %s3, %s1553
      $region44: #{_lambda_.7} parent=39 // pred_fallthru
        _
    $region40: #{_lambda_.7} parent=5 // pred_fallthru
      _
  $region6: #{_lambda_.7} parent=0 // loop_footer
    %s13 = sadd.s32 1, %s9
  $region7: #{_lambda_.7} parent=0 // loop_footer_branch
    %8 = sbr.rel target = $region3
  $region8: #{_lambda_.7} parent=0 // loop_exit
    _

// kernel: _lambda_.8
$region0: #{_lambda_.8}
  #allocation0 [shape = 'u32[]', space=smem, size = 0x4, offset = 0x4, fixed_abs, tag = 'smem constant byte address 0x4 - core index']
  #allocation1 [shape = 'u32[144,128]{1,0:T(1,128)}', space=vmem, size = 0x12000, scoped, tag = 'internal scratch']
  %s0 = inlined_call_operand.vmem [shape: bf16[128,576], index: 0, kind: input, shape index: {}]
  %s1 = inlined_call_operand.vmem [shape: bf16[576,128], index: 1, kind: input, shape index: {}]
  %s2 = inlined_call_operand.vmem [shape: f32[1,128], index: 2, kind: input, shape index: {}]
  %s3 = inlined_call_operand.vmem [shape: f32[128,128], index: 3, kind: output, shape index: {}]
  %s4 = sld [smem:[#allocation0]]
  $region45: #{_lambda_.8} parent=0
    _
  %s6 = ssub.s32 1, %s4
  %s7 = scalar_select 0, %s6, %s4
  loop: start=0, step=1, limit=4
  $region2: #{_lambda_.8} parent=0 // loop_pre_header
    _
  $region3: #{_lambda_.8} parent=0 // loop_header
    %s9 = sphi 0, %s13
    %p10 = scmp.ge.s32.totalorder %s9, 4
    %s19 = sphi 0, %s21
    %s22 = sphi 0, %s19
    %s23 = sphi 0, %s22
    %s39 = sphi 0, %s23
    %s43 = sphi 0, %s43
    %s45 = sphi 0, %s43
    %s46 = sphi 0, %s45
    %s60 = sphi 0, %s46
    %s64 = sphi 0, %s64
    %s66 = sphi 0, %s64
    %s67 = sphi 0, %s66
    %s81 = sphi 0, %s67
    %s87 = sphi 0, %s89
    %s90 = sphi 0, %s87
    %s91 = sphi 0, %s90
    %s107 = sphi 0, %s91
  $region4: #{_lambda_.8} parent=0 // loop_header_branch
    %12 = sbr.rel (%p10) target = $region8
  $region5: #{_lambda_.8} parent=0 // loop_body
    %s14 = ssub.s32 %s9, 1
    %s15 = ssub.s32 %s9, 2
    %s16 = sadd.s32 %s9, 1
    %s17 = ssub.s32 %s9, %s16
    %p18 = scmp.eq.s32.totalorder %s17, 0
    %s20 = sadd.s32 %s19, 1
    %s21 = scalar_select %p18, %s19, %s20
    %p24 = pneg %p18
    %p25 = scmp.eq.s32.totalorder %s9, 1
    %p26 = por %p24, %p25
    %p27 = scmp.ne.s32.totalorder %s19, %s22
    %p28 = scmp.eq.s32.totalorder %s9, 0
    %p29 = por %p27, %p28
    %p30 = scmp.ne.s32.totalorder %s19, %s22
    %p31 = scmp.eq.s32.totalorder %s14, 1
    %p32 = por %p30, %p31
    %p33 = scmp.ne.s32.totalorder %s22, %s23
    %p34 = scmp.eq.s32.totalorder %s14, 0
    %p35 = por %p33, %p34
    %p36 = scmp.ne.s32.totalorder %s22, %s23
    %p37 = scmp.eq.s32.totalorder %s15, 1
    %p38 = por %p36, %p37
    %p40 = scmp.ne.s32.totalorder %s23, %s39
    %p41 = scmp.eq.s32.totalorder %s15, 0
    %p42 = por %p40, %p41
    %s44 = sadd.s32 %s43, 1
    %p47 = scmp.eq.s32.totalorder %s9, 1
    %p48 = scmp.ne.s32.totalorder %s43, %s45
    %p49 = scmp.eq.s32.totalorder %s9, 0
    %p50 = por %p48, %p49
    %p51 = scmp.ne.s32.totalorder %s43, %s45
    %p52 = scmp.eq.s32.totalorder %s14, 1
    %p53 = por %p51, %p52
    %p54 = scmp.ne.s32.totalorder %s45, %s46
    %p55 = scmp.eq.s32.totalorder %s14, 0
    %p56 = por %p54, %p55
    %p57 = scmp.ne.s32.totalorder %s45, %s46
    %p58 = scmp.eq.s32.totalorder %s15, 1
    %p59 = por %p57, %p58
    %p61 = scmp.ne.s32.totalorder %s46, %s60
    %p62 = scmp.eq.s32.totalorder %s15, 0
    %p63 = por %p61, %p62
    %s65 = sadd.s32 %s64, 1
    %p68 = scmp.eq.s32.totalorder %s9, 1
    %p69 = scmp.ne.s32.totalorder %s64, %s66
    %p70 = scmp.eq.s32.totalorder %s9, 0
    %p71 = por %p69, %p70
    %p72 = scmp.ne.s32.totalorder %s64, %s66
    %p73 = scmp.eq.s32.totalorder %s14, 1
    %p74 = por %p72, %p73
    %p75 = scmp.ne.s32.totalorder %s66, %s67
    %p76 = scmp.eq.s32.totalorder %s14, 0
    %p77 = por %p75, %p76
    %p78 = scmp.ne.s32.totalorder %s66, %s67
    %p79 = scmp.eq.s32.totalorder %s15, 1
    %p80 = por %p78, %p79
    %p82 = scmp.ne.s32.totalorder %s67, %s81
    %p83 = scmp.eq.s32.totalorder %s15, 0
    %p84 = por %p82, %p83
    %s85 = ssub.s32 %s9, %s16
    %p86 = scmp.eq.s32.totalorder %s85, 0
    %s88 = sadd.s32 %s87, 1
    %s89 = scalar_select %p86, %s87, %s88
    %p92 = pneg %p86
    %p93 = scmp.eq.s32.totalorder %s9, 1
    %p94 = por %p92, %p93
    %p95 = scmp.ne.s32.totalorder %s87, %s90
    %p96 = scmp.eq.s32.totalorder %s9, 0
    %p97 = por %p95, %p96
    %p98 = scmp.ne.s32.totalorder %s87, %s90
    %p99 = scmp.eq.s32.totalorder %s14, 1
    %p100 = por %p98, %p99
    %p101 = scmp.ne.s32.totalorder %s90, %s91
    %p102 = scmp.eq.s32.totalorder %s14, 0
    %p103 = por %p101, %p102
    %p104 = scmp.ne.s32.totalorder %s90, %s91
    %p105 = scmp.eq.s32.totalorder %s15, 1
    %p106 = por %p104, %p105
    %p108 = scmp.ne.s32.totalorder %s91, %s107
    %p109 = scmp.eq.s32.totalorder %s15, 0
    %p110 = por %p108, %p109
    %p111 = scmp.le.s32.totalorder 1, %s9
    %p112 = scmp.lt.s32.totalorder %s9, 3
    %p113 = pnand %p111, %p112
    %p114 = pneg %p113
    // Predicated region
    $region9: #{_lambda_.8} parent=5 // pred_check
      _
    $region10: #{_lambda_.8} parent=5 // pred_check_branch
      %116 = sbr.rel (%p113) target = $region12
    $region11: #{_lambda_.8} parent=5 // pred_region
      %s117 = ssub.s32 %s9, 1
      // Predicated region
      $region13: #{_lambda_.8} parent=11 // pred_check
        %p118 = pneg %p56
      $region14: #{_lambda_.8} parent=11 // pred_check_branch
        %120 = sbr.rel (%p118) target = $region16
      $region15: #{_lambda_.8} parent=11 // pred_region
        _
      $region16: #{_lambda_.8} parent=11 // pred_fallthru
        _
      // Predicated region
      $region17: #{_lambda_.8} parent=11 // pred_check
        %p121 = pneg %p77
      $region18: #{_lambda_.8} parent=11 // pred_check_branch
        %123 = sbr.rel (%p121) target = $region20
      $region19: #{_lambda_.8} parent=11 // pred_region
        _
      $region20: #{_lambda_.8} parent=11 // pred_fallthru
        _
    $region12: #{_lambda_.8} parent=5 // pred_fallthru
      _
    %p124 = scmp.lt.s32.totalorder %s9, 2
    // Predicated region
    $region21: #{_lambda_.8} parent=5 // pred_check
      %p125 = pneg %p124
    $region22: #{_lambda_.8} parent=5 // pred_check_branch
      %127 = sbr.rel (%p125) target = $region24
    $region23: #{_lambda_.8} parent=5 // pred_region
      // Predicated region
      $region25: #{_lambda_.8} parent=23 // pred_check
        %p128 = pneg %p29
      $region26: #{_lambda_.8} parent=23 // pred_check_branch
        %130 = sbr.rel (%p128) target = $region28
      $region27: #{_lambda_.8} parent=23 // pred_region
        %s131 = smul.u32 8, %s9
        %p132 = scmp.lt.s32.totalorder %s131, 15
        %s133 = scalar_select %p132, %s131, 15
        %s134 = smul.addr %s133, 5
        %s135 = smul.addr %s134, 4
        %s136 = scalar_lea.vmem %s0, %s135
        %s137 = smul.u32 8, %s9
      $region28: #{_lambda_.8} parent=23 // pred_fallthru
        _
    $region24: #{_lambda_.8} parent=5 // pred_fallthru
      _
    %p138 = scmp.le.s32.totalorder 1, %s9
    %p139 = scmp.lt.s32.totalorder %s9, 3
    %p140 = pnand %p138, %p139
    %p141 = pneg %p140
    // Predicated region
    $region29: #{_lambda_.8} parent=5 // pred_check
      _
    $region30: #{_lambda_.8} parent=5 // pred_check_branch
      %143 = sbr.rel (%p140) target = $region32
    $region31: #{_lambda_.8} parent=5 // pred_region
      %s144 = ssub.s32 %s9, 1
      %s145 = smul.u32 8, %s14
      %p146 = scmp.lt.s32.totalorder %s145, 15
      %s147 = scalar_select %p146, %s145, 15
      %s148 = smul.addr %s147, 5
      %s149 = smul.addr %s148, 4
      %s150 = scalar_lea.vmem %s0, %s149
      %p151 = pneg %p35
      %p152 = pneg %p32
      %p153 = pneg %p56
      %p154 = pneg %p53
      %p155 = pneg %p77
      %p156 = pneg %p74
      %p157 = pneg %p103
      %p158 = pneg %p100
      %s159 = smul.u32 8, %s14
      %p160 = scmp.lt.s32.totalorder %s159, 15
      %s161 = scalar_select %p160, %s159, 15
      %s162 = smul.addr %s161, 8
      %s163 = scalar_lea.vmem %s3, %s162
      %s164 = smul.u32 8, %s14
      %p165 = scmp.lt.s32.totalorder %s164, 15
      %s166 = scalar_select %p165, %s164, 15
      %s167 = smul.addr %s166, 5
      %s168 = smul.addr %s167, 4
      %s169 = scalar_lea.vmem %s0, %s168
      %s170 = smul.u32 8, %s14
      %s171 = smul.u32 8, %s14
      %p172 = scmp.lt.s32.totalorder %s171, 15
      %s173 = scalar_select %p172, %s171, 15
      %s174 = smul.addr %s173, 8
      %s175 = scalar_lea.vmem %s3, %s174
      %s176 = smul.u32 8, %s14
      %v178 = vld [vmem:[%s169] sm:$0xff]
      %v179 = vld [vmem:[%s169 + $0x8] sm:$0xff]
      %v180 = vld [vmem:[%s169 + $0x10] sm:$0xf]
      %v181 = vld [vmem:[%s169 + $0x14] sm:$0xff]
      %v182 = vld [vmem:[%s169 + $0x1c] sm:$0xff]
      %v183 = vld [vmem:[%s169 + $0x24] sm:$0xf]
      %v184 = vld [vmem:[%s169 + $0x28] sm:$0xff]
      %v185 = vld [vmem:[%s169 + $0x30] sm:$0xff]
      %v186 = vld [vmem:[%s169 + $0x38] sm:$0xf]
      %v187 = vld [vmem:[%s169 + $0x3c] sm:$0xff]
      %v188 = vld [vmem:[%s169 + $0x44] sm:$0xff]
      %v189 = vld [vmem:[%s169 + $0x4c] sm:$0xf]
      %v190 = vld [vmem:[%s169 + $0x50] sm:$0xff]
      %v191 = vld [vmem:[%s169 + $0x58] sm:$0xff]
      %v192 = vld [vmem:[%s169 + $0x60] sm:$0xf]
      %v193 = vld [vmem:[%s169 + $0x64] sm:$0xff]
      %v194 = vld [vmem:[%s169 + $0x6c] sm:$0xff]
      %v195 = vld [vmem:[%s169 + $0x74] sm:$0xf]
      %v196 = vld [vmem:[%s169 + $0x78] sm:$0xff]
      %v197 = vld [vmem:[%s169 + $0x80] sm:$0xff]
      %v198 = vld [vmem:[%s169 + $0x88] sm:$0xf]
      %v199 = vld [vmem:[%s169 + $0x8c] sm:$0xff]
      %v200 = vld [vmem:[%s169 + $0x94] sm:$0xff]
      %v201 = vld [vmem:[%s169 + $0x9c] sm:$0xf]
      %v202 = vld [vmem:[%s1] sm:$0xf]
      %v203 = vld [vmem:[%s1 + $0x4] sm:$0xf]
      %v204 = vld [vmem:[%s1 + $0x8] sm:$0xf]
      %v205 = vld [vmem:[%s1 + $0xc] sm:$0xf]
      %v206 = vld [vmem:[%s1 + $0x10] sm:$0xf]
      %v207 = vld [vmem:[%s1 + $0x14] sm:$0xf]
      %v208 = vld [vmem:[%s1 + $0x18] sm:$0xf]
      %v209 = vld [vmem:[%s1 + $0x1c] sm:$0xf]
      %v210 = vld [vmem:[%s1 + $0x20] sm:$0xf]
      %v211 = vld [vmem:[%s1 + $0x24] sm:$0xf]
      %v212 = vld [vmem:[%s1 + $0x28] sm:$0xf]
      %v213 = vld [vmem:[%s1 + $0x2c] sm:$0xf]
      %v214 = vld [vmem:[%s1 + $0x30] sm:$0xf]
      %v215 = vld [vmem:[%s1 + $0x34] sm:$0xf]
      %v216 = vld [vmem:[%s1 + $0x38] sm:$0xf]
      %v217 = vld [vmem:[%s1 + $0x3c] sm:$0xf]
      %v218 = vld [vmem:[%s1 + $0x40] sm:$0xf]
      %v219 = vld [vmem:[%s1 + $0x44] sm:$0xf]
      %v220 = vld [vmem:[%s1 + $0x48] sm:$0xf]
      %v221 = vld [vmem:[%s1 + $0x4c] sm:$0xf]
      %v222 = vld [vmem:[%s1 + $0x50] sm:$0xf]
      %v223 = vld [vmem:[%s1 + $0x54] sm:$0xf]
      %v224 = vld [vmem:[%s1 + $0x58] sm:$0xf]
      %v225 = vld [vmem:[%s1 + $0x5c] sm:$0xf]
      %v226 = vld [vmem:[%s1 + $0x60] sm:$0xf]
      %v227 = vld [vmem:[%s1 + $0x64] sm:$0xf]
      %v228 = vld [vmem:[%s1 + $0x68] sm:$0xf]
      %v229 = vld [vmem:[%s1 + $0x6c] sm:$0xf]
      %v230 = vld [vmem:[%s1 + $0x70] sm:$0xf]
      %v231 = vld [vmem:[%s1 + $0x74] sm:$0xf]
      %v232 = vld [vmem:[%s1 + $0x78] sm:$0xf]
      %v233 = vld [vmem:[%s1 + $0x7c] sm:$0xf]
      %v234 = vld [vmem:[%s1 + $0x80] sm:$0xf]
      %v235 = vld [vmem:[%s1 + $0x84] sm:$0xf]
      %v236 = vld [vmem:[%s1 + $0x88] sm:$0xf]
      %v237 = vld [vmem:[%s1 + $0x8c] sm:$0xf]
      %v238 = vld [vmem:[%s1 + $0x90] sm:$0xf]
      %v239 = vld [vmem:[%s1 + $0x94] sm:$0xf]
      %v240 = vld [vmem:[%s1 + $0x98] sm:$0xf]
      %v241 = vld [vmem:[%s1 + $0x9c] sm:$0xf]
      %v242 = vld [vmem:[%s1 + $0xa0] sm:$0xf]
      %v243 = vld [vmem:[%s1 + $0xa4] sm:$0xf]
      %v244 = vld [vmem:[%s1 + $0xa8] sm:$0xf]
      %v245 = vld [vmem:[%s1 + $0xac] sm:$0xf]
      %v246 = vld [vmem:[%s1 + $0xb0] sm:$0xf]
      %v247 = vld [vmem:[%s1 + $0xb4] sm:$0xf]
      %v248 = vld [vmem:[%s1 + $0xb8] sm:$0xf]
      %v249 = vld [vmem:[%s1 + $0xbc] sm:$0xf]
      %v250 = vld [vmem:[%s1 + $0xc0] sm:$0xf]
      %v251 = vld [vmem:[%s1 + $0xc4] sm:$0xf]
      %v252 = vld [vmem:[%s1 + $0xc8] sm:$0xf]
      %v253 = vld [vmem:[%s1 + $0xcc] sm:$0xf]
      %v254 = vld [vmem:[%s1 + $0xd0] sm:$0xf]
      %v255 = vld [vmem:[%s1 + $0xd4] sm:$0xf]
      %v256 = vld [vmem:[%s1 + $0xd8] sm:$0xf]
      %v257 = vld [vmem:[%s1 + $0xdc] sm:$0xf]
      %v258 = vld [vmem:[%s1 + $0xe0] sm:$0xf]
      %v259 = vld [vmem:[%s1 + $0xe4] sm:$0xf]
      %v260 = vld [vmem:[%s1 + $0xe8] sm:$0xf]
      %v261 = vld [vmem:[%s1 + $0xec] sm:$0xf]
      %v262 = vld [vmem:[%s1 + $0xf0] sm:$0xf]
      %v263 = vld [vmem:[%s1 + $0xf4] sm:$0xf]
      %v264 = vld [vmem:[%s1 + $0xf8] sm:$0xf]
      %v265 = vld [vmem:[%s1 + $0xfc] sm:$0xf]
      %v266 = vld [vmem:[%s1 + $0x100] sm:$0xf]
      %v267 = vld [vmem:[%s1 + $0x104] sm:$0xf]
      %v268 = vld [vmem:[%s1 + $0x108] sm:$0xf]
      %v269 = vld [vmem:[%s1 + $0x10c] sm:$0xf]
      %v270 = vld [vmem:[%s1 + $0x110] sm:$0xf]
      %v271 = vld [vmem:[%s1 + $0x114] sm:$0xf]
      %v272 = vld [vmem:[%s1 + $0x118] sm:$0xf]
      %v273 = vld [vmem:[%s1 + $0x11c] sm:$0xf]
      %v274 = vld [vmem:[%s2] sm:$0x1]
      %v276 = vlaneseq
      %v277 = vshrl.u32 %v276, 7
      %v278 = vsub.s32 0, %v277
      %v279 = vrot.slane %v274, %v278
      %v305 = vunpack.c.l.b16 %v178
      %v306 = vunpack.c.h.b16 %v178
      %v307 = vunpack.c.l.b16 %v179
      %v308 = vunpack.c.h.b16 %v179
      %v309 = vunpack.c.l.b16 %v180
      %v310 = vunpack.c.l.b16 %v181
      %v311 = vunpack.c.h.b16 %v181
      %v312 = vunpack.c.l.b16 %v182
      %v313 = vunpack.c.h.b16 %v182
      %v314 = vunpack.c.l.b16 %v183
      %v315 = vunpack.c.l.b16 %v184
      %v316 = vunpack.c.h.b16 %v184
      %v317 = vunpack.c.l.b16 %v185
      %v318 = vunpack.c.h.b16 %v185
      %v319 = vunpack.c.l.b16 %v186
      %v320 = vunpack.c.l.b16 %v187
      %v321 = vunpack.c.h.b16 %v187
      %v322 = vunpack.c.l.b16 %v188
      %v323 = vunpack.c.h.b16 %v188
      %v324 = vunpack.c.l.b16 %v189
      %v325 = vunpack.c.l.b16 %v190
      %v326 = vunpack.c.h.b16 %v190
      %v327 = vunpack.c.l.b16 %v191
      %v328 = vunpack.c.h.b16 %v191
      %v329 = vunpack.c.l.b16 %v192
      %v330 = vunpack.c.l.b16 %v193
      %v331 = vunpack.c.h.b16 %v193
      %v332 = vunpack.c.l.b16 %v194
      %v333 = vunpack.c.h.b16 %v194
      %v334 = vunpack.c.l.b16 %v195
      %v335 = vunpack.c.l.b16 %v196
      %v336 = vunpack.c.h.b16 %v196
      %v337 = vunpack.c.l.b16 %v197
      %v338 = vunpack.c.h.b16 %v197
      %v339 = vunpack.c.l.b16 %v198
      %v340 = vunpack.c.l.b16 %v199
      %v341 = vunpack.c.h.b16 %v199
      %v342 = vunpack.c.l.b16 %v200
      %v343 = vunpack.c.h.b16 %v200
      %v344 = vunpack.c.l.b16 %v201
      %v345 = vpack.c.b16 %v310, %v305
      %v346 = vpack.c.b16 %v311, %v306
      %v347 = vpack.c.b16 %v312, %v307
      %v348 = vpack.c.b16 %v313, %v308
      %v349 = vpack.c.b16 %v314, %v309
      %v350 = vpack.c.b16 %v320, %v315
      %v351 = vpack.c.b16 %v321, %v316
      %v352 = vpack.c.b16 %v322, %v317
      %v353 = vpack.c.b16 %v323, %v318
      %v354 = vpack.c.b16 %v324, %v319
      %v355 = vpack.c.b16 %v330, %v325
      %v356 = vpack.c.b16 %v331, %v326
      %v357 = vpack.c.b16 %v332, %v327
      %v358 = vpack.c.b16 %v333, %v328
      %v359 = vpack.c.b16 %v334, %v329
      %v360 = vpack.c.b16 %v340, %v335
      %v361 = vpack.c.b16 %v341, %v336
      %v362 = vpack.c.b16 %v342, %v337
      %v363 = vpack.c.b16 %v343, %v338
      %v364 = vpack.c.b16 %v344, %v339
      %v453 = vunpack.c.l.b16 %v202
      %v454 = vunpack.c.l.b16 %v203
      %v455 = vunpack.c.l.b16 %v204
      %v456 = vunpack.c.l.b16 %v205
      %v457 = vunpack.c.l.b16 %v206
      %v458 = vunpack.c.l.b16 %v207
      %v459 = vunpack.c.l.b16 %v208
      %v460 = vunpack.c.l.b16 %v209
      %v461 = vunpack.c.l.b16 %v210
      %v462 = vunpack.c.l.b16 %v211
      %v463 = vunpack.c.l.b16 %v212
      %v464 = vunpack.c.l.b16 %v213
      %v465 = vunpack.c.l.b16 %v214
      %v466 = vunpack.c.l.b16 %v215
      %v467 = vunpack.c.l.b16 %v216
      %v468 = vunpack.c.l.b16 %v217
      %v469 = vunpack.c.l.b16 %v218
      %v470 = vunpack.c.l.b16 %v219
      %v471 = vunpack.c.l.b16 %v220
      %v472 = vunpack.c.l.b16 %v221
      %v473 = vunpack.c.l.b16 %v222
      %v474 = vunpack.c.l.b16 %v223
      %v475 = vunpack.c.l.b16 %v224
      %v476 = vunpack.c.l.b16 %v225
      %v477 = vunpack.c.l.b16 %v226
      %v478 = vunpack.c.l.b16 %v227
      %v479 = vunpack.c.l.b16 %v228
      %v480 = vunpack.c.l.b16 %v229
      %v481 = vunpack.c.l.b16 %v230
      %v482 = vunpack.c.l.b16 %v231
      %v483 = vunpack.c.l.b16 %v232
      %v484 = vunpack.c.l.b16 %v233
      %v485 = vunpack.c.l.b16 %v234
      %v486 = vunpack.c.l.b16 %v235
      %v487 = vunpack.c.l.b16 %v236
      %v488 = vunpack.c.l.b16 %v237
      %v489 = vunpack.c.l.b16 %v238
      %v490 = vunpack.c.l.b16 %v239
      %v491 = vunpack.c.l.b16 %v240
      %v492 = vunpack.c.l.b16 %v241
      %v493 = vunpack.c.l.b16 %v242
      %v494 = vunpack.c.l.b16 %v243
      %v495 = vunpack.c.l.b16 %v244
      %v496 = vunpack.c.l.b16 %v245
      %v497 = vunpack.c.l.b16 %v246
      %v498 = vunpack.c.l.b16 %v247
      %v499 = vunpack.c.l.b16 %v248
      %v500 = vunpack.c.l.b16 %v249
      %v501 = vunpack.c.l.b16 %v250
      %v502 = vunpack.c.l.b16 %v251
      %v503 = vunpack.c.l.b16 %v252
      %v504 = vunpack.c.l.b16 %v253
      %v505 = vunpack.c.l.b16 %v254
      %v506 = vunpack.c.l.b16 %v255
      %v507 = vunpack.c.l.b16 %v256
      %v508 = vunpack.c.l.b16 %v257
      %v509 = vunpack.c.l.b16 %v258
      %v510 = vunpack.c.l.b16 %v259
      %v511 = vunpack.c.l.b16 %v260
      %v512 = vunpack.c.l.b16 %v261
      %v513 = vunpack.c.l.b16 %v262
      %v514 = vunpack.c.l.b16 %v263
      %v515 = vunpack.c.l.b16 %v264
      %v516 = vunpack.c.l.b16 %v265
      %v517 = vunpack.c.l.b16 %v266
      %v518 = vunpack.c.l.b16 %v267
      %v519 = vunpack.c.l.b16 %v268
      %v520 = vunpack.c.l.b16 %v269
      %v521 = vunpack.c.l.b16 %v270
      %v522 = vunpack.c.l.b16 %v271
      %v523 = vunpack.c.l.b16 %v272
      %v524 = vunpack.c.l.b16 %v273
      %v525 = vpack.c.b16 %v454, %v453
      %v526 = vpack.c.b16 %v456, %v455
      %v527 = vpack.c.b16 %v458, %v457
      %v528 = vpack.c.b16 %v460, %v459
      %v529 = vpack.c.b16 %v462, %v461
      %v530 = vpack.c.b16 %v464, %v463
      %v531 = vpack.c.b16 %v466, %v465
      %v532 = vpack.c.b16 %v468, %v467
      %v533 = vpack.c.b16 %v470, %v469
      %v534 = vpack.c.b16 %v472, %v471
      %v535 = vpack.c.b16 %v474, %v473
      %v536 = vpack.c.b16 %v476, %v475
      %v537 = vpack.c.b16 %v478, %v477
      %v538 = vpack.c.b16 %v480, %v479
      %v539 = vpack.c.b16 %v482, %v481
      %v540 = vpack.c.b16 %v484, %v483
      %v541 = vpack.c.b16 %v486, %v485
      %v542 = vpack.c.b16 %v488, %v487
      %v543 = vpack.c.b16 %v490, %v489
      %v544 = vpack.c.b16 %v492, %v491
      %v545 = vpack.c.b16 %v494, %v493
      %v546 = vpack.c.b16 %v496, %v495
      %v547 = vpack.c.b16 %v498, %v497
      %v548 = vpack.c.b16 %v500, %v499
      %v549 = vpack.c.b16 %v502, %v501
      %v550 = vpack.c.b16 %v504, %v503
      %v551 = vpack.c.b16 %v506, %v505
      %v552 = vpack.c.b16 %v508, %v507
      %v553 = vpack.c.b16 %v510, %v509
      %v554 = vpack.c.b16 %v512, %v511
      %v555 = vpack.c.b16 %v514, %v513
      %v556 = vpack.c.b16 %v516, %v515
      %v557 = vpack.c.b16 %v518, %v517
      %v558 = vpack.c.b16 %v520, %v519
      %v559 = vpack.c.b16 %v522, %v521
      %v560 = vpack.c.b16 %v524, %v523
      %vm597 = vcmask 523264
      %v599 = vsel %vm597, %v349, 0
      %v602 = vsel %vm597, %v354, 0
      %v605 = vsel %vm597, %v359, 0
      %v608 = vsel %vm597, %v364, 0
      %610 = vmatprep.subr.bf16.mxu0 0
      %611 = vmatpush1.bf16.msra.mxu0 %v532
      %612 = vmatprep.subr.bf16.mxu0 0
      %613 = vmatpush1.bf16.msra.mxu0 %v531
      %614 = vmatprep.subr.bf16.mxu0 0
      %615 = vmatpush1.bf16.msra.mxu0 %v530
      %616 = vmatprep.subr.bf16.mxu0 0
      %617 = vmatpush1.bf16.msra.mxu0 %v529
      %618 = vmatprep.subr.bf16.mxu0 0
      %619 = vmatpush1.bf16.msra.mxu0 %v528
      %620 = vmatprep.subr.bf16.mxu0 0
      %621 = vmatpush1.bf16.msra.mxu0 %v527
      %622 = vmatprep.subr.bf16.mxu0 0
      %623 = vmatpush1.bf16.msra.mxu0 %v526
      %624 = vmatprep.subr.bf16.mxu0 0
      %625 = vmatpush1.bf16.msra.mxu0 %v525
      %626 = vmatprep.subr.bf16.mxu0 0
      %627 = vmatpush2.bf16.msra.mxu0 %v540
      %628 = vmatprep.subr.bf16.mxu0 0
      %629 = vmatpush2.bf16.msra.mxu0 %v539
      %630 = vmatprep.subr.bf16.mxu0 0
      %631 = vmatpush2.bf16.msra.mxu0 %v538
      %632 = vmatprep.subr.bf16.mxu0 0
      %633 = vmatpush2.bf16.msra.mxu0 %v537
      %634 = vmatprep.subr.bf16.mxu0 0
      %635 = vmatpush2.bf16.msra.mxu0 %v536
      %636 = vmatprep.subr.bf16.mxu0 0
      %637 = vmatpush2.bf16.msra.mxu0 %v535
      %638 = vmatprep.subr.bf16.mxu0 0
      %639 = vmatpush2.bf16.msra.mxu0 %v534
      %640 = vmatprep.subr.bf16.mxu0 0
      %641 = vmatpush2.bf16.msra.mxu0 %v533
      %642 = vmatprep.mubr.bf16.mxu0 %v346
      %643 = vmatmul.mubr.bf16.gmra.mxu0 %v345
      %v644 = vpop.f32.mrf.mxu0
      %v645 = vadd.f32 %v279, %v644
      %v646 = vpop.f32.mrf.mxu0
      %v647 = vpop.f32.mrf.mxu0
      %v648 = vadd.f32 %v279, %v647
      %v649 = vpop.f32.mrf.mxu0
      %650 = vmatprep.mubr.bf16.mxu0 %v351
      %651 = vmatmul.mubr.bf16.gmra.mxu0 %v350
      %v652 = vpop.f32.mrf.mxu0
      %v653 = vadd.f32 %v279, %v652
      %v654 = vpop.f32.mrf.mxu0
      %v655 = vpop.f32.mrf.mxu0
      %v656 = vadd.f32 %v279, %v655
      %v657 = vpop.f32.mrf.mxu0
      %658 = vmatprep.mubr.bf16.mxu0 %v356
      %659 = vmatmul.mubr.bf16.gmra.mxu0 %v355
      %v660 = vpop.f32.mrf.mxu0
      %v661 = vadd.f32 %v279, %v660
      %v662 = vpop.f32.mrf.mxu0
      %v663 = vpop.f32.mrf.mxu0
      %v664 = vadd.f32 %v279, %v663
      %v665 = vpop.f32.mrf.mxu0
      %666 = vmatprep.mubr.bf16.mxu0 %v361
      %667 = vmatmul.mubr.bf16.gmra.mxu0 %v360
      %v668 = vpop.f32.mrf.mxu0
      %v669 = vadd.f32 %v279, %v668
      %v670 = vpop.f32.mrf.mxu0
      %v671 = vpop.f32.mrf.mxu0
      %v672 = vadd.f32 %v279, %v671
      %v673 = vpop.f32.mrf.mxu0
      %674 = vdwg.mxu0
      %675 = vmatprep.subr.bf16.mxu0 0
      %676 = vmatpush1.bf16.msra.mxu0 %v548
      %677 = vmatprep.subr.bf16.mxu0 0
      %678 = vmatpush1.bf16.msra.mxu0 %v547
      %679 = vmatprep.subr.bf16.mxu0 0
      %680 = vmatpush1.bf16.msra.mxu0 %v546
      %681 = vmatprep.subr.bf16.mxu0 0
      %682 = vmatpush1.bf16.msra.mxu0 %v545
      %683 = vmatprep.subr.bf16.mxu0 0
      %684 = vmatpush1.bf16.msra.mxu0 %v544
      %685 = vmatprep.subr.bf16.mxu0 0
      %686 = vmatpush1.bf16.msra.mxu0 %v543
      %687 = vmatprep.subr.bf16.mxu0 0
      %688 = vmatpush1.bf16.msra.mxu0 %v542
      %689 = vmatprep.subr.bf16.mxu0 0
      %690 = vmatpush1.bf16.msra.mxu0 %v541
      %691 = vmatprep.subr.bf16.mxu0 0
      %692 = vmatpush2.bf16.msra.mxu0 %v556
      %693 = vmatprep.subr.bf16.mxu0 0
      %694 = vmatpush2.bf16.msra.mxu0 %v555
      %695 = vmatprep.subr.bf16.mxu0 0
      %696 = vmatpush2.bf16.msra.mxu0 %v554
      %697 = vmatprep.subr.bf16.mxu0 0
      %698 = vmatpush2.bf16.msra.mxu0 %v553
      %699 = vmatprep.subr.bf16.mxu0 0
      %700 = vmatpush2.bf16.msra.mxu0 %v552
      %701 = vmatprep.subr.bf16.mxu0 0
      %702 = vmatpush2.bf16.msra.mxu0 %v551
      %703 = vmatprep.subr.bf16.mxu0 0
      %704 = vmatpush2.bf16.msra.mxu0 %v550
      %705 = vmatprep.subr.bf16.mxu0 0
      %706 = vmatpush2.bf16.msra.mxu0 %v549
      %707 = vmatprep.mubr.bf16.mxu0 %v348
      %708 = vmatmul.mubr.bf16.gmra.mxu0 %v347
      %v709 = vpop.f32.mrf.mxu0
      %v710 = vadd.f32 %v645, %v709
      %v711 = vpop.f32.mrf.mxu0
      %v712 = vpop.f32.mrf.mxu0
      %v713 = vadd.f32 %v648, %v712
      %v714 = vpop.f32.mrf.mxu0
      %715 = vmatprep.mubr.bf16.mxu0 %v353
      %716 = vmatmul.mubr.bf16.gmra.mxu0 %v352
      %v717 = vpop.f32.mrf.mxu0
      %v718 = vadd.f32 %v653, %v717
      %v719 = vpop.f32.mrf.mxu0
      %v720 = vpop.f32.mrf.mxu0
      %v721 = vadd.f32 %v656, %v720
      %v722 = vpop.f32.mrf.mxu0
      %723 = vmatprep.mubr.bf16.mxu0 %v358
      %724 = vmatmul.mubr.bf16.gmra.mxu0 %v357
      %v725 = vpop.f32.mrf.mxu0
      %v726 = vadd.f32 %v661, %v725
      %v727 = vpop.f32.mrf.mxu0
      %v728 = vpop.f32.mrf.mxu0
      %v729 = vadd.f32 %v664, %v728
      %v730 = vpop.f32.mrf.mxu0
      %731 = vmatprep.mubr.bf16.mxu0 %v363
      %732 = vmatmul.mubr.bf16.gmra.mxu0 %v362
      %v733 = vpop.f32.mrf.mxu0
      %v734 = vadd.f32 %v669, %v733
      %v735 = vpop.f32.mrf.mxu0
      %v736 = vpop.f32.mrf.mxu0
      %v737 = vadd.f32 %v672, %v736
      %v738 = vpop.f32.mrf.mxu0
      %739 = vdwg.mxu0
      %740 = vmatprep.subr.bf16.mxu0 0
      %741 = vmatpush1.bf16.msra.mxu0 0
      %742 = vmatprep.subr.bf16.mxu0 0
      %743 = vmatpush1.bf16.msra.mxu0 0
      %744 = vmatprep.subr.bf16.mxu0 0
      %745 = vmatpush1.bf16.msra.mxu0 0
      %746 = vmatprep.subr.bf16.mxu0 0
      %747 = vmatpush1.bf16.msra.mxu0 0
      %748 = vmatprep.subr.bf16.mxu0 0
      %749 = vmatpush1.bf16.msra.mxu0 %v560
      %750 = vmatprep.subr.bf16.mxu0 0
      %751 = vmatpush1.bf16.msra.mxu0 %v559
      %752 = vmatprep.subr.bf16.mxu0 0
      %753 = vmatpush1.bf16.msra.mxu0 %v558
      %754 = vmatprep.subr.bf16.mxu0 0
      %755 = vmatpush1.bf16.msra.mxu0 %v557
      %756 = vmatprep.subr.bf16.mxu0 0
      %757 = vmatpush2.bf16.msra.mxu0 0
      %758 = vmatprep.subr.bf16.mxu0 0
      %759 = vmatpush2.bf16.msra.mxu0 0
      %760 = vmatprep.subr.bf16.mxu0 0
      %761 = vmatpush2.bf16.msra.mxu0 0
      %762 = vmatprep.subr.bf16.mxu0 0
      %763 = vmatpush2.bf16.msra.mxu0 0
      %764 = vmatprep.subr.bf16.mxu0 0
      %765 = vmatpush2.bf16.msra.mxu0 0
      %766 = vmatprep.subr.bf16.mxu0 0
      %767 = vmatpush2.bf16.msra.mxu0 0
      %768 = vmatprep.subr.bf16.mxu0 0
      %769 = vmatpush2.bf16.msra.mxu0 0
      %770 = vmatprep.subr.bf16.mxu0 0
      %771 = vmatpush2.bf16.msra.mxu0 0
      %772 = vmatprep.mubr.bf16.mxu0 0
      %773 = vmatmul.mubr.bf16.gmra.mxu0 %v599
      %v774 = vpop.f32.mrf.mxu0
      %v775 = vadd.f32 %v710, %v774
      %v776 = vpop.f32.mrf.mxu0
      %v777 = vpop.f32.mrf.mxu0
      %v778 = vadd.f32 %v713, %v777
      %v779 = vpop.f32.mrf.mxu0
      %780 = vmatprep.mubr.bf16.mxu0 0
      %781 = vmatmul.mubr.bf16.gmra.mxu0 %v602
      %v782 = vpop.f32.mrf.mxu0
      %v783 = vadd.f32 %v718, %v782
      %v784 = vpop.f32.mrf.mxu0
      %v785 = vpop.f32.mrf.mxu0
      %v786 = vadd.f32 %v721, %v785
      %v787 = vpop.f32.mrf.mxu0
      %788 = vmatprep.mubr.bf16.mxu0 0
      %789 = vmatmul.mubr.bf16.gmra.mxu0 %v605
      %v790 = vpop.f32.mrf.mxu0
      %v791 = vadd.f32 %v726, %v790
      %v792 = vpop.f32.mrf.mxu0
      %v793 = vpop.f32.mrf.mxu0
      %v794 = vadd.f32 %v729, %v793
      %v795 = vpop.f32.mrf.mxu0
      %796 = vmatprep.mubr.bf16.mxu0 0
      %797 = vmatmul.mubr.bf16.gmra.mxu0 %v608
      %v798 = vpop.f32.mrf.mxu0
      %v799 = vadd.f32 %v734, %v798
      %v800 = vpop.f32.mrf.mxu0
      %v801 = vpop.f32.mrf.mxu0
      %v802 = vadd.f32 %v737, %v801
      %v803 = vpop.f32.mrf.mxu0
      %804 = vdwg.mxu0
      %805 = vst [vmem:[%s175] sm:$0xff] %v775
      %806 = vst [vmem:[%s175 + $0x8] sm:$0xff] %v778
      %807 = vst [vmem:[%s175 + $0x10] sm:$0xff] %v783
      %808 = vst [vmem:[%s175 + $0x18] sm:$0xff] %v786
      %809 = vst [vmem:[%s175 + $0x20] sm:$0xff] %v791
      %810 = vst [vmem:[%s175 + $0x28] sm:$0xff] %v794
      %811 = vst [vmem:[%s175 + $0x30] sm:$0xff] %v799
      %812 = vst [vmem:[%s175 + $0x38] sm:$0xff] %v802
      %s813 = smul.u32 8, %s14
      %p814 = scmp.lt.s32.totalorder %s813, 15
      %s815 = scalar_select %p814, %s813, 15
      %s816 = smul.addr %s815, 8
      %s817 = scalar_lea.vmem %s3, %s816
      // Predicated region
      $region33: #{_lambda_.8} parent=31 // pred_check
        %p818 = pneg %p100
      $region34: #{_lambda_.8} parent=31 // pred_check_branch
        %820 = sbr.rel (%p818) target = $region36
      $region35: #{_lambda_.8} parent=31 // pred_region
        %s821 = smul.u32 8, %s14
      $region36: #{_lambda_.8} parent=31 // pred_fallthru
        _
    $region32: #{_lambda_.8} parent=5 // pred_fallthru
      _
    %p822 = scmp.le.s32.totalorder 2, %s9
    // Predicated region
    $region37: #{_lambda_.8} parent=5 // pred_check
      %p823 = pneg %p822
    $region38: #{_lambda_.8} parent=5 // pred_check_branch
      %825 = sbr.rel (%p823) target = $region40
    $region39: #{_lambda_.8} parent=5 // pred_region
      %s826 = ssub.s32 %s9, 2
      // Predicated region
      $region41: #{_lambda_.8} parent=39 // pred_check
        %p827 = pneg %p106
      $region42: #{_lambda_.8} parent=39 // pred_check_branch
        %829 = sbr.rel (%p827) target = $region44
      $region43: #{_lambda_.8} parent=39 // pred_region
        %s830 = smul.u32 8, %s15
        %p831 = scmp.lt.s32.totalorder %s830, 15
        %s832 = scalar_select %p831, %s830, 15
        %s833 = smul.addr %s832, 8
        %s834 = scalar_lea.vmem %s3, %s833
      $region44: #{_lambda_.8} parent=39 // pred_fallthru
        _
    $region40: #{_lambda_.8} parent=5 // pred_fallthru
      _
  $region6: #{_lambda_.8} parent=0 // loop_footer
    %s13 = sadd.s32 1, %s9
  $region7: #{_lambda_.8} parent=0 // loop_footer_branch
    %8 = sbr.rel target = $region3
  $region8: #{_lambda_.8} parent=0 // loop_exit
    _

// kernel: _lambda_.11
$region0: #{_lambda_.11}
  #allocation0 [shape = 'u32[]', space=smem, size = 0x4, offset = 0x4, fixed_abs, tag = 'smem constant byte address 0x4 - core index']
  #allocation1 [shape = 'u32[144,128]{1,0:T(1,128)}', space=vmem, size = 0x12000, scoped, tag = 'internal scratch']
  %s0 = inlined_call_operand.vmem [shape: f32[128,16], index: 0, kind: input, shape index: {}]
  %s1 = inlined_call_operand.vmem [shape: f32[128,16], index: 1, kind: input, shape index: {}]
  %s2 = inlined_call_operand.vmem [shape: bf16[16,8], index: 2, kind: input, shape index: {}]
  %s3 = inlined_call_operand.vmem [shape: f32[1,8], index: 3, kind: input, shape index: {}, may-alias: {3,5,7}]
  %s4 = inlined_call_operand.vmem [shape: bf16[16,8], index: 4, kind: input, shape index: {}]
  %s5 = inlined_call_operand.vmem [shape: f32[1,8], index: 5, kind: input, shape index: {}, may-alias: {3,5,7}]
  %s6 = inlined_call_operand.vmem [shape: bf16[16,8], index: 6, kind: input, shape index: {}]
  %s7 = inlined_call_operand.vmem [shape: f32[1,8], index: 7, kind: input, shape index: {}, may-alias: {3,5,7}]
  %s8 = inlined_call_operand.hbm [shape: f32[128,16], index: 8, kind: output, shape index: {0}]
  %s9 = inlined_call_operand.hbm [shape: f32[128,8], index: 9, kind: output, shape index: {1}]
  %10 = xla_tuple %s8, %s9
  %s11 = sld [smem:[#allocation0]]
  $region73: #{_lambda_.11} parent=0
    _
  %s13 = ssub.s32 1, %s11
  %s14 = scalar_select 0, %s13, %s11
  $region1: #{_lambda_.11} parent=0
    #allocation2 [shape = 'u8[65536]{0}', space=vmem, size = 0x10000, scoped, tag = 'output window, operand 0']
    #allocation3 [shape = 's32[2]{0}', space=sflag, size = 0x8, scoped, tag = 'scoped memory for _lambda_.11']
    #allocation4 [shape = 'u8[65536]{0}', space=vmem, size = 0x10000, scoped, tag = 'output window, operand 1']
    #allocation5 [shape = 's32[2]{0}', space=sflag, size = 0x8, scoped, tag = 'scoped memory for _lambda_.11']
    %15 = vsyncpa [#allocation3], 0
    %s16 = scalar_lea.sflag [#allocation3], 1
    %17 = vsyncpa %s16, 0
    %18 = vsyncpa [#allocation5], 0
    %s19 = scalar_lea.sflag [#allocation5], 1
    %20 = vsyncpa %s19, 0
    loop: start=0, step=1, limit=4
    $region2: #{_lambda_.11} parent=1 // loop_pre_header
      _
    $region3: #{_lambda_.11} parent=1 // loop_header
      %s22 = sphi 0, %s26
      %p23 = scmp.ge.s32.totalorder %s22, 4
      %s32 = sphi 0, %s34
      %s35 = sphi 0, %s32
      %s36 = sphi 0, %s35
      %s52 = sphi 0, %s36
      %s58 = sphi 0, %s60
      %s61 = sphi 0, %s58
      %s62 = sphi 0, %s61
      %s78 = sphi 0, %s62
      %s82 = sphi 0, %s82
      %s84 = sphi 0, %s82
      %s85 = sphi 0, %s84
      %s99 = sphi 0, %s85
      %s103 = sphi 0, %s103
      %s105 = sphi 0, %s103
      %s106 = sphi 0, %s105
      %s120 = sphi 0, %s106
      %s124 = sphi 0, %s124
      %s126 = sphi 0, %s124
      %s127 = sphi 0, %s126
      %s141 = sphi 0, %s127
      %s145 = sphi 0, %s145
      %s147 = sphi 0, %s145
      %s148 = sphi 0, %s147
      %s162 = sphi 0, %s148
      %s166 = sphi 0, %s166
      %s168 = sphi 0, %s166
      %s169 = sphi 0, %s168
      %s183 = sphi 0, %s169
      %s187 = sphi 0, %s187
      %s189 = sphi 0, %s187
      %s190 = sphi 0, %s189
      %s204 = sphi 0, %s190
      %s210 = sphi 0, %s212
      %s213 = sphi 0, %s210
      %s214 = sphi 0, %s213
      %s230 = sphi 0, %s214
      %s236 = sphi 0, %s238
      %s239 = sphi 0, %s236
      %s240 = sphi 0, %s239
      %s256 = sphi 0, %s240
    $region4: #{_lambda_.11} parent=1 // loop_header_branch
      %25 = sbr.rel (%p23) target = $region8
    $region5: #{_lambda_.11} parent=1 // loop_body
      %s27 = ssub.s32 %s22, 1
      %s28 = ssub.s32 %s22, 2
      %s29 = sadd.s32 %s22, 1
      %s30 = ssub.s32 %s22, %s29
      %p31 = scmp.eq.s32.totalorder %s30, 0
      %s33 = sadd.s32 %s32, 1
      %s34 = scalar_select %p31, %s32, %s33
      %p37 = pneg %p31
      %p38 = scmp.eq.s32.totalorder %s22, 1
      %p39 = por %p37, %p38
      %p40 = scmp.ne.s32.totalorder %s32, %s35
      %p41 = scmp.eq.s32.totalorder %s22, 0
      %p42 = por %p40, %p41
      %p43 = scmp.ne.s32.totalorder %s32, %s35
      %p44 = scmp.eq.s32.totalorder %s27, 1
      %p45 = por %p43, %p44
      %p46 = scmp.ne.s32.totalorder %s35, %s36
      %p47 = scmp.eq.s32.totalorder %s27, 0
      %p48 = por %p46, %p47
      %p49 = scmp.ne.s32.totalorder %s35, %s36
      %p50 = scmp.eq.s32.totalorder %s28, 1
      %p51 = por %p49, %p50
      %p53 = scmp.ne.s32.totalorder %s36, %s52
      %p54 = scmp.eq.s32.totalorder %s28, 0
      %p55 = por %p53, %p54
      %s56 = ssub.s32 %s22, %s29
      %p57 = scmp.eq.s32.totalorder %s56, 0
      %s59 = sadd.s32 %s58, 1
      %s60 = scalar_select %p57, %s58, %s59
      %p63 = pneg %p57
      %p64 = scmp.eq.s32.totalorder %s22, 1
      %p65 = por %p63, %p64
      %p66 = scmp.ne.s32.totalorder %s58, %s61
      %p67 = scmp.eq.s32.totalorder %s22, 0
      %p68 = por %p66, %p67
      %p69 = scmp.ne.s32.totalorder %s58, %s61
      %p70 = scmp.eq.s32.totalorder %s27, 1
      %p71 = por %p69, %p70
      %p72 = scmp.ne.s32.totalorder %s61, %s62
      %p73 = scmp.eq.s32.totalorder %s27, 0
      %p74 = por %p72, %p73
      %p75 = scmp.ne.s32.totalorder %s61, %s62
      %p76 = scmp.eq.s32.totalorder %s28, 1
      %p77 = por %p75, %p76
      %p79 = scmp.ne.s32.totalorder %s62, %s78
      %p80 = scmp.eq.s32.totalorder %s28, 0
      %p81 = por %p79, %p80
      %s83 = sadd.s32 %s82, 1
      %p86 = scmp.eq.s32.totalorder %s22, 1
      %p87 = scmp.ne.s32.totalorder %s82, %s84
      %p88 = scmp.eq.s32.totalorder %s22, 0
      %p89 = por %p87, %p88
      %p90 = scmp.ne.s32.totalorder %s82, %s84
      %p91 = scmp.eq.s32.totalorder %s27, 1
      %p92 = por %p90, %p91
      %p93 = scmp.ne.s32.totalorder %s84, %s85
      %p94 = scmp.eq.s32.totalorder %s27, 0
      %p95 = por %p93, %p94
      %p96 = scmp.ne.s32.totalorder %s84, %s85
      %p97 = scmp.eq.s32.totalorder %s28, 1
      %p98 = por %p96, %p97
      %p100 = scmp.ne.s32.totalorder %s85, %s99
      %p101 = scmp.eq.s32.totalorder %s28, 0
      %p102 = por %p100, %p101
      %s104 = sadd.s32 %s103, 1
      %p107 = scmp.eq.s32.totalorder %s22, 1
      %p108 = scmp.ne.s32.totalorder %s103, %s105
      %p109 = scmp.eq.s32.totalorder %s22, 0
      %p110 = por %p108, %p109
      %p111 = scmp.ne.s32.totalorder %s103, %s105
      %p112 = scmp.eq.s32.totalorder %s27, 1
      %p113 = por %p111, %p112
      %p114 = scmp.ne.s32.totalorder %s105, %s106
      %p115 = scmp.eq.s32.totalorder %s27, 0
      %p116 = por %p114, %p115
      %p117 = scmp.ne.s32.totalorder %s105, %s106
      %p118 = scmp.eq.s32.totalorder %s28, 1
      %p119 = por %p117, %p118
      %p121 = scmp.ne.s32.totalorder %s106, %s120
      %p122 = scmp.eq.s32.totalorder %s28, 0
      %p123 = por %p121, %p122
      %s125 = sadd.s32 %s124, 1
      %p128 = scmp.eq.s32.totalorder %s22, 1
      %p129 = scmp.ne.s32.totalorder %s124, %s126
      %p130 = scmp.eq.s32.totalorder %s22, 0
      %p131 = por %p129, %p130
      %p132 = scmp.ne.s32.totalorder %s124, %s126
      %p133 = scmp.eq.s32.totalorder %s27, 1
      %p134 = por %p132, %p133
      %p135 = scmp.ne.s32.totalorder %s126, %s127
      %p136 = scmp.eq.s32.totalorder %s27, 0
      %p137 = por %p135, %p136
      %p138 = scmp.ne.s32.totalorder %s126, %s127
      %p139 = scmp.eq.s32.totalorder %s28, 1
      %p140 = por %p138, %p139
      %p142 = scmp.ne.s32.totalorder %s127, %s141
      %p143 = scmp.eq.s32.totalorder %s28, 0
      %p144 = por %p142, %p143
      %s146 = sadd.s32 %s145, 1
      %p149 = scmp.eq.s32.totalorder %s22, 1
      %p150 = scmp.ne.s32.totalorder %s145, %s147
      %p151 = scmp.eq.s32.totalorder %s22, 0
      %p152 = por %p150, %p151
      %p153 = scmp.ne.s32.totalorder %s145, %s147
      %p154 = scmp.eq.s32.totalorder %s27, 1
      %p155 = por %p153, %p154
      %p156 = scmp.ne.s32.totalorder %s147, %s148
      %p157 = scmp.eq.s32.totalorder %s27, 0
      %p158 = por %p156, %p157
      %p159 = scmp.ne.s32.totalorder %s147, %s148
      %p160 = scmp.eq.s32.totalorder %s28, 1
      %p161 = por %p159, %p160
      %p163 = scmp.ne.s32.totalorder %s148, %s162
      %p164 = scmp.eq.s32.totalorder %s28, 0
      %p165 = por %p163, %p164
      %s167 = sadd.s32 %s166, 1
      %p170 = scmp.eq.s32.totalorder %s22, 1
      %p171 = scmp.ne.s32.totalorder %s166, %s168
      %p172 = scmp.eq.s32.totalorder %s22, 0
      %p173 = por %p171, %p172
      %p174 = scmp.ne.s32.totalorder %s166, %s168
      %p175 = scmp.eq.s32.totalorder %s27, 1
      %p176 = por %p174, %p175
      %p177 = scmp.ne.s32.totalorder %s168, %s169
      %p178 = scmp.eq.s32.totalorder %s27, 0
      %p179 = por %p177, %p178
      %p180 = scmp.ne.s32.totalorder %s168, %s169
      %p181 = scmp.eq.s32.totalorder %s28, 1
      %p182 = por %p180, %p181
      %p184 = scmp.ne.s32.totalorder %s169, %s183
      %p185 = scmp.eq.s32.totalorder %s28, 0
      %p186 = por %p184, %p185
      %s188 = sadd.s32 %s187, 1
      %p191 = scmp.eq.s32.totalorder %s22, 1
      %p192 = scmp.ne.s32.totalorder %s187, %s189
      %p193 = scmp.eq.s32.totalorder %s22, 0
      %p194 = por %p192, %p193
      %p195 = scmp.ne.s32.totalorder %s187, %s189
      %p196 = scmp.eq.s32.totalorder %s27, 1
      %p197 = por %p195, %p196
      %p198 = scmp.ne.s32.totalorder %s189, %s190
      %p199 = scmp.eq.s32.totalorder %s27, 0
      %p200 = por %p198, %p199
      %p201 = scmp.ne.s32.totalorder %s189, %s190
      %p202 = scmp.eq.s32.totalorder %s28, 1
      %p203 = por %p201, %p202
      %p205 = scmp.ne.s32.totalorder %s190, %s204
      %p206 = scmp.eq.s32.totalorder %s28, 0
      %p207 = por %p205, %p206
      %s208 = ssub.s32 %s22, %s29
      %p209 = scmp.eq.s32.totalorder %s208, 0
      %s211 = sadd.s32 %s210, 1
      %s212 = scalar_select %p209, %s210, %s211
      %p215 = pneg %p209
      %p216 = scmp.eq.s32.totalorder %s22, 1
      %p217 = por %p215, %p216
      %p218 = scmp.ne.s32.totalorder %s210, %s213
      %p219 = scmp.eq.s32.totalorder %s22, 0
      %p220 = por %p218, %p219
      %p221 = scmp.ne.s32.totalorder %s210, %s213
      %p222 = scmp.eq.s32.totalorder %s27, 1
      %p223 = por %p221, %p222
      %p224 = scmp.ne.s32.totalorder %s213, %s214
      %p225 = scmp.eq.s32.totalorder %s27, 0
      %p226 = por %p224, %p225
      %p227 = scmp.ne.s32.totalorder %s213, %s214
      %p228 = scmp.eq.s32.totalorder %s28, 1
      %p229 = por %p227, %p228
      %p231 = scmp.ne.s32.totalorder %s214, %s230
      %p232 = scmp.eq.s32.totalorder %s28, 0
      %p233 = por %p231, %p232
      %s234 = ssub.s32 %s22, %s29
      %p235 = scmp.eq.s32.totalorder %s234, 0
      %s237 = sadd.s32 %s236, 1
      %s238 = scalar_select %p235, %s236, %s237
      %p241 = pneg %p235
      %p242 = scmp.eq.s32.totalorder %s22, 1
      %p243 = por %p241, %p242
      %p244 = scmp.ne.s32.totalorder %s236, %s239
      %p245 = scmp.eq.s32.totalorder %s22, 0
      %p246 = por %p244, %p245
      %p247 = scmp.ne.s32.totalorder %s236, %s239
      %p248 = scmp.eq.s32.totalorder %s27, 1
      %p249 = por %p247, %p248
      %p250 = scmp.ne.s32.totalorder %s239, %s240
      %p251 = scmp.eq.s32.totalorder %s27, 0
      %p252 = por %p250, %p251
      %p253 = scmp.ne.s32.totalorder %s239, %s240
      %p254 = scmp.eq.s32.totalorder %s28, 1
      %p255 = por %p253, %p254
      %p257 = scmp.ne.s32.totalorder %s240, %s256
      %p258 = scmp.eq.s32.totalorder %s28, 0
      %p259 = por %p257, %p258
      %p260 = scmp.le.s32.totalorder 1, %s22
      %p261 = scmp.lt.s32.totalorder %s22, 3
      %p262 = pnand %p260, %p261
      %p263 = pneg %p262
      // Predicated region
      $region9: #{_lambda_.11} parent=5 // pred_check
        _
      $region10: #{_lambda_.11} parent=5 // pred_check_branch
        %265 = sbr.rel (%p262) target = $region12
      $region11: #{_lambda_.11} parent=5 // pred_region
        %s266 = ssub.s32 %s22, 1
        // Predicated region
        $region13: #{_lambda_.11} parent=11 // pred_check
          %p267 = pneg %p95
        $region14: #{_lambda_.11} parent=11 // pred_check_branch
          %269 = sbr.rel (%p267) target = $region16
        $region15: #{_lambda_.11} parent=11 // pred_region
          _
        $region16: #{_lambda_.11} parent=11 // pred_fallthru
          _
        // Predicated region
        $region17: #{_lambda_.11} parent=11 // pred_check
          %p270 = pneg %p116
        $region18: #{_lambda_.11} parent=11 // pred_check_branch
          %272 = sbr.rel (%p270) target = $region20
        $region19: #{_lambda_.11} parent=11 // pred_region
          _
        $region20: #{_lambda_.11} parent=11 // pred_fallthru
          _
        // Predicated region
        $region21: #{_lambda_.11} parent=11 // pred_check
          %p273 = pneg %p137
        $region22: #{_lambda_.11} parent=11 // pred_check_branch
          %275 = sbr.rel (%p273) target = $region24
        $region23: #{_lambda_.11} parent=11 // pred_region
          _
        $region24: #{_lambda_.11} parent=11 // pred_fallthru
          _
        // Predicated region
        $region25: #{_lambda_.11} parent=11 // pred_check
          %p276 = pneg %p158
        $region26: #{_lambda_.11} parent=11 // pred_check_branch
          %278 = sbr.rel (%p276) target = $region28
        $region27: #{_lambda_.11} parent=11 // pred_region
          _
        $region28: #{_lambda_.11} parent=11 // pred_fallthru
          _
        // Predicated region
        $region29: #{_lambda_.11} parent=11 // pred_check
          %p279 = pneg %p179
        $region30: #{_lambda_.11} parent=11 // pred_check_branch
          %281 = sbr.rel (%p279) target = $region32
        $region31: #{_lambda_.11} parent=11 // pred_region
          _
        $region32: #{_lambda_.11} parent=11 // pred_fallthru
          _
        // Predicated region
        $region33: #{_lambda_.11} parent=11 // pred_check
          %p282 = pneg %p200
        $region34: #{_lambda_.11} parent=11 // pred_check_branch
          %284 = sbr.rel (%p282) target = $region36
        $region35: #{_lambda_.11} parent=11 // pred_region
          _
        $region36: #{_lambda_.11} parent=11 // pred_fallthru
          _
      $region12: #{_lambda_.11} parent=5 // pred_fallthru
        _
      %p285 = scmp.lt.s32.totalorder %s22, 2
      // Predicated region
      $region37: #{_lambda_.11} parent=5 // pred_check
        %p286 = pneg %p285
      $region38: #{_lambda_.11} parent=5 // pred_check_branch
        %288 = sbr.rel (%p286) target = $region40
      $region39: #{_lambda_.11} parent=5 // pred_region
        // Predicated region
        $region41: #{_lambda_.11} parent=39 // pred_check
          %p289 = pneg %p42
        $region42: #{_lambda_.11} parent=39 // pred_check_branch
          %291 = sbr.rel (%p289) target = $region44
        $region43: #{_lambda_.11} parent=39 // pred_region
          %s292 = smul.u32 8, %s22
          %p293 = scmp.lt.s32.totalorder %s292, 15
          %s294 = scalar_select %p293, %s292, 15
          %s295 = smul.addr %s294, 8
          %s296 = scalar_lea.vmem %s0, %s295
          %s297 = smul.u32 8, %s22
        $region44: #{_lambda_.11} parent=39 // pred_fallthru
          _
        // Predicated region
        $region45: #{_lambda_.11} parent=39 // pred_check
          %p298 = pneg %p68
        $region46: #{_lambda_.11} parent=39 // pred_check_branch
          %300 = sbr.rel (%p298) target = $region48
        $region47: #{_lambda_.11} parent=39 // pred_region
          %s301 = smul.u32 8, %s22
          %p302 = scmp.lt.s32.totalorder %s301, 15
          %s303 = scalar_select %p302, %s301, 15
          %s304 = smul.addr %s303, 8
          %s305 = scalar_lea.vmem %s1, %s304
          %s306 = smul.u32 8, %s22
        $region48: #{_lambda_.11} parent=39 // pred_fallthru
          _
      $region40: #{_lambda_.11} parent=5 // pred_fallthru
        _
      %p307 = scmp.le.s32.totalorder 1, %s22
      %p308 = scmp.lt.s32.totalorder %s22, 3
      %p309 = pnand %p307, %p308
      %p310 = pneg %p309
      // Predicated region
      $region49: #{_lambda_.11} parent=5 // pred_check
        _
      $region50: #{_lambda_.11} parent=5 // pred_check_branch
        %312 = sbr.rel (%p309) target = $region52
      $region51: #{_lambda_.11} parent=5 // pred_region
        %s313 = ssub.s32 %s22, 1
        %s314 = smul.u32 8, %s27
        %p315 = scmp.lt.s32.totalorder %s314, 15
        %s316 = scalar_select %p315, %s314, 15
        %s317 = smul.addr %s316, 8
        %s318 = scalar_lea.vmem %s0, %s317
        %p319 = pneg %p48
        %p320 = pneg %p45
        %s321 = smul.u32 8, %s27
        %p322 = scmp.lt.s32.totalorder %s321, 15
        %s323 = scalar_select %p322, %s321, 15
        %s324 = smul.addr %s323, 8
        %s325 = scalar_lea.vmem %s1, %s324
        %p326 = pneg %p74
        %p327 = pneg %p71
        %p328 = pneg %p95
        %p329 = pneg %p92
        %p330 = pneg %p116
        %p331 = pneg %p113
        %p332 = pneg %p137
        %p333 = pneg %p134
        %p334 = pneg %p158
        %p335 = pneg %p155
        %p336 = pneg %p179
        %p337 = pneg %p176
        %p338 = pneg %p200
        %p339 = pneg %p197
        %p340 = pneg %p226
        %p341 = pneg %p223
        %s342 = sand.u32 %s213, 1
        %s343 = scalar_lea.sflag [#allocation3], %s342
        %s344 = sand.u32 %s213, 1
        %s345 = smul.addr %s344, 64
        %s346 = scalar_lea.vmem [#allocation2], %s345
        %p347 = pneg %p252
        %p348 = pneg %p249
        %s349 = sand.u32 %s239, 1
        %s350 = scalar_lea.sflag [#allocation5], %s349
        %s351 = sand.u32 %s239, 1
        %s352 = smul.addr %s351, 64
        %s353 = scalar_lea.vmem [#allocation4], %s352
        %s354 = smul.u32 8, %s27
        %p355 = scmp.lt.s32.totalorder %s354, 15
        %s356 = scalar_select %p355, %s354, 15
        %s357 = smul.addr %s356, 8
        %s358 = scalar_lea.vmem %s0, %s357
        %s359 = smul.u32 8, %s27
        %s360 = smul.u32 8, %s27
        %p361 = scmp.lt.s32.totalorder %s360, 15
        %s362 = scalar_select %p361, %s360, 15
        %s363 = smul.addr %s362, 8
        %s364 = scalar_lea.vmem %s1, %s363
        %s365 = smul.u32 8, %s27
        %s366 = smul.u32 8, %s27
        %s367 = smul.u32 8, %s27
        %v369 = vld [vmem:[%s358] sm:$0xff]
        %v370 = vld [vmem:[%s358 + $0x8] sm:$0xff]
        %v371 = vld [vmem:[%s358 + $0x10] sm:$0xff]
        %v372 = vld [vmem:[%s358 + $0x18] sm:$0xff]
        %v373 = vld [vmem:[%s358 + $0x20] sm:$0xff]
        %v374 = vld [vmem:[%s358 + $0x28] sm:$0xff]
        %v375 = vld [vmem:[%s358 + $0x30] sm:$0xff]
        %v376 = vld [vmem:[%s358 + $0x38] sm:$0xff]
        %v377 = vmax.f32 %v369, 0.0
        %v378 = vmax.f32 %v370, 0.0
        %v379 = vmax.f32 %v371, 0.0
        %v380 = vmax.f32 %v372, 0.0
        %v381 = vmax.f32 %v373, 0.0
        %v382 = vmax.f32 %v374, 0.0
        %v383 = vmax.f32 %v375, 0.0
        %v384 = vmax.f32 %v376, 0.0
        %v385 = vpack.c.bf16 %v378, %v377
        %v386 = vpack.c.bf16 %v380, %v379
        %v387 = vpack.c.bf16 %v382, %v381
        %v388 = vpack.c.bf16 %v384, %v383
        %v389 = vld [vmem:[%s364] sm:$0xff]
        %v390 = vld [vmem:[%s364 + $0x8] sm:$0xff]
        %v391 = vld [vmem:[%s364 + $0x10] sm:$0xff]
        %v392 = vld [vmem:[%s364 + $0x18] sm:$0xff]
        %v393 = vld [vmem:[%s364 + $0x20] sm:$0xff]
        %v394 = vld [vmem:[%s364 + $0x28] sm:$0xff]
        %v395 = vld [vmem:[%s364 + $0x30] sm:$0xff]
        %v396 = vld [vmem:[%s364 + $0x38] sm:$0xff]
        %v397 = vmax.f32 %v389, 0.0
        %v398 = vmax.f32 %v390, 0.0
        %v399 = vmax.f32 %v391, 0.0
        %v400 = vmax.f32 %v392, 0.0
        %v401 = vmax.f32 %v393, 0.0
        %v402 = vmax.f32 %v394, 0.0
        %v403 = vmax.f32 %v395, 0.0
        %v404 = vmax.f32 %v396, 0.0
        %v405 = vpack.c.bf16 %v398, %v397
        %v406 = vpack.c.bf16 %v400, %v399
        %v407 = vpack.c.bf16 %v402, %v401
        %v408 = vpack.c.bf16 %v404, %v403
        %v409 = vld [vmem:[%s2] sm:$0xf]
        %v410 = vld [vmem:[%s2 + $0x4] sm:$0xf]
        %v411 = vld [vmem:[%s3] sm:$0x1]
        %v413 = vlaneseq
        %v414 = vshrl.u32 %v413, 7
        %v415 = vsub.s32 0, %v414
        %v416 = vrot.slane %v411, %v415
        %v420 = vunpack.c.l.b16 %v409
        %v421 = vunpack.c.l.b16 %v410
        %v422 = vpack.c.b16 %v421, %v420
        %vm424 = vcmask 130048
        %v426 = vsel %vm424, %v385, 0
        %v429 = vsel %vm424, %v386, 0
        %v432 = vsel %vm424, %v387, 0
        %v435 = vsel %vm424, %v388, 0
        %437 = vmatprep.subr.bf16.mxu0 0
        %438 = vmatpush1.bf16.msra.mxu0 0
        %439 = vmatprep.subr.bf16.mxu0 0
        %440 = vmatpush1.bf16.msra.mxu0 0
        %441 = vmatprep.subr.bf16.mxu0 0
        %442 = vmatpush1.bf16.msra.mxu0 0
        %443 = vmatprep.subr.bf16.mxu0 0
        %444 = vmatpush1.bf16.msra.mxu0 0
        %445 = vmatprep.subr.bf16.mxu0 0
        %446 = vmatpush1.bf16.msra.mxu0 0
        %447 = vmatprep.subr.bf16.mxu0 0
        %448 = vmatpush1.bf16.msra.mxu0 0
        %449 = vmatprep.subr.bf16.mxu0 0
        %450 = vmatpush1.bf16.msra.mxu0 0
        %451 = vmatprep.subr.bf16.mxu0 0
        %452 = vmatpush1.bf16.msra.mxu0 %v422
        %453 = vmatprep.subr.bf16.mxu0 0
        %454 = vmatpush2.bf16.msra.mxu0 0
        %455 = vmatprep.subr.bf16.mxu0 0
        %456 = vmatpush2.bf16.msra.mxu0 0
        %457 = vmatprep.subr.bf16.mxu0 0
        %458 = vmatpush2.bf16.msra.mxu0 0
        %459 = vmatprep.subr.bf16.mxu0 0
        %460 = vmatpush2.bf16.msra.mxu0 0
        %461 = vmatprep.subr.bf16.mxu0 0
        %462 = vmatpush2.bf16.msra.mxu0 0
        %463 = vmatprep.subr.bf16.mxu0 0
        %464 = vmatpush2.bf16.msra.mxu0 0
        %465 = vmatprep.subr.bf16.mxu0 0
        %466 = vmatpush2.bf16.msra.mxu0 0
        %467 = vmatprep.subr.bf16.mxu0 0
        %468 = vmatpush2.bf16.msra.mxu0 0
        %469 = vmatprep.mubr.bf16.mxu0 0
        %470 = vmatmul.mubr.bf16.gmra.mxu0 %v426
        %v471 = vpop.f32.mrf.mxu0
        %v472 = vadd.f32 %v416, %v471
        %v473 = vpop.f32.mrf.mxu0
        %v474 = vpop.f32.mrf.mxu0
        %v475 = vadd.f32 %v416, %v474
        %v476 = vpop.f32.mrf.mxu0
        %477 = vmatprep.mubr.bf16.mxu0 0
        %478 = vmatmul.mubr.bf16.gmra.mxu0 %v429
        %v479 = vpop.f32.mrf.mxu0
        %v480 = vadd.f32 %v416, %v479
        %v481 = vpop.f32.mrf.mxu0
        %v482 = vpop.f32.mrf.mxu0
        %v483 = vadd.f32 %v416, %v482
        %v484 = vpop.f32.mrf.mxu0
        %485 = vmatprep.mubr.bf16.mxu0 0
        %486 = vmatmul.mubr.bf16.gmra.mxu0 %v432
        %v487 = vpop.f32.mrf.mxu0
        %v488 = vadd.f32 %v416, %v487
        %v489 = vpop.f32.mrf.mxu0
        %v490 = vpop.f32.mrf.mxu0
        %v491 = vadd.f32 %v416, %v490
        %v492 = vpop.f32.mrf.mxu0
        %493 = vmatprep.mubr.bf16.mxu0 0
        %494 = vmatmul.mubr.bf16.gmra.mxu0 %v435
        %v495 = vpop.f32.mrf.mxu0
        %v496 = vadd.f32 %v416, %v495
        %v497 = vpop.f32.mrf.mxu0
        %v498 = vpop.f32.mrf.mxu0
        %v499 = vadd.f32 %v416, %v498
        %v500 = vpop.f32.mrf.mxu0
        %501 = vdwg.mxu0
        %v502 = vld [vmem:[%s4] sm:$0xf]
        %v503 = vld [vmem:[%s4 + $0x4] sm:$0xf]
        %v504 = vld [vmem:[%s5] sm:$0x1]
        %v506 = vlaneseq
        %v507 = vshrl.u32 %v506, 7
        %v508 = vsub.s32 0, %v507
        %v509 = vrot.slane %v504, %v508
        %v513 = vunpack.c.l.b16 %v502
        %v514 = vunpack.c.l.b16 %v503
        %v515 = vpack.c.b16 %v514, %v513
        %v518 = vsel %vm424, %v405, 0
        %v521 = vsel %vm424, %v406, 0
        %v524 = vsel %vm424, %v407, 0
        %v527 = vsel %vm424, %v408, 0
        %529 = vmatprep.subr.bf16.mxu0 0
        %530 = vmatpush1.bf16.msra.mxu0 0
        %531 = vmatprep.subr.bf16.mxu0 0
        %532 = vmatpush1.bf16.msra.mxu0 0
        %533 = vmatprep.subr.bf16.mxu0 0
        %534 = vmatpush1.bf16.msra.mxu0 0
        %535 = vmatprep.subr.bf16.mxu0 0
        %536 = vmatpush1.bf16.msra.mxu0 0
        %537 = vmatprep.subr.bf16.mxu0 0
        %538 = vmatpush1.bf16.msra.mxu0 0
        %539 = vmatprep.subr.bf16.mxu0 0
        %540 = vmatpush1.bf16.msra.mxu0 0
        %541 = vmatprep.subr.bf16.mxu0 0
        %542 = vmatpush1.bf16.msra.mxu0 0
        %543 = vmatprep.subr.bf16.mxu0 0
        %544 = vmatpush1.bf16.msra.mxu0 %v515
        %545 = vmatprep.subr.bf16.mxu0 0
        %546 = vmatpush2.bf16.msra.mxu0 0
        %547 = vmatprep.subr.bf16.mxu0 0
        %548 = vmatpush2.bf16.msra.mxu0 0
        %549 = vmatprep.subr.bf16.mxu0 0
        %550 = vmatpush2.bf16.msra.mxu0 0
        %551 = vmatprep.subr.bf16.mxu0 0
        %552 = vmatpush2.bf16.msra.mxu0 0
        %553 = vmatprep.subr.bf16.mxu0 0
        %554 = vmatpush2.bf16.msra.mxu0 0
        %555 = vmatprep.subr.bf16.mxu0 0
        %556 = vmatpush2.bf16.msra.mxu0 0
        %557 = vmatprep.subr.bf16.mxu0 0
        %558 = vmatpush2.bf16.msra.mxu0 0
        %559 = vmatprep.subr.bf16.mxu0 0
        %560 = vmatpush2.bf16.msra.mxu0 0
        %561 = vmatprep.mubr.bf16.mxu0 0
        %562 = vmatmul.mubr.bf16.gmra.mxu0 %v518
        %v563 = vpop.f32.mrf.mxu0
        %v564 = vadd.f32 %v509, %v563
        %v565 = vpop.f32.mrf.mxu0
        %v566 = vpop.f32.mrf.mxu0
        %v567 = vadd.f32 %v509, %v566
        %v568 = vpop.f32.mrf.mxu0
        %569 = vmatprep.mubr.bf16.mxu0 0
        %570 = vmatmul.mubr.bf16.gmra.mxu0 %v521
        %v571 = vpop.f32.mrf.mxu0
        %v572 = vadd.f32 %v509, %v571
        %v573 = vpop.f32.mrf.mxu0
        %v574 = vpop.f32.mrf.mxu0
        %v575 = vadd.f32 %v509, %v574
        %v576 = vpop.f32.mrf.mxu0
        %577 = vmatprep.mubr.bf16.mxu0 0
        %578 = vmatmul.mubr.bf16.gmra.mxu0 %v524
        %v579 = vpop.f32.mrf.mxu0
        %v580 = vadd.f32 %v509, %v579
        %v581 = vpop.f32.mrf.mxu0
        %v582 = vpop.f32.mrf.mxu0
        %v583 = vadd.f32 %v509, %v582
        %v584 = vpop.f32.mrf.mxu0
        %585 = vmatprep.mubr.bf16.mxu0 0
        %586 = vmatmul.mubr.bf16.gmra.mxu0 %v527
        %v587 = vpop.f32.mrf.mxu0
        %v588 = vadd.f32 %v509, %v587
        %v589 = vpop.f32.mrf.mxu0
        %v590 = vpop.f32.mrf.mxu0
        %v591 = vadd.f32 %v509, %v590
        %v592 = vpop.f32.mrf.mxu0
        %593 = vdwg.mxu0
        %v594 = vadd.f32 %v472, %v564
        %v595 = vadd.f32 %v475, %v567
        %v596 = vadd.f32 %v480, %v572
        %v597 = vadd.f32 %v483, %v575
        %v598 = vadd.f32 %v488, %v580
        %v599 = vadd.f32 %v491, %v583
        %v600 = vadd.f32 %v496, %v588
        %v601 = vadd.f32 %v499, %v591
        %vm602 = vcmask 64512
        %603 = vst.msk [vmem:[%s346] sm:$0xff] %vm602, %v594
        %604 = vst.msk [vmem:[%s346 + $0x8] sm:$0xff] %vm602, %v595
        %605 = vst.msk [vmem:[%s346 + $0x10] sm:$0xff] %vm602, %v596
        %606 = vst.msk [vmem:[%s346 + $0x18] sm:$0xff] %vm602, %v597
        %607 = vst.msk [vmem:[%s346 + $0x20] sm:$0xff] %vm602, %v598
        %608 = vst.msk [vmem:[%s346 + $0x28] sm:$0xff] %vm602, %v599
        %609 = vst.msk [vmem:[%s346 + $0x30] sm:$0xff] %vm602, %v600
        %610 = vst.msk [vmem:[%s346 + $0x38] sm:$0xff] %vm602, %v601
        %v611 = vmax.f32 %v594, 0.0
        %v612 = vmax.f32 %v595, 0.0
        %v613 = vmax.f32 %v596, 0.0
        %v614 = vmax.f32 %v597, 0.0
        %v615 = vmax.f32 %v598, 0.0
        %v616 = vmax.f32 %v599, 0.0
        %v617 = vmax.f32 %v600, 0.0
        %v618 = vmax.f32 %v601, 0.0
        %v619 = vpack.c.bf16 %v612, %v611
        %v620 = vpack.c.bf16 %v614, %v613
        %v621 = vpack.c.bf16 %v616, %v615
        %v622 = vpack.c.bf16 %v618, %v617
        %631 = vrot.lane.b32.xlu0 %v594, 8
        %v632 = vpop.permute.xlu0 %631
        %633 = vrot.lane.b32.xlu0 %v595, 8
        %v634 = vpop.permute.xlu0 %633
        %635 = vrot.lane.b32.xlu0 %v596, 8
        %v636 = vpop.permute.xlu0 %635
        %637 = vrot.lane.b32.xlu0 %v597, 8
        %v638 = vpop.permute.xlu0 %637
        %639 = vrot.lane.b32.xlu0 %v598, 8
        %v640 = vpop.permute.xlu0 %639
        %641 = vrot.lane.b32.xlu0 %v599, 8
        %v642 = vpop.permute.xlu0 %641
        %643 = vrot.lane.b32.xlu0 %v600, 8
        %v644 = vpop.permute.xlu0 %643
        %645 = vrot.lane.b32.xlu0 %v601, 8
        %v646 = vpop.permute.xlu0 %645
        %vm655 = vcmask 130112
        %656 = vst.msk [vmem:[%s346] sm:$0xff] %vm655, %v632
        %657 = vst.msk [vmem:[%s346 + $0x8] sm:$0xff] %vm655, %v634
        %658 = vst.msk [vmem:[%s346 + $0x10] sm:$0xff] %vm655, %v636
        %659 = vst.msk [vmem:[%s346 + $0x18] sm:$0xff] %vm655, %v638
        %660 = vst.msk [vmem:[%s346 + $0x20] sm:$0xff] %vm655, %v640
        %661 = vst.msk [vmem:[%s346 + $0x28] sm:$0xff] %vm655, %v642
        %662 = vst.msk [vmem:[%s346 + $0x30] sm:$0xff] %vm655, %v644
        %663 = vst.msk [vmem:[%s346 + $0x38] sm:$0xff] %vm655, %v646
        %v664 = vld [vmem:[%s7] sm:$0x1]
        %v665 = vld [vmem:[%s6] sm:$0xf]
        %v667 = vsel %vm602, %v619, 0
        %v670 = vsel %vm602, %v620, 0
        %v673 = vsel %vm602, %v621, 0
        %v676 = vsel %vm602, %v622, 0
        %vm678 = vcmask 1043456
        %v680 = vsel %vm678, %v665, 0
        %682 = vmatprep.subr.bf16.mxu0 0
        %683 = vmatpush1.bf16.msra.mxu0 0
        %684 = vmatprep.subr.bf16.mxu0 0
        %685 = vmatpush1.bf16.msra.mxu0 0
        %686 = vmatprep.subr.bf16.mxu0 0
        %687 = vmatpush1.bf16.msra.mxu0 0
        %688 = vmatprep.subr.bf16.mxu0 0
        %689 = vmatpush1.bf16.msra.mxu0 0
        %690 = vmatprep.subr.bf16.mxu0 0
        %691 = vmatpush1.bf16.msra.mxu0 0
        %692 = vmatprep.subr.bf16.mxu0 0
        %693 = vmatpush1.bf16.msra.mxu0 0
        %694 = vmatprep.subr.bf16.mxu0 0
        %695 = vmatpush1.bf16.msra.mxu0 0
        %696 = vmatprep.subr.bf16.mxu0 0
        %697 = vmatpush1.bf16.msra.mxu0 %v680
        %698 = vmatprep.subr.bf16.mxu0 0
        %699 = vmatpush2.bf16.msra.mxu0 0
        %700 = vmatprep.subr.bf16.mxu0 0
        %701 = vmatpush2.bf16.msra.mxu0 0
        %702 = vmatprep.subr.bf16.mxu0 0
        %703 = vmatpush2.bf16.msra.mxu0 0
        %704 = vmatprep.subr.bf16.mxu0 0
        %705 = vmatpush2.bf16.msra.mxu0 0
        %706 = vmatprep.subr.bf16.mxu0 0
        %707 = vmatpush2.bf16.msra.mxu0 0
        %708 = vmatprep.subr.bf16.mxu0 0
        %709 = vmatpush2.bf16.msra.mxu0 0
        %710 = vmatprep.subr.bf16.mxu0 0
        %711 = vmatpush2.bf16.msra.mxu0 0
        %712 = vmatprep.subr.bf16.mxu0 0
        %713 = vmatpush2.bf16.msra.mxu0 0
        %714 = vmatprep.mubr.bf16.mxu0 0
        %715 = vmatmul.mubr.bf16.gmra.mxu0 %v667
        %v716 = vpop.f32.mrf.mxu0
        %v717 = vadd.f32 0.0, %v716
        %v718 = vpop.f32.mrf.mxu0
        %v719 = vpop.f32.mrf.mxu0
        %v720 = vadd.f32 0.0, %v719
        %v721 = vpop.f32.mrf.mxu0
        %722 = vmatprep.mubr.bf16.mxu0 0
        %723 = vmatmul.mubr.bf16.gmra.mxu0 %v670
        %v724 = vpop.f32.mrf.mxu0
        %v725 = vadd.f32 0.0, %v724
        %v726 = vpop.f32.mrf.mxu0
        %v727 = vpop.f32.mrf.mxu0
        %v728 = vadd.f32 0.0, %v727
        %v729 = vpop.f32.mrf.mxu0
        %730 = vmatprep.mubr.bf16.mxu0 0
        %731 = vmatmul.mubr.bf16.gmra.mxu0 %v673
        %v732 = vpop.f32.mrf.mxu0
        %v733 = vadd.f32 0.0, %v732
        %v734 = vpop.f32.mrf.mxu0
        %v735 = vpop.f32.mrf.mxu0
        %v736 = vadd.f32 0.0, %v735
        %v737 = vpop.f32.mrf.mxu0
        %738 = vmatprep.mubr.bf16.mxu0 0
        %739 = vmatmul.mubr.bf16.gmra.mxu0 %v676
        %v740 = vpop.f32.mrf.mxu0
        %v741 = vadd.f32 0.0, %v740
        %v742 = vpop.f32.mrf.mxu0
        %v743 = vpop.f32.mrf.mxu0
        %v744 = vadd.f32 0.0, %v743
        %v745 = vpop.f32.mrf.mxu0
        %746 = vdwg.mxu0
        %v748 = vlaneseq
        %v749 = vshrl.u32 %v748, 7
        %v750 = vsub.s32 0, %v749
        %v751 = vrot.slane %v664, %v750
        %v753 = vadd.f32 %v751, %v717
        %v754 = vadd.f32 %v751, %v720
        %v755 = vadd.f32 %v751, %v725
        %v756 = vadd.f32 %v751, %v728
        %v757 = vadd.f32 %v751, %v733
        %v758 = vadd.f32 %v751, %v736
        %v759 = vadd.f32 %v751, %v741
        %v760 = vadd.f32 %v751, %v744
        %v761 = vld [vmem:[%s6 + $0x4] sm:$0xf]
        %v763 = vsel %vm678, %v761, 0
        %765 = vmatprep.subr.bf16.mxu0 0
        %766 = vmatpush1.bf16.msra.mxu0 0
        %767 = vmatprep.subr.bf16.mxu0 0
        %768 = vmatpush1.bf16.msra.mxu0 0
        %769 = vmatprep.subr.bf16.mxu0 0
        %770 = vmatpush1.bf16.msra.mxu0 0
        %771 = vmatprep.subr.bf16.mxu0 0
        %772 = vmatpush1.bf16.msra.mxu0 0
        %773 = vmatprep.subr.bf16.mxu0 0
        %774 = vmatpush1.bf16.msra.mxu0 0
        %775 = vmatprep.subr.bf16.mxu0 0
        %776 = vmatpush1.bf16.msra.mxu0 0
        %777 = vmatprep.subr.bf16.mxu0 0
        %778 = vmatpush1.bf16.msra.mxu0 0
        %779 = vmatprep.subr.bf16.mxu0 0
        %780 = vmatpush1.bf16.msra.mxu0 %v763
        %781 = vmatprep.subr.bf16.mxu0 0
        %782 = vmatpush2.bf16.msra.mxu0 0
        %783 = vmatprep.subr.bf16.mxu0 0
        %784 = vmatpush2.bf16.msra.mxu0 0
        %785 = vmatprep.subr.bf16.mxu0 0
        %786 = vmatpush2.bf16.msra.mxu0 0
        %787 = vmatprep.subr.bf16.mxu0 0
        %788 = vmatpush2.bf16.msra.mxu0 0
        %789 = vmatprep.subr.bf16.mxu0 0
        %790 = vmatpush2.bf16.msra.mxu0 0
        %791 = vmatprep.subr.bf16.mxu0 0
        %792 = vmatpush2.bf16.msra.mxu0 0
        %793 = vmatprep.subr.bf16.mxu0 0
        %794 = vmatpush2.bf16.msra.mxu0 0
        %795 = vmatprep.subr.bf16.mxu0 0
        %796 = vmatpush2.bf16.msra.mxu0 0
        %797 = vmatprep.mubr.bf16.mxu0 0
        %798 = vmatmul.mubr.bf16.gmra.mxu0 %v667
        %v799 = vpop.f32.mrf.mxu0
        %v800 = vadd.f32 0.0, %v799
        %v801 = vpop.f32.mrf.mxu0
        %v802 = vpop.f32.mrf.mxu0
        %v803 = vadd.f32 0.0, %v802
        %v804 = vpop.f32.mrf.mxu0
        %805 = vmatprep.mubr.bf16.mxu0 0
        %806 = vmatmul.mubr.bf16.gmra.mxu0 %v670
        %v807 = vpop.f32.mrf.mxu0
        %v808 = vadd.f32 0.0, %v807
        %v809 = vpop.f32.mrf.mxu0
        %v810 = vpop.f32.mrf.mxu0
        %v811 = vadd.f32 0.0, %v810
        %v812 = vpop.f32.mrf.mxu0
        %813 = vmatprep.mubr.bf16.mxu0 0
        %814 = vmatmul.mubr.bf16.gmra.mxu0 %v673
        %v815 = vpop.f32.mrf.mxu0
        %v816 = vadd.f32 0.0, %v815
        %v817 = vpop.f32.mrf.mxu0
        %v818 = vpop.f32.mrf.mxu0
        %v819 = vadd.f32 0.0, %v818
        %v820 = vpop.f32.mrf.mxu0
        %821 = vmatprep.mubr.bf16.mxu0 0
        %822 = vmatmul.mubr.bf16.gmra.mxu0 %v676
        %v823 = vpop.f32.mrf.mxu0
        %v824 = vadd.f32 0.0, %v823
        %v825 = vpop.f32.mrf.mxu0
        %v826 = vpop.f32.mrf.mxu0
        %v827 = vadd.f32 0.0, %v826
        %v828 = vpop.f32.mrf.mxu0
        %829 = vdwg.mxu0
        %v830 = vadd.f32 %v753, %v800
        %v831 = vadd.f32 %v754, %v803
        %v832 = vadd.f32 %v755, %v808
        %v833 = vadd.f32 %v756, %v811
        %v834 = vadd.f32 %v757, %v816
        %v835 = vadd.f32 %v758, %v819
        %v836 = vadd.f32 %v759, %v824
        %v837 = vadd.f32 %v760, %v827
        %838 = vst.msk [vmem:[%s353] sm:$0xff] %vm602, %v830
        %839 = vst.msk [vmem:[%s353 + $0x8] sm:$0xff] %vm602, %v831
        %840 = vst.msk [vmem:[%s353 + $0x10] sm:$0xff] %vm602, %v832
        %841 = vst.msk [vmem:[%s353 + $0x18] sm:$0xff] %vm602, %v833
        %842 = vst.msk [vmem:[%s353 + $0x20] sm:$0xff] %vm602, %v834
        %843 = vst.msk [vmem:[%s353 + $0x28] sm:$0xff] %vm602, %v835
        %844 = vst.msk [vmem:[%s353 + $0x30] sm:$0xff] %vm602, %v836
        %845 = vst.msk [vmem:[%s353 + $0x38] sm:$0xff] %vm602, %v837
        %s846 = sand.u32 %s213, 1
        %s847 = scalar_lea.sflag [#allocation3], %s846
        %s848 = sand.u32 %s213, 1
        %s849 = smul.addr %s848, 64
        %s850 = scalar_lea.vmem [#allocation2], %s849
        %s851 = sand.u32 %s239, 1
        %s852 = scalar_lea.sflag [#allocation5], %s851
        %s853 = sand.u32 %s239, 1
        %s854 = smul.addr %s853, 64
        %s855 = scalar_lea.vmem [#allocation4], %s854
        // Predicated region
        $region53: #{_lambda_.11} parent=51 // pred_check
          %p856 = pneg %p223
        $region54: #{_lambda_.11} parent=51 // pred_check_branch
          %858 = sbr.rel (%p856) target = $region56
        $region55: #{_lambda_.11} parent=51 // pred_region
          %s859 = smul.u32 8, %s27
          %s861 = ssub.s32 1024, 1024
          %862 = vsyncadd %s847, %s861
          %s863 = smul.addr %s859, 128
          %s864 = scalar_lea.hbm %s8, %s863
          %s865 = sshll.u32 %s850, 4
          %s866 = int_to_ptr.vmem [resolvable:$true] %s865
          %871 = dma.vmem_to_hbm [thread:$0]  %s866, 1024, %s864, %s847, 128, 128, 8
        $region56: #{_lambda_.11} parent=51 // pred_fallthru
          _
        // Predicated region
        $region57: #{_lambda_.11} parent=51 // pred_check
          %p872 = pneg %p249
        $region58: #{_lambda_.11} parent=51 // pred_check_branch
          %874 = sbr.rel (%p872) target = $region60
        $region59: #{_lambda_.11} parent=51 // pred_region
          %s875 = smul.u32 8, %s27
          %s877 = ssub.s32 1024, 1024
          %878 = vsyncadd %s852, %s877
          %s879 = smul.addr %s875, 128
          %s880 = scalar_lea.hbm %s9, %s879
          %s881 = sshll.u32 %s855, 4
          %s882 = int_to_ptr.vmem [resolvable:$true] %s881
          %887 = dma.vmem_to_hbm [thread:$0]  %s882, 1024, %s880, %s852, 128, 128, 8
        $region60: #{_lambda_.11} parent=51 // pred_fallthru
          _
      $region52: #{_lambda_.11} parent=5 // pred_fallthru
        _
      %p888 = scmp.le.s32.totalorder 2, %s22
      // Predicated region
      $region61: #{_lambda_.11} parent=5 // pred_check
        %p889 = pneg %p888
      $region62: #{_lambda_.11} parent=5 // pred_check_branch
        %891 = sbr.rel (%p889) target = $region64
      $region63: #{_lambda_.11} parent=5 // pred_region
        %s892 = ssub.s32 %s22, 2
        // Predicated region
        $region65: #{_lambda_.11} parent=63 // pred_check
          %p893 = pneg %p229
        $region66: #{_lambda_.11} parent=63 // pred_check_branch
          %895 = sbr.rel (%p893) target = $region68
        $region67: #{_lambda_.11} parent=63 // pred_region
          %s896 = sand.u32 %s214, 1
          %s897 = scalar_lea.sflag [#allocation3], %s896
          %s898 = sand.u32 %s214, 1
          %s899 = smul.addr %s898, 64
          %s900 = scalar_lea.vmem [#allocation2], %s899
          %901 = dma.done %s897, 1024
        $region68: #{_lambda_.11} parent=63 // pred_fallthru
          _
        // Predicated region
        $region69: #{_lambda_.11} parent=63 // pred_check
          %p902 = pneg %p255
        $region70: #{_lambda_.11} parent=63 // pred_check_branch
          %904 = sbr.rel (%p902) target = $region72
        $region71: #{_lambda_.11} parent=63 // pred_region
          %s905 = sand.u32 %s240, 1
          %s906 = scalar_lea.sflag [#allocation5], %s905
          %s907 = sand.u32 %s240, 1
          %s908 = smul.addr %s907, 64
          %s909 = scalar_lea.vmem [#allocation4], %s908
          %910 = dma.done %s906, 1024
        $region72: #{_lambda_.11} parent=63 // pred_fallthru
          _
      $region64: #{_lambda_.11} parent=5 // pred_fallthru
        _
    $region6: #{_lambda_.11} parent=1 // loop_footer
      %s26 = sadd.s32 1, %s22
    $region7: #{_lambda_.11} parent=1 // loop_footer_branch
      %21 = sbr.rel target = $region3
    $region8: #{_lambda_.11} parent=1 // loop_exit
      _
    %911 = vsyncpa [#allocation3], 1
    %s912 = scalar_lea.sflag [#allocation3], 1
    %913 = vsyncpa %s912, 1
    %914 = vsyncpa [#allocation5], 1
    %s915 = scalar_lea.sflag [#allocation5], 1
    %916 = vsyncpa %s915, 1

// kernel: _lambda_.10
$region0: #{_lambda_.10}
  #allocation0 [shape = 'u32[]', space=smem, size = 0x4, offset = 0x4, fixed_abs, tag = 'smem constant byte address 0x4 - core index']
  #allocation1 [shape = 'u32[144,128]{1,0:T(1,128)}', space=vmem, size = 0x12000, scoped, tag = 'internal scratch']
  %s0 = inlined_call_operand.vmem [shape: f32[128,128], index: 0, kind: input, shape index: {}]
  %s1 = inlined_call_operand.vmem [shape: f32[128,16], index: 1, kind: input, shape index: {}]
  %s2 = inlined_call_operand.vmem [shape: bf16[128,8], index: 2, kind: input, shape index: {}]
  %s3 = inlined_call_operand.vmem [shape: f32[1,8], index: 3, kind: input, shape index: {}, may-alias: {3,5,7}]
  %s4 = inlined_call_operand.vmem [shape: bf16[16,8], index: 4, kind: input, shape index: {}]
  %s5 = inlined_call_operand.vmem [shape: f32[1,8], index: 5, kind: input, shape index: {}, may-alias: {3,5,7}]
  %s6 = inlined_call_operand.vmem [shape: bf16[16,8], index: 6, kind: input, shape index: {}]
  %s7 = inlined_call_operand.vmem [shape: f32[1,8], index: 7, kind: input, shape index: {}, may-alias: {3,5,7}]
  %s8 = inlined_call_operand.vmem [shape: f32[128,16], index: 8, kind: output, shape index: {0}]
  %s9 = inlined_call_operand.hbm [shape: f32[128,8], index: 9, kind: output, shape index: {1}]
  %10 = xla_tuple %s8, %s9
  %s11 = sld [smem:[#allocation0]]
  $region73: #{_lambda_.10} parent=0
    _
  %s13 = ssub.s32 1, %s11
  %s14 = scalar_select 0, %s13, %s11
  $region1: #{_lambda_.10} parent=0
    #allocation2 [shape = 'u8[65536]{0}', space=vmem, size = 0x10000, scoped, tag = 'output window, operand 1']
    #allocation3 [shape = 's32[2]{0}', space=sflag, size = 0x8, scoped, tag = 'scoped memory for _lambda_.10']
    %15 = vsyncpa [#allocation3], 0
    %s16 = scalar_lea.sflag [#allocation3], 1
    %17 = vsyncpa %s16, 0
    loop: start=0, step=1, limit=4
    $region2: #{_lambda_.10} parent=1 // loop_pre_header
      _
    $region3: #{_lambda_.10} parent=1 // loop_header
      %s19 = sphi 0, %s23
      %p20 = scmp.ge.s32.totalorder %s19, 4
      %s29 = sphi 0, %s31
      %s32 = sphi 0, %s29
      %s33 = sphi 0, %s32
      %s49 = sphi 0, %s33
      %s55 = sphi 0, %s57
      %s58 = sphi 0, %s55
      %s59 = sphi 0, %s58
      %s75 = sphi 0, %s59
      %s79 = sphi 0, %s79
      %s81 = sphi 0, %s79
      %s82 = sphi 0, %s81
      %s96 = sphi 0, %s82
      %s100 = sphi 0, %s100
      %s102 = sphi 0, %s100
      %s103 = sphi 0, %s102
      %s117 = sphi 0, %s103
      %s121 = sphi 0, %s121
      %s123 = sphi 0, %s121
      %s124 = sphi 0, %s123
      %s138 = sphi 0, %s124
      %s142 = sphi 0, %s142
      %s144 = sphi 0, %s142
      %s145 = sphi 0, %s144
      %s159 = sphi 0, %s145
      %s163 = sphi 0, %s163
      %s165 = sphi 0, %s163
      %s166 = sphi 0, %s165
      %s180 = sphi 0, %s166
      %s184 = sphi 0, %s184
      %s186 = sphi 0, %s184
      %s187 = sphi 0, %s186
      %s201 = sphi 0, %s187
      %s207 = sphi 0, %s209
      %s210 = sphi 0, %s207
      %s211 = sphi 0, %s210
      %s227 = sphi 0, %s211
      %s233 = sphi 0, %s235
      %s236 = sphi 0, %s233
      %s237 = sphi 0, %s236
      %s253 = sphi 0, %s237
    $region4: #{_lambda_.10} parent=1 // loop_header_branch
      %22 = sbr.rel (%p20) target = $region8
    $region5: #{_lambda_.10} parent=1 // loop_body
      %s24 = ssub.s32 %s19, 1
      %s25 = ssub.s32 %s19, 2
      %s26 = sadd.s32 %s19, 1
      %s27 = ssub.s32 %s19, %s26
      %p28 = scmp.eq.s32.totalorder %s27, 0
      %s30 = sadd.s32 %s29, 1
      %s31 = scalar_select %p28, %s29, %s30
      %p34 = pneg %p28
      %p35 = scmp.eq.s32.totalorder %s19, 1
      %p36 = por %p34, %p35
      %p37 = scmp.ne.s32.totalorder %s29, %s32
      %p38 = scmp.eq.s32.totalorder %s19, 0
      %p39 = por %p37, %p38
      %p40 = scmp.ne.s32.totalorder %s29, %s32
      %p41 = scmp.eq.s32.totalorder %s24, 1
      %p42 = por %p40, %p41
      %p43 = scmp.ne.s32.totalorder %s32, %s33
      %p44 = scmp.eq.s32.totalorder %s24, 0
      %p45 = por %p43, %p44
      %p46 = scmp.ne.s32.totalorder %s32, %s33
      %p47 = scmp.eq.s32.totalorder %s25, 1
      %p48 = por %p46, %p47
      %p50 = scmp.ne.s32.totalorder %s33, %s49
      %p51 = scmp.eq.s32.totalorder %s25, 0
      %p52 = por %p50, %p51
      %s53 = ssub.s32 %s19, %s26
      %p54 = scmp.eq.s32.totalorder %s53, 0
      %s56 = sadd.s32 %s55, 1
      %s57 = scalar_select %p54, %s55, %s56
      %p60 = pneg %p54
      %p61 = scmp.eq.s32.totalorder %s19, 1
      %p62 = por %p60, %p61
      %p63 = scmp.ne.s32.totalorder %s55, %s58
      %p64 = scmp.eq.s32.totalorder %s19, 0
      %p65 = por %p63, %p64
      %p66 = scmp.ne.s32.totalorder %s55, %s58
      %p67 = scmp.eq.s32.totalorder %s24, 1
      %p68 = por %p66, %p67
      %p69 = scmp.ne.s32.totalorder %s58, %s59
      %p70 = scmp.eq.s32.totalorder %s24, 0
      %p71 = por %p69, %p70
      %p72 = scmp.ne.s32.totalorder %s58, %s59
      %p73 = scmp.eq.s32.totalorder %s25, 1
      %p74 = por %p72, %p73
      %p76 = scmp.ne.s32.totalorder %s59, %s75
      %p77 = scmp.eq.s32.totalorder %s25, 0
      %p78 = por %p76, %p77
      %s80 = sadd.s32 %s79, 1
      %p83 = scmp.eq.s32.totalorder %s19, 1
      %p84 = scmp.ne.s32.totalorder %s79, %s81
      %p85 = scmp.eq.s32.totalorder %s19, 0
      %p86 = por %p84, %p85
      %p87 = scmp.ne.s32.totalorder %s79, %s81
      %p88 = scmp.eq.s32.totalorder %s24, 1
      %p89 = por %p87, %p88
      %p90 = scmp.ne.s32.totalorder %s81, %s82
      %p91 = scmp.eq.s32.totalorder %s24, 0
      %p92 = por %p90, %p91
      %p93 = scmp.ne.s32.totalorder %s81, %s82
      %p94 = scmp.eq.s32.totalorder %s25, 1
      %p95 = por %p93, %p94
      %p97 = scmp.ne.s32.totalorder %s82, %s96
      %p98 = scmp.eq.s32.totalorder %s25, 0
      %p99 = por %p97, %p98
      %s101 = sadd.s32 %s100, 1
      %p104 = scmp.eq.s32.totalorder %s19, 1
      %p105 = scmp.ne.s32.totalorder %s100, %s102
      %p106 = scmp.eq.s32.totalorder %s19, 0
      %p107 = por %p105, %p106
      %p108 = scmp.ne.s32.totalorder %s100, %s102
      %p109 = scmp.eq.s32.totalorder %s24, 1
      %p110 = por %p108, %p109
      %p111 = scmp.ne.s32.totalorder %s102, %s103
      %p112 = scmp.eq.s32.totalorder %s24, 0
      %p113 = por %p111, %p112
      %p114 = scmp.ne.s32.totalorder %s102, %s103
      %p115 = scmp.eq.s32.totalorder %s25, 1
      %p116 = por %p114, %p115
      %p118 = scmp.ne.s32.totalorder %s103, %s117
      %p119 = scmp.eq.s32.totalorder %s25, 0
      %p120 = por %p118, %p119
      %s122 = sadd.s32 %s121, 1
      %p125 = scmp.eq.s32.totalorder %s19, 1
      %p126 = scmp.ne.s32.totalorder %s121, %s123
      %p127 = scmp.eq.s32.totalorder %s19, 0
      %p128 = por %p126, %p127
      %p129 = scmp.ne.s32.totalorder %s121, %s123
      %p130 = scmp.eq.s32.totalorder %s24, 1
      %p131 = por %p129, %p130
      %p132 = scmp.ne.s32.totalorder %s123, %s124
      %p133 = scmp.eq.s32.totalorder %s24, 0
      %p134 = por %p132, %p133
      %p135 = scmp.ne.s32.totalorder %s123, %s124
      %p136 = scmp.eq.s32.totalorder %s25, 1
      %p137 = por %p135, %p136
      %p139 = scmp.ne.s32.totalorder %s124, %s138
      %p140 = scmp.eq.s32.totalorder %s25, 0
      %p141 = por %p139, %p140
      %s143 = sadd.s32 %s142, 1
      %p146 = scmp.eq.s32.totalorder %s19, 1
      %p147 = scmp.ne.s32.totalorder %s142, %s144
      %p148 = scmp.eq.s32.totalorder %s19, 0
      %p149 = por %p147, %p148
      %p150 = scmp.ne.s32.totalorder %s142, %s144
      %p151 = scmp.eq.s32.totalorder %s24, 1
      %p152 = por %p150, %p151
      %p153 = scmp.ne.s32.totalorder %s144, %s145
      %p154 = scmp.eq.s32.totalorder %s24, 0
      %p155 = por %p153, %p154
      %p156 = scmp.ne.s32.totalorder %s144, %s145
      %p157 = scmp.eq.s32.totalorder %s25, 1
      %p158 = por %p156, %p157
      %p160 = scmp.ne.s32.totalorder %s145, %s159
      %p161 = scmp.eq.s32.totalorder %s25, 0
      %p162 = por %p160, %p161
      %s164 = sadd.s32 %s163, 1
      %p167 = scmp.eq.s32.totalorder %s19, 1
      %p168 = scmp.ne.s32.totalorder %s163, %s165
      %p169 = scmp.eq.s32.totalorder %s19, 0
      %p170 = por %p168, %p169
      %p171 = scmp.ne.s32.totalorder %s163, %s165
      %p172 = scmp.eq.s32.totalorder %s24, 1
      %p173 = por %p171, %p172
      %p174 = scmp.ne.s32.totalorder %s165, %s166
      %p175 = scmp.eq.s32.totalorder %s24, 0
      %p176 = por %p174, %p175
      %p177 = scmp.ne.s32.totalorder %s165, %s166
      %p178 = scmp.eq.s32.totalorder %s25, 1
      %p179 = por %p177, %p178
      %p181 = scmp.ne.s32.totalorder %s166, %s180
      %p182 = scmp.eq.s32.totalorder %s25, 0
      %p183 = por %p181, %p182
      %s185 = sadd.s32 %s184, 1
      %p188 = scmp.eq.s32.totalorder %s19, 1
      %p189 = scmp.ne.s32.totalorder %s184, %s186
      %p190 = scmp.eq.s32.totalorder %s19, 0
      %p191 = por %p189, %p190
      %p192 = scmp.ne.s32.totalorder %s184, %s186
      %p193 = scmp.eq.s32.totalorder %s24, 1
      %p194 = por %p192, %p193
      %p195 = scmp.ne.s32.totalorder %s186, %s187
      %p196 = scmp.eq.s32.totalorder %s24, 0
      %p197 = por %p195, %p196
      %p198 = scmp.ne.s32.totalorder %s186, %s187
      %p199 = scmp.eq.s32.totalorder %s25, 1
      %p200 = por %p198, %p199
      %p202 = scmp.ne.s32.totalorder %s187, %s201
      %p203 = scmp.eq.s32.totalorder %s25, 0
      %p204 = por %p202, %p203
      %s205 = ssub.s32 %s19, %s26
      %p206 = scmp.eq.s32.totalorder %s205, 0
      %s208 = sadd.s32 %s207, 1
      %s209 = scalar_select %p206, %s207, %s208
      %p212 = pneg %p206
      %p213 = scmp.eq.s32.totalorder %s19, 1
      %p214 = por %p212, %p213
      %p215 = scmp.ne.s32.totalorder %s207, %s210
      %p216 = scmp.eq.s32.totalorder %s19, 0
      %p217 = por %p215, %p216
      %p218 = scmp.ne.s32.totalorder %s207, %s210
      %p219 = scmp.eq.s32.totalorder %s24, 1
      %p220 = por %p218, %p219
      %p221 = scmp.ne.s32.totalorder %s210, %s211
      %p222 = scmp.eq.s32.totalorder %s24, 0
      %p223 = por %p221, %p222
      %p224 = scmp.ne.s32.totalorder %s210, %s211
      %p225 = scmp.eq.s32.totalorder %s25, 1
      %p226 = por %p224, %p225
      %p228 = scmp.ne.s32.totalorder %s211, %s227
      %p229 = scmp.eq.s32.totalorder %s25, 0
      %p230 = por %p228, %p229
      %s231 = ssub.s32 %s19, %s26
      %p232 = scmp.eq.s32.totalorder %s231, 0
      %s234 = sadd.s32 %s233, 1
      %s235 = scalar_select %p232, %s233, %s234
      %p238 = pneg %p232
      %p239 = scmp.eq.s32.totalorder %s19, 1
      %p240 = por %p238, %p239
      %p241 = scmp.ne.s32.totalorder %s233, %s236
      %p242 = scmp.eq.s32.totalorder %s19, 0
      %p243 = por %p241, %p242
      %p244 = scmp.ne.s32.totalorder %s233, %s236
      %p245 = scmp.eq.s32.totalorder %s24, 1
      %p246 = por %p244, %p245
      %p247 = scmp.ne.s32.totalorder %s236, %s237
      %p248 = scmp.eq.s32.totalorder %s24, 0
      %p249 = por %p247, %p248
      %p250 = scmp.ne.s32.totalorder %s236, %s237
      %p251 = scmp.eq.s32.totalorder %s25, 1
      %p252 = por %p250, %p251
      %p254 = scmp.ne.s32.totalorder %s237, %s253
      %p255 = scmp.eq.s32.totalorder %s25, 0
      %p256 = por %p254, %p255
      %p257 = scmp.le.s32.totalorder 1, %s19
      %p258 = scmp.lt.s32.totalorder %s19, 3
      %p259 = pnand %p257, %p258
      %p260 = pneg %p259
      // Predicated region
      $region9: #{_lambda_.10} parent=5 // pred_check
        _
      $region10: #{_lambda_.10} parent=5 // pred_check_branch
        %262 = sbr.rel (%p259) target = $region12
      $region11: #{_lambda_.10} parent=5 // pred_region
        %s263 = ssub.s32 %s19, 1
        // Predicated region
        $region13: #{_lambda_.10} parent=11 // pred_check
          %p264 = pneg %p92
        $region14: #{_lambda_.10} parent=11 // pred_check_branch
          %266 = sbr.rel (%p264) target = $region16
        $region15: #{_lambda_.10} parent=11 // pred_region
          _
        $region16: #{_lambda_.10} parent=11 // pred_fallthru
          _
        // Predicated region
        $region17: #{_lambda_.10} parent=11 // pred_check
          %p267 = pneg %p113
        $region18: #{_lambda_.10} parent=11 // pred_check_branch
          %269 = sbr.rel (%p267) target = $region20
        $region19: #{_lambda_.10} parent=11 // pred_region
          _
        $region20: #{_lambda_.10} parent=11 // pred_fallthru
          _
        // Predicated region
        $region21: #{_lambda_.10} parent=11 // pred_check
          %p270 = pneg %p134
        $region22: #{_lambda_.10} parent=11 // pred_check_branch
          %272 = sbr.rel (%p270) target = $region24
        $region23: #{_lambda_.10} parent=11 // pred_region
          _
        $region24: #{_lambda_.10} parent=11 // pred_fallthru
          _
        // Predicated region
        $region25: #{_lambda_.10} parent=11 // pred_check
          %p273 = pneg %p155
        $region26: #{_lambda_.10} parent=11 // pred_check_branch
          %275 = sbr.rel (%p273) target = $region28
        $region27: #{_lambda_.10} parent=11 // pred_region
          _
        $region28: #{_lambda_.10} parent=11 // pred_fallthru
          _
        // Predicated region
        $region29: #{_lambda_.10} parent=11 // pred_check
          %p276 = pneg %p176
        $region30: #{_lambda_.10} parent=11 // pred_check_branch
          %278 = sbr.rel (%p276) target = $region32
        $region31: #{_lambda_.10} parent=11 // pred_region
          _
        $region32: #{_lambda_.10} parent=11 // pred_fallthru
          _
        // Predicated region
        $region33: #{_lambda_.10} parent=11 // pred_check
          %p279 = pneg %p197
        $region34: #{_lambda_.10} parent=11 // pred_check_branch
          %281 = sbr.rel (%p279) target = $region36
        $region35: #{_lambda_.10} parent=11 // pred_region
          _
        $region36: #{_lambda_.10} parent=11 // pred_fallthru
          _
      $region12: #{_lambda_.10} parent=5 // pred_fallthru
        _
      %p282 = scmp.lt.s32.totalorder %s19, 2
      // Predicated region
      $region37: #{_lambda_.10} parent=5 // pred_check
        %p283 = pneg %p282
      $region38: #{_lambda_.10} parent=5 // pred_check_branch
        %285 = sbr.rel (%p283) target = $region40
      $region39: #{_lambda_.10} parent=5 // pred_region
        // Predicated region
        $region41: #{_lambda_.10} parent=39 // pred_check
          %p286 = pneg %p39
        $region42: #{_lambda_.10} parent=39 // pred_check_branch
          %288 = sbr.rel (%p286) target = $region44
        $region43: #{_lambda_.10} parent=39 // pred_region
          %s289 = smul.u32 8, %s19
          %p290 = scmp.lt.s32.totalorder %s289, 15
          %s291 = scalar_select %p290, %s289, 15
          %s292 = smul.addr %s291, 8
          %s293 = scalar_lea.vmem %s0, %s292
          %s294 = smul.u32 8, %s19
        $region44: #{_lambda_.10} parent=39 // pred_fallthru
          _
        // Predicated region
        $region45: #{_lambda_.10} parent=39 // pred_check
          %p295 = pneg %p65
        $region46: #{_lambda_.10} parent=39 // pred_check_branch
          %297 = sbr.rel (%p295) target = $region48
        $region47: #{_lambda_.10} parent=39 // pred_region
          %s298 = smul.u32 8, %s19
          %p299 = scmp.lt.s32.totalorder %s298, 15
          %s300 = scalar_select %p299, %s298, 15
          %s301 = smul.addr %s300, 8
          %s302 = scalar_lea.vmem %s1, %s301
          %s303 = smul.u32 8, %s19
        $region48: #{_lambda_.10} parent=39 // pred_fallthru
          _
      $region40: #{_lambda_.10} parent=5 // pred_fallthru
        _
      %p304 = scmp.le.s32.totalorder 1, %s19
      %p305 = scmp.lt.s32.totalorder %s19, 3
      %p306 = pnand %p304, %p305
      %p307 = pneg %p306
      // Predicated region
      $region49: #{_lambda_.10} parent=5 // pred_check
        _
      $region50: #{_lambda_.10} parent=5 // pred_check_branch
        %309 = sbr.rel (%p306) target = $region52
      $region51: #{_lambda_.10} parent=5 // pred_region
        %s310 = ssub.s32 %s19, 1
        %s311 = smul.u32 8, %s24
        %p312 = scmp.lt.s32.totalorder %s311, 15
        %s313 = scalar_select %p312, %s311, 15
        %s314 = smul.addr %s313, 8
        %s315 = scalar_lea.vmem %s0, %s314
        %p316 = pneg %p45
        %p317 = pneg %p42
        %s318 = smul.u32 8, %s24
        %p319 = scmp.lt.s32.totalorder %s318, 15
        %s320 = scalar_select %p319, %s318, 15
        %s321 = smul.addr %s320, 8
        %s322 = scalar_lea.vmem %s1, %s321
        %p323 = pneg %p71
        %p324 = pneg %p68
        %p325 = pneg %p92
        %p326 = pneg %p89
        %p327 = pneg %p113
        %p328 = pneg %p110
        %p329 = pneg %p134
        %p330 = pneg %p131
        %p331 = pneg %p155
        %p332 = pneg %p152
        %p333 = pneg %p176
        %p334 = pneg %p173
        %p335 = pneg %p197
        %p336 = pneg %p194
        %p337 = pneg %p223
        %p338 = pneg %p220
        %s339 = smul.u32 8, %s24
        %p340 = scmp.lt.s32.totalorder %s339, 15
        %s341 = scalar_select %p340, %s339, 15
        %s342 = smul.addr %s341, 8
        %s343 = scalar_lea.vmem %s8, %s342
        %p344 = pneg %p249
        %p345 = pneg %p246
        %s346 = sand.u32 %s236, 1
        %s347 = scalar_lea.sflag [#allocation3], %s346
        %s348 = sand.u32 %s236, 1
        %s349 = smul.addr %s348, 64
        %s350 = scalar_lea.vmem [#allocation2], %s349
        %s351 = smul.u32 8, %s24
        %p352 = scmp.lt.s32.totalorder %s351, 15
        %s353 = scalar_select %p352, %s351, 15
        %s354 = smul.addr %s353, 8
        %s355 = scalar_lea.vmem %s0, %s354
        %s356 = smul.u32 8, %s24
        %s357 = smul.u32 8, %s24
        %p358 = scmp.lt.s32.totalorder %s357, 15
        %s359 = scalar_select %p358, %s357, 15
        %s360 = smul.addr %s359, 8
        %s361 = scalar_lea.vmem %s1, %s360
        %s362 = smul.u32 8, %s24
        %s363 = smul.u32 8, %s24
        %p364 = scmp.lt.s32.totalorder %s363, 15
        %s365 = scalar_select %p364, %s363, 15
        %s366 = smul.addr %s365, 8
        %s367 = scalar_lea.vmem %s8, %s366
        %s368 = smul.u32 8, %s24
        %s369 = smul.u32 8, %s24
        %v371 = vld [vmem:[%s355] sm:$0xff]
        %v372 = vld [vmem:[%s355 + $0x8] sm:$0xff]
        %v373 = vld [vmem:[%s355 + $0x10] sm:$0xff]
        %v374 = vld [vmem:[%s355 + $0x18] sm:$0xff]
        %v375 = vld [vmem:[%s355 + $0x20] sm:$0xff]
        %v376 = vld [vmem:[%s355 + $0x28] sm:$0xff]
        %v377 = vld [vmem:[%s355 + $0x30] sm:$0xff]
        %v378 = vld [vmem:[%s355 + $0x38] sm:$0xff]
        %v379 = vmax.f32 %v371, 0.0
        %v380 = vmax.f32 %v372, 0.0
        %v381 = vmax.f32 %v373, 0.0
        %v382 = vmax.f32 %v374, 0.0
        %v383 = vmax.f32 %v375, 0.0
        %v384 = vmax.f32 %v376, 0.0
        %v385 = vmax.f32 %v377, 0.0
        %v386 = vmax.f32 %v378, 0.0
        %v387 = vpack.c.bf16 %v380, %v379
        %v388 = vpack.c.bf16 %v382, %v381
        %v389 = vpack.c.bf16 %v384, %v383
        %v390 = vpack.c.bf16 %v386, %v385
        %v391 = vld [vmem:[%s361] sm:$0xff]
        %v392 = vld [vmem:[%s361 + $0x8] sm:$0xff]
        %v393 = vld [vmem:[%s361 + $0x10] sm:$0xff]
        %v394 = vld [vmem:[%s361 + $0x18] sm:$0xff]
        %v395 = vld [vmem:[%s361 + $0x20] sm:$0xff]
        %v396 = vld [vmem:[%s361 + $0x28] sm:$0xff]
        %v397 = vld [vmem:[%s361 + $0x30] sm:$0xff]
        %v398 = vld [vmem:[%s361 + $0x38] sm:$0xff]
        %v399 = vmax.f32 %v391, 0.0
        %v400 = vmax.f32 %v392, 0.0
        %v401 = vmax.f32 %v393, 0.0
        %v402 = vmax.f32 %v394, 0.0
        %v403 = vmax.f32 %v395, 0.0
        %v404 = vmax.f32 %v396, 0.0
        %v405 = vmax.f32 %v397, 0.0
        %v406 = vmax.f32 %v398, 0.0
        %v407 = vpack.c.bf16 %v400, %v399
        %v408 = vpack.c.bf16 %v402, %v401
        %v409 = vpack.c.bf16 %v404, %v403
        %v410 = vpack.c.bf16 %v406, %v405
        %v411 = vld [vmem:[%s2] sm:$0xf]
        %v412 = vld [vmem:[%s2 + $0x4] sm:$0xf]
        %v413 = vld [vmem:[%s2 + $0x8] sm:$0xf]
        %v414 = vld [vmem:[%s2 + $0xc] sm:$0xf]
        %v415 = vld [vmem:[%s2 + $0x10] sm:$0xf]
        %v416 = vld [vmem:[%s2 + $0x14] sm:$0xf]
        %v417 = vld [vmem:[%s2 + $0x18] sm:$0xf]
        %v418 = vld [vmem:[%s2 + $0x1c] sm:$0xf]
        %v419 = vld [vmem:[%s2 + $0x20] sm:$0xf]
        %v420 = vld [vmem:[%s2 + $0x24] sm:$0xf]
        %v421 = vld [vmem:[%s2 + $0x28] sm:$0xf]
        %v422 = vld [vmem:[%s2 + $0x2c] sm:$0xf]
        %v423 = vld [vmem:[%s2 + $0x30] sm:$0xf]
        %v424 = vld [vmem:[%s2 + $0x34] sm:$0xf]
        %v425 = vld [vmem:[%s2 + $0x38] sm:$0xf]
        %v426 = vld [vmem:[%s2 + $0x3c] sm:$0xf]
        %v427 = vld [vmem:[%s3] sm:$0x1]
        %v429 = vlaneseq
        %v430 = vshrl.u32 %v429, 7
        %v431 = vsub.s32 0, %v430
        %v432 = vrot.slane %v427, %v431
        %v450 = vunpack.c.l.b16 %v411
        %v451 = vunpack.c.l.b16 %v412
        %v452 = vunpack.c.l.b16 %v413
        %v453 = vunpack.c.l.b16 %v414
        %v454 = vunpack.c.l.b16 %v415
        %v455 = vunpack.c.l.b16 %v416
        %v456 = vunpack.c.l.b16 %v417
        %v457 = vunpack.c.l.b16 %v418
        %v458 = vunpack.c.l.b16 %v419
        %v459 = vunpack.c.l.b16 %v420
        %v460 = vunpack.c.l.b16 %v421
        %v461 = vunpack.c.l.b16 %v422
        %v462 = vunpack.c.l.b16 %v423
        %v463 = vunpack.c.l.b16 %v424
        %v464 = vunpack.c.l.b16 %v425
        %v465 = vunpack.c.l.b16 %v426
        %v466 = vpack.c.b16 %v451, %v450
        %v467 = vpack.c.b16 %v453, %v452
        %v468 = vpack.c.b16 %v455, %v454
        %v469 = vpack.c.b16 %v457, %v456
        %v470 = vpack.c.b16 %v459, %v458
        %v471 = vpack.c.b16 %v461, %v460
        %v472 = vpack.c.b16 %v463, %v462
        %v473 = vpack.c.b16 %v465, %v464
        %482 = vmatprep.subr.bf16.mxu0 0
        %483 = vmatpush1.bf16.msra.mxu0 %v473
        %484 = vmatprep.subr.bf16.mxu0 0
        %485 = vmatpush1.bf16.msra.mxu0 %v472
        %486 = vmatprep.subr.bf16.mxu0 0
        %487 = vmatpush1.bf16.msra.mxu0 %v471
        %488 = vmatprep.subr.bf16.mxu0 0
        %489 = vmatpush1.bf16.msra.mxu0 %v470
        %490 = vmatprep.subr.bf16.mxu0 0
        %491 = vmatpush1.bf16.msra.mxu0 %v469
        %492 = vmatprep.subr.bf16.mxu0 0
        %493 = vmatpush1.bf16.msra.mxu0 %v468
        %494 = vmatprep.subr.bf16.mxu0 0
        %495 = vmatpush1.bf16.msra.mxu0 %v467
        %496 = vmatprep.subr.bf16.mxu0 0
        %497 = vmatpush1.bf16.msra.mxu0 %v466
        %498 = vmatprep.subr.bf16.mxu0 0
        %499 = vmatpush2.bf16.msra.mxu0 0
        %500 = vmatprep.subr.bf16.mxu0 0
        %501 = vmatpush2.bf16.msra.mxu0 0
        %502 = vmatprep.subr.bf16.mxu0 0
        %503 = vmatpush2.bf16.msra.mxu0 0
        %504 = vmatprep.subr.bf16.mxu0 0
        %505 = vmatpush2.bf16.msra.mxu0 0
        %506 = vmatprep.subr.bf16.mxu0 0
        %507 = vmatpush2.bf16.msra.mxu0 0
        %508 = vmatprep.subr.bf16.mxu0 0
        %509 = vmatpush2.bf16.msra.mxu0 0
        %510 = vmatprep.subr.bf16.mxu0 0
        %511 = vmatpush2.bf16.msra.mxu0 0
        %512 = vmatprep.subr.bf16.mxu0 0
        %513 = vmatpush2.bf16.msra.mxu0 0
        %514 = vmatprep.mubr.bf16.mxu0 0
        %515 = vmatmul.mubr.bf16.gmra.mxu0 %v387
        %v516 = vpop.f32.mrf.mxu0
        %v517 = vadd.f32 %v432, %v516
        %v518 = vpop.f32.mrf.mxu0
        %v519 = vpop.f32.mrf.mxu0
        %v520 = vadd.f32 %v432, %v519
        %v521 = vpop.f32.mrf.mxu0
        %522 = vmatprep.mubr.bf16.mxu0 0
        %523 = vmatmul.mubr.bf16.gmra.mxu0 %v388
        %v524 = vpop.f32.mrf.mxu0
        %v525 = vadd.f32 %v432, %v524
        %v526 = vpop.f32.mrf.mxu0
        %v527 = vpop.f32.mrf.mxu0
        %v528 = vadd.f32 %v432, %v527
        %v529 = vpop.f32.mrf.mxu0
        %530 = vmatprep.mubr.bf16.mxu0 0
        %531 = vmatmul.mubr.bf16.gmra.mxu0 %v389
        %v532 = vpop.f32.mrf.mxu0
        %v533 = vadd.f32 %v432, %v532
        %v534 = vpop.f32.mrf.mxu0
        %v535 = vpop.f32.mrf.mxu0
        %v536 = vadd.f32 %v432, %v535
        %v537 = vpop.f32.mrf.mxu0
        %538 = vmatprep.mubr.bf16.mxu0 0
        %539 = vmatmul.mubr.bf16.gmra.mxu0 %v390
        %v540 = vpop.f32.mrf.mxu0
        %v541 = vadd.f32 %v432, %v540
        %v542 = vpop.f32.mrf.mxu0
        %v543 = vpop.f32.mrf.mxu0
        %v544 = vadd.f32 %v432, %v543
        %v545 = vpop.f32.mrf.mxu0
        %546 = vdwg.mxu0
        %v547 = vld [vmem:[%s4] sm:$0xf]
        %v548 = vld [vmem:[%s4 + $0x4] sm:$0xf]
        %v549 = vld [vmem:[%s5] sm:$0x1]
        %v551 = vlaneseq
        %v552 = vshrl.u32 %v551, 7
        %v553 = vsub.s32 0, %v552
        %v554 = vrot.slane %v549, %v553
        %v558 = vunpack.c.l.b16 %v547
        %v559 = vunpack.c.l.b16 %v548
        %v560 = vpack.c.b16 %v559, %v558
        %vm562 = vcmask 130048
        %v564 = vsel %vm562, %v407, 0
        %v567 = vsel %vm562, %v408, 0
        %v570 = vsel %vm562, %v409, 0
        %v573 = vsel %vm562, %v410, 0
        %575 = vmatprep.subr.bf16.mxu0 0
        %576 = vmatpush1.bf16.msra.mxu0 0
        %577 = vmatprep.subr.bf16.mxu0 0
        %578 = vmatpush1.bf16.msra.mxu0 0
        %579 = vmatprep.subr.bf16.mxu0 0
        %580 = vmatpush1.bf16.msra.mxu0 0
        %581 = vmatprep.subr.bf16.mxu0 0
        %582 = vmatpush1.bf16.msra.mxu0 0
        %583 = vmatprep.subr.bf16.mxu0 0
        %584 = vmatpush1.bf16.msra.mxu0 0
        %585 = vmatprep.subr.bf16.mxu0 0
        %586 = vmatpush1.bf16.msra.mxu0 0
        %587 = vmatprep.subr.bf16.mxu0 0
        %588 = vmatpush1.bf16.msra.mxu0 0
        %589 = vmatprep.subr.bf16.mxu0 0
        %590 = vmatpush1.bf16.msra.mxu0 %v560
        %591 = vmatprep.subr.bf16.mxu0 0
        %592 = vmatpush2.bf16.msra.mxu0 0
        %593 = vmatprep.subr.bf16.mxu0 0
        %594 = vmatpush2.bf16.msra.mxu0 0
        %595 = vmatprep.subr.bf16.mxu0 0
        %596 = vmatpush2.bf16.msra.mxu0 0
        %597 = vmatprep.subr.bf16.mxu0 0
        %598 = vmatpush2.bf16.msra.mxu0 0
        %599 = vmatprep.subr.bf16.mxu0 0
        %600 = vmatpush2.bf16.msra.mxu0 0
        %601 = vmatprep.subr.bf16.mxu0 0
        %602 = vmatpush2.bf16.msra.mxu0 0
        %603 = vmatprep.subr.bf16.mxu0 0
        %604 = vmatpush2.bf16.msra.mxu0 0
        %605 = vmatprep.subr.bf16.mxu0 0
        %606 = vmatpush2.bf16.msra.mxu0 0
        %607 = vmatprep.mubr.bf16.mxu0 0
        %608 = vmatmul.mubr.bf16.gmra.mxu0 %v564
        %v609 = vpop.f32.mrf.mxu0
        %v610 = vadd.f32 %v554, %v609
        %v611 = vpop.f32.mrf.mxu0
        %v612 = vpop.f32.mrf.mxu0
        %v613 = vadd.f32 %v554, %v612
        %v614 = vpop.f32.mrf.mxu0
        %615 = vmatprep.mubr.bf16.mxu0 0
        %616 = vmatmul.mubr.bf16.gmra.mxu0 %v567
        %v617 = vpop.f32.mrf.mxu0
        %v618 = vadd.f32 %v554, %v617
        %v619 = vpop.f32.mrf.mxu0
        %v620 = vpop.f32.mrf.mxu0
        %v621 = vadd.f32 %v554, %v620
        %v622 = vpop.f32.mrf.mxu0
        %623 = vmatprep.mubr.bf16.mxu0 0
        %624 = vmatmul.mubr.bf16.gmra.mxu0 %v570
        %v625 = vpop.f32.mrf.mxu0
        %v626 = vadd.f32 %v554, %v625
        %v627 = vpop.f32.mrf.mxu0
        %v628 = vpop.f32.mrf.mxu0
        %v629 = vadd.f32 %v554, %v628
        %v630 = vpop.f32.mrf.mxu0
        %631 = vmatprep.mubr.bf16.mxu0 0
        %632 = vmatmul.mubr.bf16.gmra.mxu0 %v573
        %v633 = vpop.f32.mrf.mxu0
        %v634 = vadd.f32 %v554, %v633
        %v635 = vpop.f32.mrf.mxu0
        %v636 = vpop.f32.mrf.mxu0
        %v637 = vadd.f32 %v554, %v636
        %v638 = vpop.f32.mrf.mxu0
        %639 = vdwg.mxu0
        %v640 = vadd.f32 %v517, %v610
        %v641 = vadd.f32 %v520, %v613
        %v642 = vadd.f32 %v525, %v618
        %v643 = vadd.f32 %v528, %v621
        %v644 = vadd.f32 %v533, %v626
        %v645 = vadd.f32 %v536, %v629
        %v646 = vadd.f32 %v541, %v634
        %v647 = vadd.f32 %v544, %v637
        %vm648 = vcmask 64512
        %649 = vst.msk [vmem:[%s367] sm:$0xff] %vm648, %v640
        %650 = vst.msk [vmem:[%s367 + $0x8] sm:$0xff] %vm648, %v641
        %651 = vst.msk [vmem:[%s367 + $0x10] sm:$0xff] %vm648, %v642
        %652 = vst.msk [vmem:[%s367 + $0x18] sm:$0xff] %vm648, %v643
        %653 = vst.msk [vmem:[%s367 + $0x20] sm:$0xff] %vm648, %v644
        %654 = vst.msk [vmem:[%s367 + $0x28] sm:$0xff] %vm648, %v645
        %655 = vst.msk [vmem:[%s367 + $0x30] sm:$0xff] %vm648, %v646
        %656 = vst.msk [vmem:[%s367 + $0x38] sm:$0xff] %vm648, %v647
        %v657 = vmax.f32 %v640, 0.0
        %v658 = vmax.f32 %v641, 0.0
        %v659 = vmax.f32 %v642, 0.0
        %v660 = vmax.f32 %v643, 0.0
        %v661 = vmax.f32 %v644, 0.0
        %v662 = vmax.f32 %v645, 0.0
        %v663 = vmax.f32 %v646, 0.0
        %v664 = vmax.f32 %v647, 0.0
        %v665 = vpack.c.bf16 %v658, %v657
        %v666 = vpack.c.bf16 %v660, %v659
        %v667 = vpack.c.bf16 %v662, %v661
        %v668 = vpack.c.bf16 %v664, %v663
        %677 = vrot.lane.b32.xlu0 %v640, 8
        %v678 = vpop.permute.xlu0 %677
        %679 = vrot.lane.b32.xlu0 %v641, 8
        %v680 = vpop.permute.xlu0 %679
        %681 = vrot.lane.b32.xlu0 %v642, 8
        %v682 = vpop.permute.xlu0 %681
        %683 = vrot.lane.b32.xlu0 %v643, 8
        %v684 = vpop.permute.xlu0 %683
        %685 = vrot.lane.b32.xlu0 %v644, 8
        %v686 = vpop.permute.xlu0 %685
        %687 = vrot.lane.b32.xlu0 %v645, 8
        %v688 = vpop.permute.xlu0 %687
        %689 = vrot.lane.b32.xlu0 %v646, 8
        %v690 = vpop.permute.xlu0 %689
        %691 = vrot.lane.b32.xlu0 %v647, 8
        %v692 = vpop.permute.xlu0 %691
        %vm701 = vcmask 130112
        %702 = vst.msk [vmem:[%s367] sm:$0xff] %vm701, %v678
        %703 = vst.msk [vmem:[%s367 + $0x8] sm:$0xff] %vm701, %v680
        %704 = vst.msk [vmem:[%s367 + $0x10] sm:$0xff] %vm701, %v682
        %705 = vst.msk [vmem:[%s367 + $0x18] sm:$0xff] %vm701, %v684
        %706 = vst.msk [vmem:[%s367 + $0x20] sm:$0xff] %vm701, %v686
        %707 = vst.msk [vmem:[%s367 + $0x28] sm:$0xff] %vm701, %v688
        %708 = vst.msk [vmem:[%s367 + $0x30] sm:$0xff] %vm701, %v690
        %709 = vst.msk [vmem:[%s367 + $0x38] sm:$0xff] %vm701, %v692
        %v710 = vld [vmem:[%s7] sm:$0x1]
        %v711 = vld [vmem:[%s6] sm:$0xf]
        %v713 = vsel %vm648, %v665, 0
        %v716 = vsel %vm648, %v666, 0
        %v719 = vsel %vm648, %v667, 0
        %v722 = vsel %vm648, %v668, 0
        %vm724 = vcmask 1043456
        %v726 = vsel %vm724, %v711, 0
        %728 = vmatprep.subr.bf16.mxu0 0
        %729 = vmatpush1.bf16.msra.mxu0 0
        %730 = vmatprep.subr.bf16.mxu0 0
        %731 = vmatpush1.bf16.msra.mxu0 0
        %732 = vmatprep.subr.bf16.mxu0 0
        %733 = vmatpush1.bf16.msra.mxu0 0
        %734 = vmatprep.subr.bf16.mxu0 0
        %735 = vmatpush1.bf16.msra.mxu0 0
        %736 = vmatprep.subr.bf16.mxu0 0
        %737 = vmatpush1.bf16.msra.mxu0 0
        %738 = vmatprep.subr.bf16.mxu0 0
        %739 = vmatpush1.bf16.msra.mxu0 0
        %740 = vmatprep.subr.bf16.mxu0 0
        %741 = vmatpush1.bf16.msra.mxu0 0
        %742 = vmatprep.subr.bf16.mxu0 0
        %743 = vmatpush1.bf16.msra.mxu0 %v726
        %744 = vmatprep.subr.bf16.mxu0 0
        %745 = vmatpush2.bf16.msra.mxu0 0
        %746 = vmatprep.subr.bf16.mxu0 0
        %747 = vmatpush2.bf16.msra.mxu0 0
        %748 = vmatprep.subr.bf16.mxu0 0
        %749 = vmatpush2.bf16.msra.mxu0 0
        %750 = vmatprep.subr.bf16.mxu0 0
        %751 = vmatpush2.bf16.msra.mxu0 0
        %752 = vmatprep.subr.bf16.mxu0 0
        %753 = vmatpush2.bf16.msra.mxu0 0
        %754 = vmatprep.subr.bf16.mxu0 0
        %755 = vmatpush2.bf16.msra.mxu0 0
        %756 = vmatprep.subr.bf16.mxu0 0
        %757 = vmatpush2.bf16.msra.mxu0 0
        %758 = vmatprep.subr.bf16.mxu0 0
        %759 = vmatpush2.bf16.msra.mxu0 0
        %760 = vmatprep.mubr.bf16.mxu0 0
        %761 = vmatmul.mubr.bf16.gmra.mxu0 %v713
        %v762 = vpop.f32.mrf.mxu0
        %v763 = vadd.f32 0.0, %v762
        %v764 = vpop.f32.mrf.mxu0
        %v765 = vpop.f32.mrf.mxu0
        %v766 = vadd.f32 0.0, %v765
        %v767 = vpop.f32.mrf.mxu0
        %768 = vmatprep.mubr.bf16.mxu0 0
        %769 = vmatmul.mubr.bf16.gmra.mxu0 %v716
        %v770 = vpop.f32.mrf.mxu0
        %v771 = vadd.f32 0.0, %v770
        %v772 = vpop.f32.mrf.mxu0
        %v773 = vpop.f32.mrf.mxu0
        %v774 = vadd.f32 0.0, %v773
        %v775 = vpop.f32.mrf.mxu0
        %776 = vmatprep.mubr.bf16.mxu0 0
        %777 = vmatmul.mubr.bf16.gmra.mxu0 %v719
        %v778 = vpop.f32.mrf.mxu0
        %v779 = vadd.f32 0.0, %v778
        %v780 = vpop.f32.mrf.mxu0
        %v781 = vpop.f32.mrf.mxu0
        %v782 = vadd.f32 0.0, %v781
        %v783 = vpop.f32.mrf.mxu0
        %784 = vmatprep.mubr.bf16.mxu0 0
        %785 = vmatmul.mubr.bf16.gmra.mxu0 %v722
        %v786 = vpop.f32.mrf.mxu0
        %v787 = vadd.f32 0.0, %v786
        %v788 = vpop.f32.mrf.mxu0
        %v789 = vpop.f32.mrf.mxu0
        %v790 = vadd.f32 0.0, %v789
        %v791 = vpop.f32.mrf.mxu0
        %792 = vdwg.mxu0
        %v794 = vlaneseq
        %v795 = vshrl.u32 %v794, 7
        %v796 = vsub.s32 0, %v795
        %v797 = vrot.slane %v710, %v796
        %v799 = vadd.f32 %v797, %v763
        %v800 = vadd.f32 %v797, %v766
        %v801 = vadd.f32 %v797, %v771
        %v802 = vadd.f32 %v797, %v774
        %v803 = vadd.f32 %v797, %v779
        %v804 = vadd.f32 %v797, %v782
        %v805 = vadd.f32 %v797, %v787
        %v806 = vadd.f32 %v797, %v790
        %v807 = vld [vmem:[%s6 + $0x4] sm:$0xf]
        %v809 = vsel %vm724, %v807, 0
        %811 = vmatprep.subr.bf16.mxu0 0
        %812 = vmatpush1.bf16.msra.mxu0 0
        %813 = vmatprep.subr.bf16.mxu0 0
        %814 = vmatpush1.bf16.msra.mxu0 0
        %815 = vmatprep.subr.bf16.mxu0 0
        %816 = vmatpush1.bf16.msra.mxu0 0
        %817 = vmatprep.subr.bf16.mxu0 0
        %818 = vmatpush1.bf16.msra.mxu0 0
        %819 = vmatprep.subr.bf16.mxu0 0
        %820 = vmatpush1.bf16.msra.mxu0 0
        %821 = vmatprep.subr.bf16.mxu0 0
        %822 = vmatpush1.bf16.msra.mxu0 0
        %823 = vmatprep.subr.bf16.mxu0 0
        %824 = vmatpush1.bf16.msra.mxu0 0
        %825 = vmatprep.subr.bf16.mxu0 0
        %826 = vmatpush1.bf16.msra.mxu0 %v809
        %827 = vmatprep.subr.bf16.mxu0 0
        %828 = vmatpush2.bf16.msra.mxu0 0
        %829 = vmatprep.subr.bf16.mxu0 0
        %830 = vmatpush2.bf16.msra.mxu0 0
        %831 = vmatprep.subr.bf16.mxu0 0
        %832 = vmatpush2.bf16.msra.mxu0 0
        %833 = vmatprep.subr.bf16.mxu0 0
        %834 = vmatpush2.bf16.msra.mxu0 0
        %835 = vmatprep.subr.bf16.mxu0 0
        %836 = vmatpush2.bf16.msra.mxu0 0
        %837 = vmatprep.subr.bf16.mxu0 0
        %838 = vmatpush2.bf16.msra.mxu0 0
        %839 = vmatprep.subr.bf16.mxu0 0
        %840 = vmatpush2.bf16.msra.mxu0 0
        %841 = vmatprep.subr.bf16.mxu0 0
        %842 = vmatpush2.bf16.msra.mxu0 0
        %843 = vmatprep.mubr.bf16.mxu0 0
        %844 = vmatmul.mubr.bf16.gmra.mxu0 %v713
        %v845 = vpop.f32.mrf.mxu0
        %v846 = vadd.f32 0.0, %v845
        %v847 = vpop.f32.mrf.mxu0
        %v848 = vpop.f32.mrf.mxu0
        %v849 = vadd.f32 0.0, %v848
        %v850 = vpop.f32.mrf.mxu0
        %851 = vmatprep.mubr.bf16.mxu0 0
        %852 = vmatmul.mubr.bf16.gmra.mxu0 %v716
        %v853 = vpop.f32.mrf.mxu0
        %v854 = vadd.f32 0.0, %v853
        %v855 = vpop.f32.mrf.mxu0
        %v856 = vpop.f32.mrf.mxu0
        %v857 = vadd.f32 0.0, %v856
        %v858 = vpop.f32.mrf.mxu0
        %859 = vmatprep.mubr.bf16.mxu0 0
        %860 = vmatmul.mubr.bf16.gmra.mxu0 %v719
        %v861 = vpop.f32.mrf.mxu0
        %v862 = vadd.f32 0.0, %v861
        %v863 = vpop.f32.mrf.mxu0
        %v864 = vpop.f32.mrf.mxu0
        %v865 = vadd.f32 0.0, %v864
        %v866 = vpop.f32.mrf.mxu0
        %867 = vmatprep.mubr.bf16.mxu0 0
        %868 = vmatmul.mubr.bf16.gmra.mxu0 %v722
        %v869 = vpop.f32.mrf.mxu0
        %v870 = vadd.f32 0.0, %v869
        %v871 = vpop.f32.mrf.mxu0
        %v872 = vpop.f32.mrf.mxu0
        %v873 = vadd.f32 0.0, %v872
        %v874 = vpop.f32.mrf.mxu0
        %875 = vdwg.mxu0
        %v876 = vadd.f32 %v799, %v846
        %v877 = vadd.f32 %v800, %v849
        %v878 = vadd.f32 %v801, %v854
        %v879 = vadd.f32 %v802, %v857
        %v880 = vadd.f32 %v803, %v862
        %v881 = vadd.f32 %v804, %v865
        %v882 = vadd.f32 %v805, %v870
        %v883 = vadd.f32 %v806, %v873
        %884 = vst.msk [vmem:[%s350] sm:$0xff] %vm648, %v876
        %885 = vst.msk [vmem:[%s350 + $0x8] sm:$0xff] %vm648, %v877
        %886 = vst.msk [vmem:[%s350 + $0x10] sm:$0xff] %vm648, %v878
        %887 = vst.msk [vmem:[%s350 + $0x18] sm:$0xff] %vm648, %v879
        %888 = vst.msk [vmem:[%s350 + $0x20] sm:$0xff] %vm648, %v880
        %889 = vst.msk [vmem:[%s350 + $0x28] sm:$0xff] %vm648, %v881
        %890 = vst.msk [vmem:[%s350 + $0x30] sm:$0xff] %vm648, %v882
        %891 = vst.msk [vmem:[%s350 + $0x38] sm:$0xff] %vm648, %v883
        %s892 = smul.u32 8, %s24
        %p893 = scmp.lt.s32.totalorder %s892, 15
        %s894 = scalar_select %p893, %s892, 15
        %s895 = smul.addr %s894, 8
        %s896 = scalar_lea.vmem %s8, %s895
        %s897 = sand.u32 %s236, 1
        %s898 = scalar_lea.sflag [#allocation3], %s897
        %s899 = sand.u32 %s236, 1
        %s900 = smul.addr %s899, 64
        %s901 = scalar_lea.vmem [#allocation2], %s900
        // Predicated region
        $region53: #{_lambda_.10} parent=51 // pred_check
          %p902 = pneg %p220
        $region54: #{_lambda_.10} parent=51 // pred_check_branch
          %904 = sbr.rel (%p902) target = $region56
        $region55: #{_lambda_.10} parent=51 // pred_region
          %s905 = smul.u32 8, %s24
        $region56: #{_lambda_.10} parent=51 // pred_fallthru
          _
        // Predicated region
        $region57: #{_lambda_.10} parent=51 // pred_check
          %p906 = pneg %p246
        $region58: #{_lambda_.10} parent=51 // pred_check_branch
          %908 = sbr.rel (%p906) target = $region60
        $region59: #{_lambda_.10} parent=51 // pred_region
          %s909 = smul.u32 8, %s24
          %s911 = ssub.s32 1024, 1024
          %912 = vsyncadd %s898, %s911
          %s913 = smul.addr %s909, 128
          %s914 = scalar_lea.hbm %s9, %s913
          %s915 = sshll.u32 %s901, 4
          %s916 = int_to_ptr.vmem [resolvable:$true] %s915
          %921 = dma.vmem_to_hbm [thread:$0]  %s916, 1024, %s914, %s898, 128, 128, 8
        $region60: #{_lambda_.10} parent=51 // pred_fallthru
          _
      $region52: #{_lambda_.10} parent=5 // pred_fallthru
        _
      %p922 = scmp.le.s32.totalorder 2, %s19
      // Predicated region
      $region61: #{_lambda_.10} parent=5 // pred_check
        %p923 = pneg %p922
      $region62: #{_lambda_.10} parent=5 // pred_check_branch
        %925 = sbr.rel (%p923) target = $region64
      $region63: #{_lambda_.10} parent=5 // pred_region
        %s926 = ssub.s32 %s19, 2
        // Predicated region
        $region65: #{_lambda_.10} parent=63 // pred_check
          %p927 = pneg %p226
        $region66: #{_lambda_.10} parent=63 // pred_check_branch
          %929 = sbr.rel (%p927) target = $region68
        $region67: #{_lambda_.10} parent=63 // pred_region
          %s930 = smul.u32 8, %s25
          %p931 = scmp.lt.s32.totalorder %s930, 15
          %s932 = scalar_select %p931, %s930, 15
          %s933 = smul.addr %s932, 8
          %s934 = scalar_lea.vmem %s8, %s933
        $region68: #{_lambda_.10} parent=63 // pred_fallthru
          _
        // Predicated region
        $region69: #{_lambda_.10} parent=63 // pred_check
          %p935 = pneg %p252
        $region70: #{_lambda_.10} parent=63 // pred_check_branch
          %937 = sbr.rel (%p935) target = $region72
        $region71: #{_lambda_.10} parent=63 // pred_region
          %s938 = sand.u32 %s237, 1
          %s939 = scalar_lea.sflag [#allocation3], %s938
          %s940 = sand.u32 %s237, 1
          %s941 = smul.addr %s940, 64
          %s942 = scalar_lea.vmem [#allocation2], %s941
          %943 = dma.done %s939, 1024
        $region72: #{_lambda_.10} parent=63 // pred_fallthru
          _
      $region64: #{_lambda_.10} parent=5 // pred_fallthru
        _
    $region6: #{_lambda_.10} parent=1 // loop_footer
      %s23 = sadd.s32 1, %s19
    $region7: #{_lambda_.10} parent=1 // loop_footer_branch
      %18 = sbr.rel target = $region3
    $region8: #{_lambda_.10} parent=1 // loop_exit
      _
    %944 = vsyncpa [#allocation3], 1
    %s945 = scalar_lea.sflag [#allocation3], 1
    %946 = vsyncpa %s945, 1

// kernel: _lambda_.9
$region0: #{_lambda_.9}
  #allocation0 [shape = 'u32[]', space=smem, size = 0x4, offset = 0x4, fixed_abs, tag = 'smem constant byte address 0x4 - core index']
  #allocation1 [shape = 'u32[144,128]{1,0:T(1,128)}', space=vmem, size = 0x12000, scoped, tag = 'internal scratch']
  %s0 = inlined_call_operand.vmem [shape: f32[128,64], index: 0, kind: input, shape index: {}]
  %s1 = inlined_call_operand.vmem [shape: f32[128,128], index: 1, kind: input, shape index: {}]
  %s2 = inlined_call_operand.vmem [shape: bf16[64,8], index: 2, kind: input, shape index: {}]
  %s3 = inlined_call_operand.vmem [shape: f32[1,8], index: 3, kind: input, shape index: {}, may-alias: {3,5,7}]
  %s4 = inlined_call_operand.vmem [shape: bf16[128,8], index: 4, kind: input, shape index: {}]
  %s5 = inlined_call_operand.vmem [shape: f32[1,8], index: 5, kind: input, shape index: {}, may-alias: {3,5,7}]
  %s6 = inlined_call_operand.vmem [shape: bf16[16,8], index: 6, kind: input, shape index: {}]
  %s7 = inlined_call_operand.vmem [shape: f32[1,8], index: 7, kind: input, shape index: {}, may-alias: {3,5,7}]
  %s8 = inlined_call_operand.vmem [shape: bf16[16,48], index: 8, kind: input, shape index: {}]
  %s9 = inlined_call_operand.vmem [shape: f32[1,48], index: 9, kind: input, shape index: {}]
  %s10 = inlined_call_operand.vmem [shape: f32[128,16], index: 10, kind: output, shape index: {0}]
  %s11 = inlined_call_operand.hbm [shape: f32[128,8], index: 11, kind: output, shape index: {1}]
  %s12 = inlined_call_operand.hbm [shape: f32[128,48], index: 12, kind: output, shape index: {2}]
  %13 = xla_tuple %s10, %s11, %s12
  %s14 = sld [smem:[#allocation0]]
  $region89: #{_lambda_.9} parent=0
    _
  %s16 = ssub.s32 1, %s14
  %s17 = scalar_select 0, %s16, %s14
  $region1: #{_lambda_.9} parent=0
    #allocation2 [shape = 'u8[65536]{0}', space=vmem, size = 0x10000, scoped, tag = 'output window, operand 1']
    #allocation3 [shape = 's32[2]{0}', space=sflag, size = 0x8, scoped, tag = 'scoped memory for _lambda_.9']
    #allocation4 [shape = 'u8[65536]{0}', space=vmem, size = 0x10000, scoped, tag = 'output window, operand 2']
    #allocation5 [shape = 's32[2]{0}', space=sflag, size = 0x8, scoped, tag = 'scoped memory for _lambda_.9']
    %18 = vsyncpa [#allocation3], 0
    %s19 = scalar_lea.sflag [#allocation3], 1
    %20 = vsyncpa %s19, 0
    %21 = vsyncpa [#allocation5], 0
    %s22 = scalar_lea.sflag [#allocation5], 1
    %23 = vsyncpa %s22, 0
    loop: start=0, step=1, limit=4
    $region2: #{_lambda_.9} parent=1 // loop_pre_header
      _
    $region3: #{_lambda_.9} parent=1 // loop_header
      %s25 = sphi 0, %s29
      %p26 = scmp.ge.s32.totalorder %s25, 4
      %s35 = sphi 0, %s37
      %s38 = sphi 0, %s35
      %s39 = sphi 0, %s38
      %s55 = sphi 0, %s39
      %s61 = sphi 0, %s63
      %s64 = sphi 0, %s61
      %s65 = sphi 0, %s64
      %s81 = sphi 0, %s65
      %s85 = sphi 0, %s85
      %s87 = sphi 0, %s85
      %s88 = sphi 0, %s87
      %s102 = sphi 0, %s88
      %s106 = sphi 0, %s106
      %s108 = sphi 0, %s106
      %s109 = sphi 0, %s108
      %s123 = sphi 0, %s109
      %s127 = sphi 0, %s127
      %s129 = sphi 0, %s127
      %s130 = sphi 0, %s129
      %s144 = sphi 0, %s130
      %s148 = sphi 0, %s148
      %s150 = sphi 0, %s148
      %s151 = sphi 0, %s150
      %s165 = sphi 0, %s151
      %s169 = sphi 0, %s169
      %s171 = sphi 0, %s169
      %s172 = sphi 0, %s171
      %s186 = sphi 0, %s172
      %s190 = sphi 0, %s190
      %s192 = sphi 0, %s190
      %s193 = sphi 0, %s192
      %s207 = sphi 0, %s193
      %s211 = sphi 0, %s211
      %s213 = sphi 0, %s211
      %s214 = sphi 0, %s213
      %s228 = sphi 0, %s214
      %s232 = sphi 0, %s232
      %s234 = sphi 0, %s232
      %s235 = sphi 0, %s234
      %s249 = sphi 0, %s235
      %s255 = sphi 0, %s257
      %s258 = sphi 0, %s255
      %s259 = sphi 0, %s258
      %s275 = sphi 0, %s259
      %s281 = sphi 0, %s283
      %s284 = sphi 0, %s281
      %s285 = sphi 0, %s284
      %s301 = sphi 0, %s285
      %s307 = sphi 0, %s309
      %s310 = sphi 0, %s307
      %s311 = sphi 0, %s310
      %s327 = sphi 0, %s311
    $region4: #{_lambda_.9} parent=1 // loop_header_branch
      %28 = sbr.rel (%p26) target = $region8
    $region5: #{_lambda_.9} parent=1 // loop_body
      %s30 = ssub.s32 %s25, 1
      %s31 = ssub.s32 %s25, 2
      %s32 = sadd.s32 %s25, 1
      %s33 = ssub.s32 %s25, %s32
      %p34 = scmp.eq.s32.totalorder %s33, 0
      %s36 = sadd.s32 %s35, 1
      %s37 = scalar_select %p34, %s35, %s36
      %p40 = pneg %p34
      %p41 = scmp.eq.s32.totalorder %s25, 1
      %p42 = por %p40, %p41
      %p43 = scmp.ne.s32.totalorder %s35, %s38
      %p44 = scmp.eq.s32.totalorder %s25, 0
      %p45 = por %p43, %p44
      %p46 = scmp.ne.s32.totalorder %s35, %s38
      %p47 = scmp.eq.s32.totalorder %s30, 1
      %p48 = por %p46, %p47
      %p49 = scmp.ne.s32.totalorder %s38, %s39
      %p50 = scmp.eq.s32.totalorder %s30, 0
      %p51 = por %p49, %p50
      %p52 = scmp.ne.s32.totalorder %s38, %s39
      %p53 = scmp.eq.s32.totalorder %s31, 1
      %p54 = por %p52, %p53
      %p56 = scmp.ne.s32.totalorder %s39, %s55
      %p57 = scmp.eq.s32.totalorder %s31, 0
      %p58 = por %p56, %p57
      %s59 = ssub.s32 %s25, %s32
      %p60 = scmp.eq.s32.totalorder %s59, 0
      %s62 = sadd.s32 %s61, 1
      %s63 = scalar_select %p60, %s61, %s62
      %p66 = pneg %p60
      %p67 = scmp.eq.s32.totalorder %s25, 1
      %p68 = por %p66, %p67
      %p69 = scmp.ne.s32.totalorder %s61, %s64
      %p70 = scmp.eq.s32.totalorder %s25, 0
      %p71 = por %p69, %p70
      %p72 = scmp.ne.s32.totalorder %s61, %s64
      %p73 = scmp.eq.s32.totalorder %s30, 1
      %p74 = por %p72, %p73
      %p75 = scmp.ne.s32.totalorder %s64, %s65
      %p76 = scmp.eq.s32.totalorder %s30, 0
      %p77 = por %p75, %p76
      %p78 = scmp.ne.s32.totalorder %s64, %s65
      %p79 = scmp.eq.s32.totalorder %s31, 1
      %p80 = por %p78, %p79
      %p82 = scmp.ne.s32.totalorder %s65, %s81
      %p83 = scmp.eq.s32.totalorder %s31, 0
      %p84 = por %p82, %p83
      %s86 = sadd.s32 %s85, 1
      %p89 = scmp.eq.s32.totalorder %s25, 1
      %p90 = scmp.ne.s32.totalorder %s85, %s87
      %p91 = scmp.eq.s32.totalorder %s25, 0
      %p92 = por %p90, %p91
      %p93 = scmp.ne.s32.totalorder %s85, %s87
      %p94 = scmp.eq.s32.totalorder %s30, 1
      %p95 = por %p93, %p94
      %p96 = scmp.ne.s32.totalorder %s87, %s88
      %p97 = scmp.eq.s32.totalorder %s30, 0
      %p98 = por %p96, %p97
      %p99 = scmp.ne.s32.totalorder %s87, %s88
      %p100 = scmp.eq.s32.totalorder %s31, 1
      %p101 = por %p99, %p100
      %p103 = scmp.ne.s32.totalorder %s88, %s102
      %p104 = scmp.eq.s32.totalorder %s31, 0
      %p105 = por %p103, %p104
      %s107 = sadd.s32 %s106, 1
      %p110 = scmp.eq.s32.totalorder %s25, 1
      %p111 = scmp.ne.s32.totalorder %s106, %s108
      %p112 = scmp.eq.s32.totalorder %s25, 0
      %p113 = por %p111, %p112
      %p114 = scmp.ne.s32.totalorder %s106, %s108
      %p115 = scmp.eq.s32.totalorder %s30, 1
      %p116 = por %p114, %p115
      %p117 = scmp.ne.s32.totalorder %s108, %s109
      %p118 = scmp.eq.s32.totalorder %s30, 0
      %p119 = por %p117, %p118
      %p120 = scmp.ne.s32.totalorder %s108, %s109
      %p121 = scmp.eq.s32.totalorder %s31, 1
      %p122 = por %p120, %p121
      %p124 = scmp.ne.s32.totalorder %s109, %s123
      %p125 = scmp.eq.s32.totalorder %s31, 0
      %p126 = por %p124, %p125
      %s128 = sadd.s32 %s127, 1
      %p131 = scmp.eq.s32.totalorder %s25, 1
      %p132 = scmp.ne.s32.totalorder %s127, %s129
      %p133 = scmp.eq.s32.totalorder %s25, 0
      %p134 = por %p132, %p133
      %p135 = scmp.ne.s32.totalorder %s127, %s129
      %p136 = scmp.eq.s32.totalorder %s30, 1
      %p137 = por %p135, %p136
      %p138 = scmp.ne.s32.totalorder %s129, %s130
      %p139 = scmp.eq.s32.totalorder %s30, 0
      %p140 = por %p138, %p139
      %p141 = scmp.ne.s32.totalorder %s129, %s130
      %p142 = scmp.eq.s32.totalorder %s31, 1
      %p143 = por %p141, %p142
      %p145 = scmp.ne.s32.totalorder %s130, %s144
      %p146 = scmp.eq.s32.totalorder %s31, 0
      %p147 = por %p145, %p146
      %s149 = sadd.s32 %s148, 1
      %p152 = scmp.eq.s32.totalorder %s25, 1
      %p153 = scmp.ne.s32.totalorder %s148, %s150
      %p154 = scmp.eq.s32.totalorder %s25, 0
      %p155 = por %p153, %p154
      %p156 = scmp.ne.s32.totalorder %s148, %s150
      %p157 = scmp.eq.s32.totalorder %s30, 1
      %p158 = por %p156, %p157
      %p159 = scmp.ne.s32.totalorder %s150, %s151
      %p160 = scmp.eq.s32.totalorder %s30, 0
      %p161 = por %p159, %p160
      %p162 = scmp.ne.s32.totalorder %s150, %s151
      %p163 = scmp.eq.s32.totalorder %s31, 1
      %p164 = por %p162, %p163
      %p166 = scmp.ne.s32.totalorder %s151, %s165
      %p167 = scmp.eq.s32.totalorder %s31, 0
      %p168 = por %p166, %p167
      %s170 = sadd.s32 %s169, 1
      %p173 = scmp.eq.s32.totalorder %s25, 1
      %p174 = scmp.ne.s32.totalorder %s169, %s171
      %p175 = scmp.eq.s32.totalorder %s25, 0
      %p176 = por %p174, %p175
      %p177 = scmp.ne.s32.totalorder %s169, %s171
      %p178 = scmp.eq.s32.totalorder %s30, 1
      %p179 = por %p177, %p178
      %p180 = scmp.ne.s32.totalorder %s171, %s172
      %p181 = scmp.eq.s32.totalorder %s30, 0
      %p182 = por %p180, %p181
      %p183 = scmp.ne.s32.totalorder %s171, %s172
      %p184 = scmp.eq.s32.totalorder %s31, 1
      %p185 = por %p183, %p184
      %p187 = scmp.ne.s32.totalorder %s172, %s186
      %p188 = scmp.eq.s32.totalorder %s31, 0
      %p189 = por %p187, %p188
      %s191 = sadd.s32 %s190, 1
      %p194 = scmp.eq.s32.totalorder %s25, 1
      %p195 = scmp.ne.s32.totalorder %s190, %s192
      %p196 = scmp.eq.s32.totalorder %s25, 0
      %p197 = por %p195, %p196
      %p198 = scmp.ne.s32.totalorder %s190, %s192
      %p199 = scmp.eq.s32.totalorder %s30, 1
      %p200 = por %p198, %p199
      %p201 = scmp.ne.s32.totalorder %s192, %s193
      %p202 = scmp.eq.s32.totalorder %s30, 0
      %p203 = por %p201, %p202
      %p204 = scmp.ne.s32.totalorder %s192, %s193
      %p205 = scmp.eq.s32.totalorder %s31, 1
      %p206 = por %p204, %p205
      %p208 = scmp.ne.s32.totalorder %s193, %s207
      %p209 = scmp.eq.s32.totalorder %s31, 0
      %p210 = por %p208, %p209
      %s212 = sadd.s32 %s211, 1
      %p215 = scmp.eq.s32.totalorder %s25, 1
      %p216 = scmp.ne.s32.totalorder %s211, %s213
      %p217 = scmp.eq.s32.totalorder %s25, 0
      %p218 = por %p216, %p217
      %p219 = scmp.ne.s32.totalorder %s211, %s213
      %p220 = scmp.eq.s32.totalorder %s30, 1
      %p221 = por %p219, %p220
      %p222 = scmp.ne.s32.totalorder %s213, %s214
      %p223 = scmp.eq.s32.totalorder %s30, 0
      %p224 = por %p222, %p223
      %p225 = scmp.ne.s32.totalorder %s213, %s214
      %p226 = scmp.eq.s32.totalorder %s31, 1
      %p227 = por %p225, %p226
      %p229 = scmp.ne.s32.totalorder %s214, %s228
      %p230 = scmp.eq.s32.totalorder %s31, 0
      %p231 = por %p229, %p230
      %s233 = sadd.s32 %s232, 1
      %p236 = scmp.eq.s32.totalorder %s25, 1
      %p237 = scmp.ne.s32.totalorder %s232, %s234
      %p238 = scmp.eq.s32.totalorder %s25, 0
      %p239 = por %p237, %p238
      %p240 = scmp.ne.s32.totalorder %s232, %s234
      %p241 = scmp.eq.s32.totalorder %s30, 1
      %p242 = por %p240, %p241
      %p243 = scmp.ne.s32.totalorder %s234, %s235
      %p244 = scmp.eq.s32.totalorder %s30, 0
      %p245 = por %p243, %p244
      %p246 = scmp.ne.s32.totalorder %s234, %s235
      %p247 = scmp.eq.s32.totalorder %s31, 1
      %p248 = por %p246, %p247
      %p250 = scmp.ne.s32.totalorder %s235, %s249
      %p251 = scmp.eq.s32.totalorder %s31, 0
      %p252 = por %p250, %p251
      %s253 = ssub.s32 %s25, %s32
      %p254 = scmp.eq.s32.totalorder %s253, 0
      %s256 = sadd.s32 %s255, 1
      %s257 = scalar_select %p254, %s255, %s256
      %p260 = pneg %p254
      %p261 = scmp.eq.s32.totalorder %s25, 1
      %p262 = por %p260, %p261
      %p263 = scmp.ne.s32.totalorder %s255, %s258
      %p264 = scmp.eq.s32.totalorder %s25, 0
      %p265 = por %p263, %p264
      %p266 = scmp.ne.s32.totalorder %s255, %s258
      %p267 = scmp.eq.s32.totalorder %s30, 1
      %p268 = por %p266, %p267
      %p269 = scmp.ne.s32.totalorder %s258, %s259
      %p270 = scmp.eq.s32.totalorder %s30, 0
      %p271 = por %p269, %p270
      %p272 = scmp.ne.s32.totalorder %s258, %s259
      %p273 = scmp.eq.s32.totalorder %s31, 1
      %p274 = por %p272, %p273
      %p276 = scmp.ne.s32.totalorder %s259, %s275
      %p277 = scmp.eq.s32.totalorder %s31, 0
      %p278 = por %p276, %p277
      %s279 = ssub.s32 %s25, %s32
      %p280 = scmp.eq.s32.totalorder %s279, 0
      %s282 = sadd.s32 %s281, 1
      %s283 = scalar_select %p280, %s281, %s282
      %p286 = pneg %p280
      %p287 = scmp.eq.s32.totalorder %s25, 1
      %p288 = por %p286, %p287
      %p289 = scmp.ne.s32.totalorder %s281, %s284
      %p290 = scmp.eq.s32.totalorder %s25, 0
      %p291 = por %p289, %p290
      %p292 = scmp.ne.s32.totalorder %s281, %s284
      %p293 = scmp.eq.s32.totalorder %s30, 1
      %p294 = por %p292, %p293
      %p295 = scmp.ne.s32.totalorder %s284, %s285
      %p296 = scmp.eq.s32.totalorder %s30, 0
      %p297 = por %p295, %p296
      %p298 = scmp.ne.s32.totalorder %s284, %s285
      %p299 = scmp.eq.s32.totalorder %s31, 1
      %p300 = por %p298, %p299
      %p302 = scmp.ne.s32.totalorder %s285, %s301
      %p303 = scmp.eq.s32.totalorder %s31, 0
      %p304 = por %p302, %p303
      %s305 = ssub.s32 %s25, %s32
      %p306 = scmp.eq.s32.totalorder %s305, 0
      %s308 = sadd.s32 %s307, 1
      %s309 = scalar_select %p306, %s307, %s308
      %p312 = pneg %p306
      %p313 = scmp.eq.s32.totalorder %s25, 1
      %p314 = por %p312, %p313
      %p315 = scmp.ne.s32.totalorder %s307, %s310
      %p316 = scmp.eq.s32.totalorder %s25, 0
      %p317 = por %p315, %p316
      %p318 = scmp.ne.s32.totalorder %s307, %s310
      %p319 = scmp.eq.s32.totalorder %s30, 1
      %p320 = por %p318, %p319
      %p321 = scmp.ne.s32.totalorder %s310, %s311
      %p322 = scmp.eq.s32.totalorder %s30, 0
      %p323 = por %p321, %p322
      %p324 = scmp.ne.s32.totalorder %s310, %s311
      %p325 = scmp.eq.s32.totalorder %s31, 1
      %p326 = por %p324, %p325
      %p328 = scmp.ne.s32.totalorder %s311, %s327
      %p329 = scmp.eq.s32.totalorder %s31, 0
      %p330 = por %p328, %p329
      %p331 = scmp.le.s32.totalorder 1, %s25
      %p332 = scmp.lt.s32.totalorder %s25, 3
      %p333 = pnand %p331, %p332
      %p334 = pneg %p333
      // Predicated region
      $region9: #{_lambda_.9} parent=5 // pred_check
        _
      $region10: #{_lambda_.9} parent=5 // pred_check_branch
        %336 = sbr.rel (%p333) target = $region12
      $region11: #{_lambda_.9} parent=5 // pred_region
        %s337 = ssub.s32 %s25, 1
        // Predicated region
        $region13: #{_lambda_.9} parent=11 // pred_check
          %p338 = pneg %p98
        $region14: #{_lambda_.9} parent=11 // pred_check_branch
          %340 = sbr.rel (%p338) target = $region16
        $region15: #{_lambda_.9} parent=11 // pred_region
          _
        $region16: #{_lambda_.9} parent=11 // pred_fallthru
          _
        // Predicated region
        $region17: #{_lambda_.9} parent=11 // pred_check
          %p341 = pneg %p119
        $region18: #{_lambda_.9} parent=11 // pred_check_branch
          %343 = sbr.rel (%p341) target = $region20
        $region19: #{_lambda_.9} parent=11 // pred_region
          _
        $region20: #{_lambda_.9} parent=11 // pred_fallthru
          _
        // Predicated region
        $region21: #{_lambda_.9} parent=11 // pred_check
          %p344 = pneg %p140
        $region22: #{_lambda_.9} parent=11 // pred_check_branch
          %346 = sbr.rel (%p344) target = $region24
        $region23: #{_lambda_.9} parent=11 // pred_region
          _
        $region24: #{_lambda_.9} parent=11 // pred_fallthru
          _
        // Predicated region
        $region25: #{_lambda_.9} parent=11 // pred_check
          %p347 = pneg %p161
        $region26: #{_lambda_.9} parent=11 // pred_check_branch
          %349 = sbr.rel (%p347) target = $region28
        $region27: #{_lambda_.9} parent=11 // pred_region
          _
        $region28: #{_lambda_.9} parent=11 // pred_fallthru
          _
        // Predicated region
        $region29: #{_lambda_.9} parent=11 // pred_check
          %p350 = pneg %p182
        $region30: #{_lambda_.9} parent=11 // pred_check_branch
          %352 = sbr.rel (%p350) target = $region32
        $region31: #{_lambda_.9} parent=11 // pred_region
          _
        $region32: #{_lambda_.9} parent=11 // pred_fallthru
          _
        // Predicated region
        $region33: #{_lambda_.9} parent=11 // pred_check
          %p353 = pneg %p203
        $region34: #{_lambda_.9} parent=11 // pred_check_branch
          %355 = sbr.rel (%p353) target = $region36
        $region35: #{_lambda_.9} parent=11 // pred_region
          _
        $region36: #{_lambda_.9} parent=11 // pred_fallthru
          _
        // Predicated region
        $region37: #{_lambda_.9} parent=11 // pred_check
          %p356 = pneg %p224
        $region38: #{_lambda_.9} parent=11 // pred_check_branch
          %358 = sbr.rel (%p356) target = $region40
        $region39: #{_lambda_.9} parent=11 // pred_region
          _
        $region40: #{_lambda_.9} parent=11 // pred_fallthru
          _
        // Predicated region
        $region41: #{_lambda_.9} parent=11 // pred_check
          %p359 = pneg %p245
        $region42: #{_lambda_.9} parent=11 // pred_check_branch
          %361 = sbr.rel (%p359) target = $region44
        $region43: #{_lambda_.9} parent=11 // pred_region
          _
        $region44: #{_lambda_.9} parent=11 // pred_fallthru
          _
      $region12: #{_lambda_.9} parent=5 // pred_fallthru
        _
      %p362 = scmp.lt.s32.totalorder %s25, 2
      // Predicated region
      $region45: #{_lambda_.9} parent=5 // pred_check
        %p363 = pneg %p362
      $region46: #{_lambda_.9} parent=5 // pred_check_branch
        %365 = sbr.rel (%p363) target = $region48
      $region47: #{_lambda_.9} parent=5 // pred_region
        // Predicated region
        $region49: #{_lambda_.9} parent=47 // pred_check
          %p366 = pneg %p45
        $region50: #{_lambda_.9} parent=47 // pred_check_branch
          %368 = sbr.rel (%p366) target = $region52
        $region51: #{_lambda_.9} parent=47 // pred_region
          %s369 = smul.u32 8, %s25
          %p370 = scmp.lt.s32.totalorder %s369, 15
          %s371 = scalar_select %p370, %s369, 15
          %s372 = smul.addr %s371, 8
          %s373 = scalar_lea.vmem %s0, %s372
          %s374 = smul.u32 8, %s25
        $region52: #{_lambda_.9} parent=47 // pred_fallthru
          _
        // Predicated region
        $region53: #{_lambda_.9} parent=47 // pred_check
          %p375 = pneg %p71
        $region54: #{_lambda_.9} parent=47 // pred_check_branch
          %377 = sbr.rel (%p375) target = $region56
        $region55: #{_lambda_.9} parent=47 // pred_region
          %s378 = smul.u32 8, %s25
          %p379 = scmp.lt.s32.totalorder %s378, 15
          %s380 = scalar_select %p379, %s378, 15
          %s381 = smul.addr %s380, 8
          %s382 = scalar_lea.vmem %s1, %s381
          %s383 = smul.u32 8, %s25
        $region56: #{_lambda_.9} parent=47 // pred_fallthru
          _
      $region48: #{_lambda_.9} parent=5 // pred_fallthru
        _
      %p384 = scmp.le.s32.totalorder 1, %s25
      %p385 = scmp.lt.s32.totalorder %s25, 3
      %p386 = pnand %p384, %p385
      %p387 = pneg %p386
      // Predicated region
      $region57: #{_lambda_.9} parent=5 // pred_check
        _
      $region58: #{_lambda_.9} parent=5 // pred_check_branch
        %389 = sbr.rel (%p386) target = $region60
      $region59: #{_lambda_.9} parent=5 // pred_region
        %s390 = ssub.s32 %s25, 1
        %s391 = smul.u32 8, %s30
        %p392 = scmp.lt.s32.totalorder %s391, 15
        %s393 = scalar_select %p392, %s391, 15
        %s394 = smul.addr %s393, 8
        %s395 = scalar_lea.vmem %s0, %s394
        %p396 = pneg %p51
        %p397 = pneg %p48
        %s398 = smul.u32 8, %s30
        %p399 = scmp.lt.s32.totalorder %s398, 15
        %s400 = scalar_select %p399, %s398, 15
        %s401 = smul.addr %s400, 8
        %s402 = scalar_lea.vmem %s1, %s401
        %p403 = pneg %p77
        %p404 = pneg %p74
        %p405 = pneg %p98
        %p406 = pneg %p95
        %p407 = pneg %p119
        %p408 = pneg %p116
        %p409 = pneg %p140
        %p410 = pneg %p137
        %p411 = pneg %p161
        %p412 = pneg %p158
        %p413 = pneg %p182
        %p414 = pneg %p179
        %p415 = pneg %p203
        %p416 = pneg %p200
        %p417 = pneg %p224
        %p418 = pneg %p221
        %p419 = pneg %p245
        %p420 = pneg %p242
        %p421 = pneg %p271
        %p422 = pneg %p268
        %s423 = smul.u32 8, %s30
        %p424 = scmp.lt.s32.totalorder %s423, 15
        %s425 = scalar_select %p424, %s423, 15
        %s426 = smul.addr %s425, 8
        %s427 = scalar_lea.vmem %s10, %s426
        %p428 = pneg %p297
        %p429 = pneg %p294
        %s430 = sand.u32 %s284, 1
        %s431 = scalar_lea.sflag [#allocation3], %s430
        %s432 = sand.u32 %s284, 1
        %s433 = smul.addr %s432, 64
        %s434 = scalar_lea.vmem [#allocation2], %s433
        %p435 = pneg %p323
        %p436 = pneg %p320
        %s437 = sand.u32 %s310, 1
        %s438 = scalar_lea.sflag [#allocation5], %s437
        %s439 = sand.u32 %s310, 1
        %s440 = smul.addr %s439, 64
        %s441 = scalar_lea.vmem [#allocation4], %s440
        %s442 = smul.u32 8, %s30
        %p443 = scmp.lt.s32.totalorder %s442, 15
        %s444 = scalar_select %p443, %s442, 15
        %s445 = smul.addr %s444, 8
        %s446 = scalar_lea.vmem %s0, %s445
        %s447 = smul.u32 8, %s30
        %s448 = smul.u32 8, %s30
        %p449 = scmp.lt.s32.totalorder %s448, 15
        %s450 = scalar_select %p449, %s448, 15
        %s451 = smul.addr %s450, 8
        %s452 = scalar_lea.vmem %s1, %s451
        %s453 = smul.u32 8, %s30
        %s454 = smul.u32 8, %s30
        %p455 = scmp.lt.s32.totalorder %s454, 15
        %s456 = scalar_select %p455, %s454, 15
        %s457 = smul.addr %s456, 8
        %s458 = scalar_lea.vmem %s10, %s457
        %s459 = smul.u32 8, %s30
        %s460 = smul.u32 8, %s30
        %s461 = smul.u32 8, %s30
        %v463 = vld [vmem:[%s446] sm:$0xff]
        %v464 = vld [vmem:[%s446 + $0x8] sm:$0xff]
        %v465 = vld [vmem:[%s446 + $0x10] sm:$0xff]
        %v466 = vld [vmem:[%s446 + $0x18] sm:$0xff]
        %v467 = vld [vmem:[%s446 + $0x20] sm:$0xff]
        %v468 = vld [vmem:[%s446 + $0x28] sm:$0xff]
        %v469 = vld [vmem:[%s446 + $0x30] sm:$0xff]
        %v470 = vld [vmem:[%s446 + $0x38] sm:$0xff]
        %v471 = vmax.f32 %v463, 0.0
        %v472 = vmax.f32 %v464, 0.0
        %v473 = vmax.f32 %v465, 0.0
        %v474 = vmax.f32 %v466, 0.0
        %v475 = vmax.f32 %v467, 0.0
        %v476 = vmax.f32 %v468, 0.0
        %v477 = vmax.f32 %v469, 0.0
        %v478 = vmax.f32 %v470, 0.0
        %v479 = vpack.c.bf16 %v472, %v471
        %v480 = vpack.c.bf16 %v474, %v473
        %v481 = vpack.c.bf16 %v476, %v475
        %v482 = vpack.c.bf16 %v478, %v477
        %v483 = vld [vmem:[%s452] sm:$0xff]
        %v484 = vld [vmem:[%s452 + $0x8] sm:$0xff]
        %v485 = vld [vmem:[%s452 + $0x10] sm:$0xff]
        %v486 = vld [vmem:[%s452 + $0x18] sm:$0xff]
        %v487 = vld [vmem:[%s452 + $0x20] sm:$0xff]
        %v488 = vld [vmem:[%s452 + $0x28] sm:$0xff]
        %v489 = vld [vmem:[%s452 + $0x30] sm:$0xff]
        %v490 = vld [vmem:[%s452 + $0x38] sm:$0xff]
        %v491 = vmax.f32 %v483, 0.0
        %v492 = vmax.f32 %v484, 0.0
        %v493 = vmax.f32 %v485, 0.0
        %v494 = vmax.f32 %v486, 0.0
        %v495 = vmax.f32 %v487, 0.0
        %v496 = vmax.f32 %v488, 0.0
        %v497 = vmax.f32 %v489, 0.0
        %v498 = vmax.f32 %v490, 0.0
        %v499 = vpack.c.bf16 %v492, %v491
        %v500 = vpack.c.bf16 %v494, %v493
        %v501 = vpack.c.bf16 %v496, %v495
        %v502 = vpack.c.bf16 %v498, %v497
        %v503 = vld [vmem:[%s2] sm:$0xf]
        %v504 = vld [vmem:[%s2 + $0x4] sm:$0xf]
        %v505 = vld [vmem:[%s2 + $0x8] sm:$0xf]
        %v506 = vld [vmem:[%s2 + $0xc] sm:$0xf]
        %v507 = vld [vmem:[%s2 + $0x10] sm:$0xf]
        %v508 = vld [vmem:[%s2 + $0x14] sm:$0xf]
        %v509 = vld [vmem:[%s2 + $0x18] sm:$0xf]
        %v510 = vld [vmem:[%s2 + $0x1c] sm:$0xf]
        %v511 = vld [vmem:[%s3] sm:$0x1]
        %v513 = vlaneseq
        %v514 = vshrl.u32 %v513, 7
        %v515 = vsub.s32 0, %v514
        %v516 = vrot.slane %v511, %v515
        %v526 = vunpack.c.l.b16 %v503
        %v527 = vunpack.c.l.b16 %v504
        %v528 = vunpack.c.l.b16 %v505
        %v529 = vunpack.c.l.b16 %v506
        %v530 = vunpack.c.l.b16 %v507
        %v531 = vunpack.c.l.b16 %v508
        %v532 = vunpack.c.l.b16 %v509
        %v533 = vunpack.c.l.b16 %v510
        %v534 = vpack.c.b16 %v527, %v526
        %v535 = vpack.c.b16 %v529, %v528
        %v536 = vpack.c.b16 %v531, %v530
        %v537 = vpack.c.b16 %v533, %v532
        %vm542 = vcmask 523264
        %v544 = vsel %vm542, %v479, 0
        %v547 = vsel %vm542, %v480, 0
        %v550 = vsel %vm542, %v481, 0
        %v553 = vsel %vm542, %v482, 0
        %555 = vmatprep.subr.bf16.mxu0 0
        %556 = vmatpush1.bf16.msra.mxu0 0
        %557 = vmatprep.subr.bf16.mxu0 0
        %558 = vmatpush1.bf16.msra.mxu0 0
        %559 = vmatprep.subr.bf16.mxu0 0
        %560 = vmatpush1.bf16.msra.mxu0 0
        %561 = vmatprep.subr.bf16.mxu0 0
        %562 = vmatpush1.bf16.msra.mxu0 0
        %563 = vmatprep.subr.bf16.mxu0 0
        %564 = vmatpush1.bf16.msra.mxu0 %v537
        %565 = vmatprep.subr.bf16.mxu0 0
        %566 = vmatpush1.bf16.msra.mxu0 %v536
        %567 = vmatprep.subr.bf16.mxu0 0
        %568 = vmatpush1.bf16.msra.mxu0 %v535
        %569 = vmatprep.subr.bf16.mxu0 0
        %570 = vmatpush1.bf16.msra.mxu0 %v534
        %571 = vmatprep.subr.bf16.mxu0 0
        %572 = vmatpush2.bf16.msra.mxu0 0
        %573 = vmatprep.subr.bf16.mxu0 0
        %574 = vmatpush2.bf16.msra.mxu0 0
        %575 = vmatprep.subr.bf16.mxu0 0
        %576 = vmatpush2.bf16.msra.mxu0 0
        %577 = vmatprep.subr.bf16.mxu0 0
        %578 = vmatpush2.bf16.msra.mxu0 0
        %579 = vmatprep.subr.bf16.mxu0 0
        %580 = vmatpush2.bf16.msra.mxu0 0
        %581 = vmatprep.subr.bf16.mxu0 0
        %582 = vmatpush2.bf16.msra.mxu0 0
        %583 = vmatprep.subr.bf16.mxu0 0
        %584 = vmatpush2.bf16.msra.mxu0 0
        %585 = vmatprep.subr.bf16.mxu0 0
        %586 = vmatpush2.bf16.msra.mxu0 0
        %587 = vmatprep.mubr.bf16.mxu0 0
        %588 = vmatmul.mubr.bf16.gmra.mxu0 %v544
        %v589 = vpop.f32.mrf.mxu0
        %v590 = vadd.f32 %v516, %v589
        %v591 = vpop.f32.mrf.mxu0
        %v592 = vpop.f32.mrf.mxu0
        %v593 = vadd.f32 %v516, %v592
        %v594 = vpop.f32.mrf.mxu0
        %595 = vmatprep.mubr.bf16.mxu0 0
        %596 = vmatmul.mubr.bf16.gmra.mxu0 %v547
        %v597 = vpop.f32.mrf.mxu0
        %v598 = vadd.f32 %v516, %v597
        %v599 = vpop.f32.mrf.mxu0
        %v600 = vpop.f32.mrf.mxu0
        %v601 = vadd.f32 %v516, %v600
        %v602 = vpop.f32.mrf.mxu0
        %603 = vmatprep.mubr.bf16.mxu0 0
        %604 = vmatmul.mubr.bf16.gmra.mxu0 %v550
        %v605 = vpop.f32.mrf.mxu0
        %v606 = vadd.f32 %v516, %v605
        %v607 = vpop.f32.mrf.mxu0
        %v608 = vpop.f32.mrf.mxu0
        %v609 = vadd.f32 %v516, %v608
        %v610 = vpop.f32.mrf.mxu0
        %611 = vmatprep.mubr.bf16.mxu0 0
        %612 = vmatmul.mubr.bf16.gmra.mxu0 %v553
        %v613 = vpop.f32.mrf.mxu0
        %v614 = vadd.f32 %v516, %v613
        %v615 = vpop.f32.mrf.mxu0
        %v616 = vpop.f32.mrf.mxu0
        %v617 = vadd.f32 %v516, %v616
        %v618 = vpop.f32.mrf.mxu0
        %619 = vdwg.mxu0
        %v620 = vld [vmem:[%s4] sm:$0xf]
        %v621 = vld [vmem:[%s4 + $0x4] sm:$0xf]
        %v622 = vld [vmem:[%s4 + $0x8] sm:$0xf]
        %v623 = vld [vmem:[%s4 + $0xc] sm:$0xf]
        %v624 = vld [vmem:[%s4 + $0x10] sm:$0xf]
        %v625 = vld [vmem:[%s4 + $0x14] sm:$0xf]
        %v626 = vld [vmem:[%s4 + $0x18] sm:$0xf]
        %v627 = vld [vmem:[%s4 + $0x1c] sm:$0xf]
        %v628 = vld [vmem:[%s4 + $0x20] sm:$0xf]
        %v629 = vld [vmem:[%s4 + $0x24] sm:$0xf]
        %v630 = vld [vmem:[%s4 + $0x28] sm:$0xf]
        %v631 = vld [vmem:[%s4 + $0x2c] sm:$0xf]
        %v632 = vld [vmem:[%s4 + $0x30] sm:$0xf]
        %v633 = vld [vmem:[%s4 + $0x34] sm:$0xf]
        %v634 = vld [vmem:[%s4 + $0x38] sm:$0xf]
        %v635 = vld [vmem:[%s4 + $0x3c] sm:$0xf]
        %v636 = vld [vmem:[%s5] sm:$0x1]
        %v638 = vlaneseq
        %v639 = vshrl.u32 %v638, 7
        %v640 = vsub.s32 0, %v639
        %v641 = vrot.slane %v636, %v640
        %v659 = vunpack.c.l.b16 %v620
        %v660 = vunpack.c.l.b16 %v621
        %v661 = vunpack.c.l.b16 %v622
        %v662 = vunpack.c.l.b16 %v623
        %v663 = vunpack.c.l.b16 %v624
        %v664 = vunpack.c.l.b16 %v625
        %v665 = vunpack.c.l.b16 %v626
        %v666 = vunpack.c.l.b16 %v627
        %v667 = vunpack.c.l.b16 %v628
        %v668 = vunpack.c.l.b16 %v629
        %v669 = vunpack.c.l.b16 %v630
        %v670 = vunpack.c.l.b16 %v631
        %v671 = vunpack.c.l.b16 %v632
        %v672 = vunpack.c.l.b16 %v633
        %v673 = vunpack.c.l.b16 %v634
        %v674 = vunpack.c.l.b16 %v635
        %v675 = vpack.c.b16 %v660, %v659
        %v676 = vpack.c.b16 %v662, %v661
        %v677 = vpack.c.b16 %v664, %v663
        %v678 = vpack.c.b16 %v666, %v665
        %v679 = vpack.c.b16 %v668, %v667
        %v680 = vpack.c.b16 %v670, %v669
        %v681 = vpack.c.b16 %v672, %v671
        %v682 = vpack.c.b16 %v674, %v673
        %691 = vmatprep.subr.bf16.mxu0 0
        %692 = vmatpush1.bf16.msra.mxu0 %v682
        %693 = vmatprep.subr.bf16.mxu0 0
        %694 = vmatpush1.bf16.msra.mxu0 %v681
        %695 = vmatprep.subr.bf16.mxu0 0
        %696 = vmatpush1.bf16.msra.mxu0 %v680
        %697 = vmatprep.subr.bf16.mxu0 0
        %698 = vmatpush1.bf16.msra.mxu0 %v679
        %699 = vmatprep.subr.bf16.mxu0 0
        %700 = vmatpush1.bf16.msra.mxu0 %v678
        %701 = vmatprep.subr.bf16.mxu0 0
        %702 = vmatpush1.bf16.msra.mxu0 %v677
        %703 = vmatprep.subr.bf16.mxu0 0
        %704 = vmatpush1.bf16.msra.mxu0 %v676
        %705 = vmatprep.subr.bf16.mxu0 0
        %706 = vmatpush1.bf16.msra.mxu0 %v675
        %707 = vmatprep.subr.bf16.mxu0 0
        %708 = vmatpush2.bf16.msra.mxu0 0
        %709 = vmatprep.subr.bf16.mxu0 0
        %710 = vmatpush2.bf16.msra.mxu0 0
        %711 = vmatprep.subr.bf16.mxu0 0
        %712 = vmatpush2.bf16.msra.mxu0 0
        %713 = vmatprep.subr.bf16.mxu0 0
        %714 = vmatpush2.bf16.msra.mxu0 0
        %715 = vmatprep.subr.bf16.mxu0 0
        %716 = vmatpush2.bf16.msra.mxu0 0
        %717 = vmatprep.subr.bf16.mxu0 0
        %718 = vmatpush2.bf16.msra.mxu0 0
        %719 = vmatprep.subr.bf16.mxu0 0
        %720 = vmatpush2.bf16.msra.mxu0 0
        %721 = vmatprep.subr.bf16.mxu0 0
        %722 = vmatpush2.bf16.msra.mxu0 0
        %723 = vmatprep.mubr.bf16.mxu0 0
        %724 = vmatmul.mubr.bf16.gmra.mxu0 %v499
        %v725 = vpop.f32.mrf.mxu0
        %v726 = vadd.f32 %v641, %v725
        %v727 = vpop.f32.mrf.mxu0
        %v728 = vpop.f32.mrf.mxu0
        %v729 = vadd.f32 %v641, %v728
        %v730 = vpop.f32.mrf.mxu0
        %731 = vmatprep.mubr.bf16.mxu0 0
        %732 = vmatmul.mubr.bf16.gmra.mxu0 %v500
        %v733 = vpop.f32.mrf.mxu0
        %v734 = vadd.f32 %v641, %v733
        %v735 = vpop.f32.mrf.mxu0
        %v736 = vpop.f32.mrf.mxu0
        %v737 = vadd.f32 %v641, %v736
        %v738 = vpop.f32.mrf.mxu0
        %739 = vmatprep.mubr.bf16.mxu0 0
        %740 = vmatmul.mubr.bf16.gmra.mxu0 %v501
        %v741 = vpop.f32.mrf.mxu0
        %v742 = vadd.f32 %v641, %v741
        %v743 = vpop.f32.mrf.mxu0
        %v744 = vpop.f32.mrf.mxu0
        %v745 = vadd.f32 %v641, %v744
        %v746 = vpop.f32.mrf.mxu0
        %747 = vmatprep.mubr.bf16.mxu0 0
        %748 = vmatmul.mubr.bf16.gmra.mxu0 %v502
        %v749 = vpop.f32.mrf.mxu0
        %v750 = vadd.f32 %v641, %v749
        %v751 = vpop.f32.mrf.mxu0
        %v752 = vpop.f32.mrf.mxu0
        %v753 = vadd.f32 %v641, %v752
        %v754 = vpop.f32.mrf.mxu0
        %755 = vdwg.mxu0
        %v756 = vadd.f32 %v590, %v726
        %v757 = vadd.f32 %v593, %v729
        %v758 = vadd.f32 %v598, %v734
        %v759 = vadd.f32 %v601, %v737
        %v760 = vadd.f32 %v606, %v742
        %v761 = vadd.f32 %v609, %v745
        %v762 = vadd.f32 %v614, %v750
        %v763 = vadd.f32 %v617, %v753
        %vm764 = vcmask 64512
        %765 = vst.msk [vmem:[%s458] sm:$0xff] %vm764, %v756
        %766 = vst.msk [vmem:[%s458 + $0x8] sm:$0xff] %vm764, %v757
        %767 = vst.msk [vmem:[%s458 + $0x10] sm:$0xff] %vm764, %v758
        %768 = vst.msk [vmem:[%s458 + $0x18] sm:$0xff] %vm764, %v759
        %769 = vst.msk [vmem:[%s458 + $0x20] sm:$0xff] %vm764, %v760
        %770 = vst.msk [vmem:[%s458 + $0x28] sm:$0xff] %vm764, %v761
        %771 = vst.msk [vmem:[%s458 + $0x30] sm:$0xff] %vm764, %v762
        %772 = vst.msk [vmem:[%s458 + $0x38] sm:$0xff] %vm764, %v763
        %v773 = vmax.f32 %v756, 0.0
        %v774 = vmax.f32 %v757, 0.0
        %v775 = vmax.f32 %v758, 0.0
        %v776 = vmax.f32 %v759, 0.0
        %v777 = vmax.f32 %v760, 0.0
        %v778 = vmax.f32 %v761, 0.0
        %v779 = vmax.f32 %v762, 0.0
        %v780 = vmax.f32 %v763, 0.0
        %v781 = vpack.c.bf16 %v774, %v773
        %v782 = vpack.c.bf16 %v776, %v775
        %v783 = vpack.c.bf16 %v778, %v777
        %v784 = vpack.c.bf16 %v780, %v779
        %793 = vrot.lane.b32.xlu0 %v756, 8
        %v794 = vpop.permute.xlu0 %793
        %795 = vrot.lane.b32.xlu0 %v757, 8
        %v796 = vpop.permute.xlu0 %795
        %797 = vrot.lane.b32.xlu0 %v758, 8
        %v798 = vpop.permute.xlu0 %797
        %799 = vrot.lane.b32.xlu0 %v759, 8
        %v800 = vpop.permute.xlu0 %799
        %801 = vrot.lane.b32.xlu0 %v760, 8
        %v802 = vpop.permute.xlu0 %801
        %803 = vrot.lane.b32.xlu0 %v761, 8
        %v804 = vpop.permute.xlu0 %803
        %805 = vrot.lane.b32.xlu0 %v762, 8
        %v806 = vpop.permute.xlu0 %805
        %807 = vrot.lane.b32.xlu0 %v763, 8
        %v808 = vpop.permute.xlu0 %807
        %vm817 = vcmask 130112
        %818 = vst.msk [vmem:[%s458] sm:$0xff] %vm817, %v794
        %819 = vst.msk [vmem:[%s458 + $0x8] sm:$0xff] %vm817, %v796
        %820 = vst.msk [vmem:[%s458 + $0x10] sm:$0xff] %vm817, %v798
        %821 = vst.msk [vmem:[%s458 + $0x18] sm:$0xff] %vm817, %v800
        %822 = vst.msk [vmem:[%s458 + $0x20] sm:$0xff] %vm817, %v802
        %823 = vst.msk [vmem:[%s458 + $0x28] sm:$0xff] %vm817, %v804
        %824 = vst.msk [vmem:[%s458 + $0x30] sm:$0xff] %vm817, %v806
        %825 = vst.msk [vmem:[%s458 + $0x38] sm:$0xff] %vm817, %v808
        %v826 = vld [vmem:[%s7] sm:$0x1]
        %v827 = vld [vmem:[%s6] sm:$0xf]
        %v829 = vsel %vm764, %v781, 0
        %v832 = vsel %vm764, %v782, 0
        %v835 = vsel %vm764, %v783, 0
        %v838 = vsel %vm764, %v784, 0
        %vm840 = vcmask 1043456
        %v842 = vsel %vm840, %v827, 0
        %844 = vmatprep.subr.bf16.mxu0 0
        %845 = vmatpush1.bf16.msra.mxu0 0
        %846 = vmatprep.subr.bf16.mxu0 0
        %847 = vmatpush1.bf16.msra.mxu0 0
        %848 = vmatprep.subr.bf16.mxu0 0
        %849 = vmatpush1.bf16.msra.mxu0 0
        %850 = vmatprep.subr.bf16.mxu0 0
        %851 = vmatpush1.bf16.msra.mxu0 0
        %852 = vmatprep.subr.bf16.mxu0 0
        %853 = vmatpush1.bf16.msra.mxu0 0
        %854 = vmatprep.subr.bf16.mxu0 0
        %855 = vmatpush1.bf16.msra.mxu0 0
        %856 = vmatprep.subr.bf16.mxu0 0
        %857 = vmatpush1.bf16.msra.mxu0 0
        %858 = vmatprep.subr.bf16.mxu0 0
        %859 = vmatpush1.bf16.msra.mxu0 %v842
        %860 = vmatprep.subr.bf16.mxu0 0
        %861 = vmatpush2.bf16.msra.mxu0 0
        %862 = vmatprep.subr.bf16.mxu0 0
        %863 = vmatpush2.bf16.msra.mxu0 0
        %864 = vmatprep.subr.bf16.mxu0 0
        %865 = vmatpush2.bf16.msra.mxu0 0
        %866 = vmatprep.subr.bf16.mxu0 0
        %867 = vmatpush2.bf16.msra.mxu0 0
        %868 = vmatprep.subr.bf16.mxu0 0
        %869 = vmatpush2.bf16.msra.mxu0 0
        %870 = vmatprep.subr.bf16.mxu0 0
        %871 = vmatpush2.bf16.msra.mxu0 0
        %872 = vmatprep.subr.bf16.mxu0 0
        %873 = vmatpush2.bf16.msra.mxu0 0
        %874 = vmatprep.subr.bf16.mxu0 0
        %875 = vmatpush2.bf16.msra.mxu0 0
        %876 = vmatprep.mubr.bf16.mxu0 0
        %877 = vmatmul.mubr.bf16.gmra.mxu0 %v829
        %v878 = vpop.f32.mrf.mxu0
        %v879 = vadd.f32 0.0, %v878
        %v880 = vpop.f32.mrf.mxu0
        %v881 = vpop.f32.mrf.mxu0
        %v882 = vadd.f32 0.0, %v881
        %v883 = vpop.f32.mrf.mxu0
        %884 = vmatprep.mubr.bf16.mxu0 0
        %885 = vmatmul.mubr.bf16.gmra.mxu0 %v832
        %v886 = vpop.f32.mrf.mxu0
        %v887 = vadd.f32 0.0, %v886
        %v888 = vpop.f32.mrf.mxu0
        %v889 = vpop.f32.mrf.mxu0
        %v890 = vadd.f32 0.0, %v889
        %v891 = vpop.f32.mrf.mxu0
        %892 = vmatprep.mubr.bf16.mxu0 0
        %893 = vmatmul.mubr.bf16.gmra.mxu0 %v835
        %v894 = vpop.f32.mrf.mxu0
        %v895 = vadd.f32 0.0, %v894
        %v896 = vpop.f32.mrf.mxu0
        %v897 = vpop.f32.mrf.mxu0
        %v898 = vadd.f32 0.0, %v897
        %v899 = vpop.f32.mrf.mxu0
        %900 = vmatprep.mubr.bf16.mxu0 0
        %901 = vmatmul.mubr.bf16.gmra.mxu0 %v838
        %v902 = vpop.f32.mrf.mxu0
        %v903 = vadd.f32 0.0, %v902
        %v904 = vpop.f32.mrf.mxu0
        %v905 = vpop.f32.mrf.mxu0
        %v906 = vadd.f32 0.0, %v905
        %v907 = vpop.f32.mrf.mxu0
        %908 = vdwg.mxu0
        %v910 = vlaneseq
        %v911 = vshrl.u32 %v910, 7
        %v912 = vsub.s32 0, %v911
        %v913 = vrot.slane %v826, %v912
        %v915 = vadd.f32 %v913, %v879
        %v916 = vadd.f32 %v913, %v882
        %v917 = vadd.f32 %v913, %v887
        %v918 = vadd.f32 %v913, %v890
        %v919 = vadd.f32 %v913, %v895
        %v920 = vadd.f32 %v913, %v898
        %v921 = vadd.f32 %v913, %v903
        %v922 = vadd.f32 %v913, %v906
        %v923 = vld [vmem:[%s6 + $0x4] sm:$0xf]
        %v925 = vsel %vm840, %v923, 0
        %927 = vmatprep.subr.bf16.mxu0 0
        %928 = vmatpush1.bf16.msra.mxu0 0
        %929 = vmatprep.subr.bf16.mxu0 0
        %930 = vmatpush1.bf16.msra.mxu0 0
        %931 = vmatprep.subr.bf16.mxu0 0
        %932 = vmatpush1.bf16.msra.mxu0 0
        %933 = vmatprep.subr.bf16.mxu0 0
        %934 = vmatpush1.bf16.msra.mxu0 0
        %935 = vmatprep.subr.bf16.mxu0 0
        %936 = vmatpush1.bf16.msra.mxu0 0
        %937 = vmatprep.subr.bf16.mxu0 0
        %938 = vmatpush1.bf16.msra.mxu0 0
        %939 = vmatprep.subr.bf16.mxu0 0
        %940 = vmatpush1.bf16.msra.mxu0 0
        %941 = vmatprep.subr.bf16.mxu0 0
        %942 = vmatpush1.bf16.msra.mxu0 %v925
        %943 = vmatprep.subr.bf16.mxu0 0
        %944 = vmatpush2.bf16.msra.mxu0 0
        %945 = vmatprep.subr.bf16.mxu0 0
        %946 = vmatpush2.bf16.msra.mxu0 0
        %947 = vmatprep.subr.bf16.mxu0 0
        %948 = vmatpush2.bf16.msra.mxu0 0
        %949 = vmatprep.subr.bf16.mxu0 0
        %950 = vmatpush2.bf16.msra.mxu0 0
        %951 = vmatprep.subr.bf16.mxu0 0
        %952 = vmatpush2.bf16.msra.mxu0 0
        %953 = vmatprep.subr.bf16.mxu0 0
        %954 = vmatpush2.bf16.msra.mxu0 0
        %955 = vmatprep.subr.bf16.mxu0 0
        %956 = vmatpush2.bf16.msra.mxu0 0
        %957 = vmatprep.subr.bf16.mxu0 0
        %958 = vmatpush2.bf16.msra.mxu0 0
        %959 = vmatprep.mubr.bf16.mxu0 0
        %960 = vmatmul.mubr.bf16.gmra.mxu0 %v829
        %v961 = vpop.f32.mrf.mxu0
        %v962 = vadd.f32 0.0, %v961
        %v963 = vpop.f32.mrf.mxu0
        %v964 = vpop.f32.mrf.mxu0
        %v965 = vadd.f32 0.0, %v964
        %v966 = vpop.f32.mrf.mxu0
        %967 = vmatprep.mubr.bf16.mxu0 0
        %968 = vmatmul.mubr.bf16.gmra.mxu0 %v832
        %v969 = vpop.f32.mrf.mxu0
        %v970 = vadd.f32 0.0, %v969
        %v971 = vpop.f32.mrf.mxu0
        %v972 = vpop.f32.mrf.mxu0
        %v973 = vadd.f32 0.0, %v972
        %v974 = vpop.f32.mrf.mxu0
        %975 = vmatprep.mubr.bf16.mxu0 0
        %976 = vmatmul.mubr.bf16.gmra.mxu0 %v835
        %v977 = vpop.f32.mrf.mxu0
        %v978 = vadd.f32 0.0, %v977
        %v979 = vpop.f32.mrf.mxu0
        %v980 = vpop.f32.mrf.mxu0
        %v981 = vadd.f32 0.0, %v980
        %v982 = vpop.f32.mrf.mxu0
        %983 = vmatprep.mubr.bf16.mxu0 0
        %984 = vmatmul.mubr.bf16.gmra.mxu0 %v838
        %v985 = vpop.f32.mrf.mxu0
        %v986 = vadd.f32 0.0, %v985
        %v987 = vpop.f32.mrf.mxu0
        %v988 = vpop.f32.mrf.mxu0
        %v989 = vadd.f32 0.0, %v988
        %v990 = vpop.f32.mrf.mxu0
        %991 = vdwg.mxu0
        %v992 = vadd.f32 %v915, %v962
        %v993 = vadd.f32 %v916, %v965
        %v994 = vadd.f32 %v917, %v970
        %v995 = vadd.f32 %v918, %v973
        %v996 = vadd.f32 %v919, %v978
        %v997 = vadd.f32 %v920, %v981
        %v998 = vadd.f32 %v921, %v986
        %v999 = vadd.f32 %v922, %v989
        %1000 = vst.msk [vmem:[%s434] sm:$0xff] %vm764, %v992
        %1001 = vst.msk [vmem:[%s434 + $0x8] sm:$0xff] %vm764, %v993
        %1002 = vst.msk [vmem:[%s434 + $0x10] sm:$0xff] %vm764, %v994
        %1003 = vst.msk [vmem:[%s434 + $0x18] sm:$0xff] %vm764, %v995
        %1004 = vst.msk [vmem:[%s434 + $0x20] sm:$0xff] %vm764, %v996
        %1005 = vst.msk [vmem:[%s434 + $0x28] sm:$0xff] %vm764, %v997
        %1006 = vst.msk [vmem:[%s434 + $0x30] sm:$0xff] %vm764, %v998
        %1007 = vst.msk [vmem:[%s434 + $0x38] sm:$0xff] %vm764, %v999
        %v1008 = vld [vmem:[%s9] sm:$0x1]
        %v1009 = vld [vmem:[%s8] sm:$0xf]
        %v1011 = vsel %vm840, %v1009, 0
        %1013 = vmatprep.subr.bf16.mxu0 0
        %1014 = vmatpush1.bf16.msra.mxu0 0
        %1015 = vmatprep.subr.bf16.mxu0 0
        %1016 = vmatpush1.bf16.msra.mxu0 0
        %1017 = vmatprep.subr.bf16.mxu0 0
        %1018 = vmatpush1.bf16.msra.mxu0 0
        %1019 = vmatprep.subr.bf16.mxu0 0
        %1020 = vmatpush1.bf16.msra.mxu0 0
        %1021 = vmatprep.subr.bf16.mxu0 0
        %1022 = vmatpush1.bf16.msra.mxu0 0
        %1023 = vmatprep.subr.bf16.mxu0 0
        %1024 = vmatpush1.bf16.msra.mxu0 0
        %1025 = vmatprep.subr.bf16.mxu0 0
        %1026 = vmatpush1.bf16.msra.mxu0 0
        %1027 = vmatprep.subr.bf16.mxu0 0
        %1028 = vmatpush1.bf16.msra.mxu0 %v1011
        %1029 = vmatprep.subr.bf16.mxu0 0
        %1030 = vmatpush2.bf16.msra.mxu0 0
        %1031 = vmatprep.subr.bf16.mxu0 0
        %1032 = vmatpush2.bf16.msra.mxu0 0
        %1033 = vmatprep.subr.bf16.mxu0 0
        %1034 = vmatpush2.bf16.msra.mxu0 0
        %1035 = vmatprep.subr.bf16.mxu0 0
        %1036 = vmatpush2.bf16.msra.mxu0 0
        %1037 = vmatprep.subr.bf16.mxu0 0
        %1038 = vmatpush2.bf16.msra.mxu0 0
        %1039 = vmatprep.subr.bf16.mxu0 0
        %1040 = vmatpush2.bf16.msra.mxu0 0
        %1041 = vmatprep.subr.bf16.mxu0 0
        %1042 = vmatpush2.bf16.msra.mxu0 0
        %1043 = vmatprep.subr.bf16.mxu0 0
        %1044 = vmatpush2.bf16.msra.mxu0 0
        %1045 = vmatprep.mubr.bf16.mxu0 0
        %1046 = vmatmul.mubr.bf16.gmra.mxu0 %v829
        %v1047 = vpop.f32.mrf.mxu0
        %v1048 = vadd.f32 0.0, %v1047
        %v1049 = vpop.f32.mrf.mxu0
        %v1050 = vpop.f32.mrf.mxu0
        %v1051 = vadd.f32 0.0, %v1050
        %v1052 = vpop.f32.mrf.mxu0
        %1053 = vmatprep.mubr.bf16.mxu0 0
        %1054 = vmatmul.mubr.bf16.gmra.mxu0 %v832
        %v1055 = vpop.f32.mrf.mxu0
        %v1056 = vadd.f32 0.0, %v1055
        %v1057 = vpop.f32.mrf.mxu0
        %v1058 = vpop.f32.mrf.mxu0
        %v1059 = vadd.f32 0.0, %v1058
        %v1060 = vpop.f32.mrf.mxu0
        %1061 = vmatprep.mubr.bf16.mxu0 0
        %1062 = vmatmul.mubr.bf16.gmra.mxu0 %v835
        %v1063 = vpop.f32.mrf.mxu0
        %v1064 = vadd.f32 0.0, %v1063
        %v1065 = vpop.f32.mrf.mxu0
        %v1066 = vpop.f32.mrf.mxu0
        %v1067 = vadd.f32 0.0, %v1066
        %v1068 = vpop.f32.mrf.mxu0
        %1069 = vmatprep.mubr.bf16.mxu0 0
        %1070 = vmatmul.mubr.bf16.gmra.mxu0 %v838
        %v1071 = vpop.f32.mrf.mxu0
        %v1072 = vadd.f32 0.0, %v1071
        %v1073 = vpop.f32.mrf.mxu0
        %v1074 = vpop.f32.mrf.mxu0
        %v1075 = vadd.f32 0.0, %v1074
        %v1076 = vpop.f32.mrf.mxu0
        %1077 = vdwg.mxu0
        %v1079 = vlaneseq
        %v1080 = vshrl.u32 %v1079, 7
        %v1081 = vsub.s32 0, %v1080
        %v1082 = vrot.slane %v1008, %v1081
        %v1084 = vadd.f32 %v1082, %v1048
        %v1085 = vadd.f32 %v1082, %v1051
        %v1086 = vadd.f32 %v1082, %v1056
        %v1087 = vadd.f32 %v1082, %v1059
        %v1088 = vadd.f32 %v1082, %v1064
        %v1089 = vadd.f32 %v1082, %v1067
        %v1090 = vadd.f32 %v1082, %v1072
        %v1091 = vadd.f32 %v1082, %v1075
        %v1092 = vld [vmem:[%s8 + $0x4] sm:$0xf]
        %v1094 = vsel %vm840, %v1092, 0
        %1096 = vmatprep.subr.bf16.mxu0 0
        %1097 = vmatpush1.bf16.msra.mxu0 0
        %1098 = vmatprep.subr.bf16.mxu0 0
        %1099 = vmatpush1.bf16.msra.mxu0 0
        %1100 = vmatprep.subr.bf16.mxu0 0
        %1101 = vmatpush1.bf16.msra.mxu0 0
        %1102 = vmatprep.subr.bf16.mxu0 0
        %1103 = vmatpush1.bf16.msra.mxu0 0
        %1104 = vmatprep.subr.bf16.mxu0 0
        %1105 = vmatpush1.bf16.msra.mxu0 0
        %1106 = vmatprep.subr.bf16.mxu0 0
        %1107 = vmatpush1.bf16.msra.mxu0 0
        %1108 = vmatprep.subr.bf16.mxu0 0
        %1109 = vmatpush1.bf16.msra.mxu0 0
        %1110 = vmatprep.subr.bf16.mxu0 0
        %1111 = vmatpush1.bf16.msra.mxu0 %v1094
        %1112 = vmatprep.subr.bf16.mxu0 0
        %1113 = vmatpush2.bf16.msra.mxu0 0
        %1114 = vmatprep.subr.bf16.mxu0 0
        %1115 = vmatpush2.bf16.msra.mxu0 0
        %1116 = vmatprep.subr.bf16.mxu0 0
        %1117 = vmatpush2.bf16.msra.mxu0 0
        %1118 = vmatprep.subr.bf16.mxu0 0
        %1119 = vmatpush2.bf16.msra.mxu0 0
        %1120 = vmatprep.subr.bf16.mxu0 0
        %1121 = vmatpush2.bf16.msra.mxu0 0
        %1122 = vmatprep.subr.bf16.mxu0 0
        %1123 = vmatpush2.bf16.msra.mxu0 0
        %1124 = vmatprep.subr.bf16.mxu0 0
        %1125 = vmatpush2.bf16.msra.mxu0 0
        %1126 = vmatprep.subr.bf16.mxu0 0
        %1127 = vmatpush2.bf16.msra.mxu0 0
        %1128 = vmatprep.mubr.bf16.mxu0 0
        %1129 = vmatmul.mubr.bf16.gmra.mxu0 %v829
        %v1130 = vpop.f32.mrf.mxu0
        %v1131 = vadd.f32 0.0, %v1130
        %v1132 = vpop.f32.mrf.mxu0
        %v1133 = vpop.f32.mrf.mxu0
        %v1134 = vadd.f32 0.0, %v1133
        %v1135 = vpop.f32.mrf.mxu0
        %1136 = vmatprep.mubr.bf16.mxu0 0
        %1137 = vmatmul.mubr.bf16.gmra.mxu0 %v832
        %v1138 = vpop.f32.mrf.mxu0
        %v1139 = vadd.f32 0.0, %v1138
        %v1140 = vpop.f32.mrf.mxu0
        %v1141 = vpop.f32.mrf.mxu0
        %v1142 = vadd.f32 0.0, %v1141
        %v1143 = vpop.f32.mrf.mxu0
        %1144 = vmatprep.mubr.bf16.mxu0 0
        %1145 = vmatmul.mubr.bf16.gmra.mxu0 %v835
        %v1146 = vpop.f32.mrf.mxu0
        %v1147 = vadd.f32 0.0, %v1146
        %v1148 = vpop.f32.mrf.mxu0
        %v1149 = vpop.f32.mrf.mxu0
        %v1150 = vadd.f32 0.0, %v1149
        %v1151 = vpop.f32.mrf.mxu0
        %1152 = vmatprep.mubr.bf16.mxu0 0
        %1153 = vmatmul.mubr.bf16.gmra.mxu0 %v838
        %v1154 = vpop.f32.mrf.mxu0
        %v1155 = vadd.f32 0.0, %v1154
        %v1156 = vpop.f32.mrf.mxu0
        %v1157 = vpop.f32.mrf.mxu0
        %v1158 = vadd.f32 0.0, %v1157
        %v1159 = vpop.f32.mrf.mxu0
        %1160 = vdwg.mxu0
        %v1161 = vadd.f32 %v1084, %v1131
        %v1162 = vadd.f32 %v1085, %v1134
        %v1163 = vadd.f32 %v1086, %v1139
        %v1164 = vadd.f32 %v1087, %v1142
        %v1165 = vadd.f32 %v1088, %v1147
        %v1166 = vadd.f32 %v1089, %v1150
        %v1167 = vadd.f32 %v1090, %v1155
        %v1168 = vadd.f32 %v1091, %v1158
        %vm1169 = vcmask 392192
        %1170 = vst.msk [vmem:[%s441] sm:$0xff] %vm1169, %v1161
        %1171 = vst.msk [vmem:[%s441 + $0x8] sm:$0xff] %vm1169, %v1162
        %1172 = vst.msk [vmem:[%s441 + $0x10] sm:$0xff] %vm1169, %v1163
        %1173 = vst.msk [vmem:[%s441 + $0x18] sm:$0xff] %vm1169, %v1164
        %1174 = vst.msk [vmem:[%s441 + $0x20] sm:$0xff] %vm1169, %v1165
        %1175 = vst.msk [vmem:[%s441 + $0x28] sm:$0xff] %vm1169, %v1166
        %1176 = vst.msk [vmem:[%s441 + $0x30] sm:$0xff] %vm1169, %v1167
        %1177 = vst.msk [vmem:[%s441 + $0x38] sm:$0xff] %vm1169, %v1168
        %s1178 = smul.u32 8, %s30
        %p1179 = scmp.lt.s32.totalorder %s1178, 15
        %s1180 = scalar_select %p1179, %s1178, 15
        %s1181 = smul.addr %s1180, 8
        %s1182 = scalar_lea.vmem %s10, %s1181
        %s1183 = sand.u32 %s284, 1
        %s1184 = scalar_lea.sflag [#allocation3], %s1183
        %s1185 = sand.u32 %s284, 1
        %s1186 = smul.addr %s1185, 64
        %s1187 = scalar_lea.vmem [#allocation2], %s1186
        %s1188 = sand.u32 %s310, 1
        %s1189 = scalar_lea.sflag [#allocation5], %s1188
        %s1190 = sand.u32 %s310, 1
        %s1191 = smul.addr %s1190, 64
        %s1192 = scalar_lea.vmem [#allocation4], %s1191
        // Predicated region
        $region61: #{_lambda_.9} parent=59 // pred_check
          %p1193 = pneg %p268
        $region62: #{_lambda_.9} parent=59 // pred_check_branch
          %1195 = sbr.rel (%p1193) target = $region64
        $region63: #{_lambda_.9} parent=59 // pred_region
          %s1196 = smul.u32 8, %s30
        $region64: #{_lambda_.9} parent=59 // pred_fallthru
          _
        // Predicated region
        $region65: #{_lambda_.9} parent=59 // pred_check
          %p1197 = pneg %p294
        $region66: #{_lambda_.9} parent=59 // pred_check_branch
          %1199 = sbr.rel (%p1197) target = $region68
        $region67: #{_lambda_.9} parent=59 // pred_region
          %s1200 = smul.u32 8, %s30
          %s1202 = ssub.s32 1024, 1024
          %1203 = vsyncadd %s1184, %s1202
          %s1204 = smul.addr %s1200, 128
          %s1205 = scalar_lea.hbm %s11, %s1204
          %s1206 = sshll.u32 %s1187, 4
          %s1207 = int_to_ptr.vmem [resolvable:$true] %s1206
          %1212 = dma.vmem_to_hbm [thread:$0]  %s1207, 1024, %s1205, %s1184, 128, 128, 8
        $region68: #{_lambda_.9} parent=59 // pred_fallthru
          _
        // Predicated region
        $region69: #{_lambda_.9} parent=59 // pred_check
          %p1213 = pneg %p320
        $region70: #{_lambda_.9} parent=59 // pred_check_branch
          %1215 = sbr.rel (%p1213) target = $region72
        $region71: #{_lambda_.9} parent=59 // pred_region
          %s1216 = smul.u32 8, %s30
          %s1218 = ssub.s32 1024, 1024
          %1219 = vsyncadd %s1189, %s1218
          %s1220 = smul.addr %s1216, 128
          %s1221 = scalar_lea.hbm %s12, %s1220
          %s1222 = sshll.u32 %s1192, 4
          %s1223 = int_to_ptr.vmem [resolvable:$true] %s1222
          %1228 = dma.vmem_to_hbm [thread:$0]  %s1223, 1024, %s1221, %s1189, 128, 128, 8
        $region72: #{_lambda_.9} parent=59 // pred_fallthru
          _
      $region60: #{_lambda_.9} parent=5 // pred_fallthru
        _
      %p1229 = scmp.le.s32.totalorder 2, %s25
      // Predicated region
      $region73: #{_lambda_.9} parent=5 // pred_check
        %p1230 = pneg %p1229
      $region74: #{_lambda_.9} parent=5 // pred_check_branch
        %1232 = sbr.rel (%p1230) target = $region76
      $region75: #{_lambda_.9} parent=5 // pred_region
        %s1233 = ssub.s32 %s25, 2
        // Predicated region
        $region77: #{_lambda_.9} parent=75 // pred_check
          %p1234 = pneg %p274
        $region78: #{_lambda_.9} parent=75 // pred_check_branch
          %1236 = sbr.rel (%p1234) target = $region80
        $region79: #{_lambda_.9} parent=75 // pred_region
          %s1237 = smul.u32 8, %s31
          %p1238 = scmp.lt.s32.totalorder %s1237, 15
          %s1239 = scalar_select %p1238, %s1237, 15
          %s1240 = smul.addr %s1239, 8
          %s1241 = scalar_lea.vmem %s10, %s1240
        $region80: #{_lambda_.9} parent=75 // pred_fallthru
          _
        // Predicated region
        $region81: #{_lambda_.9} parent=75 // pred_check
          %p1242 = pneg %p300
        $region82: #{_lambda_.9} parent=75 // pred_check_branch
          %1244 = sbr.rel (%p1242) target = $region84
        $region83: #{_lambda_.9} parent=75 // pred_region
          %s1245 = sand.u32 %s285, 1
          %s1246 = scalar_lea.sflag [#allocation3], %s1245
          %s1247 = sand.u32 %s285, 1
          %s1248 = smul.addr %s1247, 64
          %s1249 = scalar_lea.vmem [#allocation2], %s1248
          %1250 = dma.done %s1246, 1024
        $region84: #{_lambda_.9} parent=75 // pred_fallthru
          _
        // Predicated region
        $region85: #{_lambda_.9} parent=75 // pred_check
          %p1251 = pneg %p326
        $region86: #{_lambda_.9} parent=75 // pred_check_branch
          %1253 = sbr.rel (%p1251) target = $region88
        $region87: #{_lambda_.9} parent=75 // pred_region
          %s1254 = sand.u32 %s311, 1
          %s1255 = scalar_lea.sflag [#allocation5], %s1254
          %s1256 = sand.u32 %s311, 1
          %s1257 = smul.addr %s1256, 64
          %s1258 = scalar_lea.vmem [#allocation4], %s1257
          %1259 = dma.done %s1255, 1024
        $region88: #{_lambda_.9} parent=75 // pred_fallthru
          _
      $region76: #{_lambda_.9} parent=5 // pred_fallthru
        _
    $region6: #{_lambda_.9} parent=1 // loop_footer
      %s29 = sadd.s32 1, %s25
    $region7: #{_lambda_.9} parent=1 // loop_footer_branch
      %24 = sbr.rel target = $region3
    $region8: #{_lambda_.9} parent=1 // loop_exit
      _
    %1260 = vsyncpa [#allocation3], 1
    %s1261 = scalar_lea.sflag [#allocation3], 1
    %1262 = vsyncpa %s1261, 1
    %1263 = vsyncpa [#allocation5], 1
    %s1264 = scalar_lea.sflag [#allocation5], 1
    %1265 = vsyncpa %s1264, 1

</llo_original>
